<compile_context>
chip_gen: v6e
topology: v6e:2x2x1
jax: 0.10.0
libtpu: 0.0.40
codegen_flags: <defaults>
</compile_context>

<pallas_src>
import functools
import numpy as np
import jax
import jax.numpy as jnp
from jax.experimental import pallas as pl
from jax.experimental.pallas import tpu as pltpu


def _round_up(x, m):
    return ((x + m - 1) // m) * m


# ---------------------------------------------------------------------------
# Pallas kernels: hoisted input projections (big parallel matmuls)
# ---------------------------------------------------------------------------
def _gi_single_kernel(x_ref, w_ref, b_ref, gif_ref, gib_ref):
    g = (jnp.dot(x_ref[...], w_ref[...], preferred_element_type=jnp.float32)
         + b_ref[...])
    h3 = gif_ref.shape[1]
    gif_ref[...] = g[:, :h3]          # fwd-direction gates (lane-aligned split)
    gib_ref[...] = g[:, h3:]          # bwd-direction gates


def gi_project_single(x, w, b):
    """Layer-0 input projection (embedding Linear folded into W_ih)."""
    rows, din = x.shape
    h6 = w.shape[1]
    h3 = h6 // 2
    # NOTE: single whole-array tile (tiny here); for large T*Bp tile the rows
    # with a "parallel" grid axis to stay well inside v7x's 64 MiB VMEM.
    return pl.pallas_call(
        _gi_single_kernel,
        out_shape=(jax.ShapeDtypeStruct((rows, h3), jnp.float32),
                   jax.ShapeDtypeStruct((rows, h3), jnp.float32)),
        grid=(1,),
        in_specs=[
            pl.BlockSpec((rows, din), lambda i: (0, 0)),
            pl.BlockSpec((din, h6), lambda i: (0, 0)),
            pl.BlockSpec((1, h6), lambda i: (0, 0)),
        ],
        out_specs=[pl.BlockSpec((rows, h3), lambda i: (0, 0)),
                   pl.BlockSpec((rows, h3), lambda i: (0, 0))],
    )(x, w, b)


def _gi_dual_kernel(yf_ref, yb_ref, wf_ref, wb_ref, b_ref, gif_ref, gib_ref):
    g = (jnp.dot(yf_ref[...], wf_ref[...], preferred_element_type=jnp.float32)
         + jnp.dot(yb_ref[...], wb_ref[...], preferred_element_type=jnp.float32)
         + b_ref[...])
    h3 = gif_ref.shape[1]
    gif_ref[...] = g[:, :h3]
    gib_ref[...] = g[:, h3:]


def gi_project_dual(yf, yb, wf, wb, b):
    """Input projection for layers > 0 without materializing concat([yf, yb])."""
    rows, hp = yf.shape
    h6 = wf.shape[1]
    h3 = h6 // 2
    return pl.pallas_call(
        _gi_dual_kernel,
        out_shape=(jax.ShapeDtypeStruct((rows, h3), jnp.float32),
                   jax.ShapeDtypeStruct((rows, h3), jnp.float32)),
        grid=(1,),
        in_specs=[
            pl.BlockSpec((rows, hp), lambda i: (0, 0)),
            pl.BlockSpec((rows, hp), lambda i: (0, 0)),
            pl.BlockSpec((hp, h6), lambda i: (0, 0)),
            pl.BlockSpec((hp, h6), lambda i: (0, 0)),
            pl.BlockSpec((1, h6), lambda i: (0, 0)),
        ],
        out_specs=[pl.BlockSpec((rows, h3), lambda i: (0, 0)),
                   pl.BlockSpec((rows, h3), lambda i: (0, 0))],
    )(yf, yb, wf, wb, b)


# ---------------------------------------------------------------------------
# Pallas kernel: fused bidirectional GRU layer (whole sequence, one call)
# ---------------------------------------------------------------------------
def _bigru_layer_kernel(bs_ref, gif_ref, gib_ref, whh_ref, bhh_ref,
                        yf_ref, yb_ref, h_scr):
    T = gif_ref.shape[0]
    Bp = gif_ref.shape[1]
    Hp = yf_ref.shape[2]

    h_scr[...] = jnp.zeros_like(h_scr)          # h0 = 0 for both directions

    def cell(gi, gh, h_prev):
        # PyTorch GRU gate order r, z, n; gates are Hp(=128*k)-strided so every
        # slice is a whole lane-aligned tile (pure VPU/EUP work, no XLU shifts).
        r = jax.nn.sigmoid(gi[:, 0:Hp] + gh[:, 0:Hp])
        z = jax.nn.sigmoid(gi[:, Hp:2 * Hp] + gh[:, Hp:2 * Hp])
        n = jnp.tanh(gi[:, 2 * Hp:3 * Hp] + r * gh[:, 2 * Hp:3 * Hp])
        return (1.0 - z) * n + z * h_prev

    def step(i, carry):
        tb = T - 1 - i                          # backward direction time index
        h = h_scr[...]                          # (Bp, 2Hp) = [h_fwd | h_bwd]
        # One block-diagonal recurrent matmul covers both directions.
        gh = (jnp.dot(h, whh_ref[...], preferred_element_type=jnp.float32)
              + bhh_ref[...])                   # (Bp, 6Hp)

        h_f_prev = h[:, 0:Hp]
        h_b_prev = h[:, Hp:2 * Hp]
        h_f_new = cell(gif_ref[i], gh[:, 0:3 * Hp], h_f_prev)
        h_b_new = cell(gib_ref[tb], gh[:, 3 * Hp:6 * Hp], h_b_prev)

        # Packed-sequence masking: rows >= batch_sizes[t] hold their state
        # (fwd: finished sequences; bwd: not-yet-started sequences stay at 0).
        row = jax.lax.broadcasted_iota(jnp.int32, (Bp, Hp), 0)
        h_f = jnp.where(row < bs_ref[i], h_f_new, h_f_prev)
        h_b = jnp.where(row < bs_ref[tb], h_b_new, h_b_prev)

        h_scr[:, 0:Hp] = h_f
        h_scr[:, Hp:2 * Hp] = h_b
        yf_ref[i] = h_f
        yb_ref[tb] = h_b
        return carry

    jax.lax.fori_loop(0, T, step, 0)


def bigru_layer(batch_sizes, gi_f, gi_b, whh_blk, bhh):
    T, Bp, h3 = gi_f.shape
    Hp = h3 // 3
    grid_spec = pltpu.PrefetchScalarGridSpec(
        num_scalar_prefetch=1,                  # batch_sizes -> SMEM
        grid=(1,),                              # recurrence handled in-kernel
        in_specs=[
            pl.BlockSpec((T, Bp, 3 * Hp), lambda i, bs: (0, 0, 0)),
            pl.BlockSpec((T, Bp, 3 * Hp), lambda i, bs: (0, 0, 0)),
            pl.BlockSpec((2 * Hp, 6 * Hp), lambda i, bs: (0, 0)),
            pl.BlockSpec((1, 6 * Hp), lambda i, bs: (0, 0)),
        ],
        out_specs=[pl.BlockSpec((T, Bp, Hp), lambda i, bs: (0, 0, 0)),
                   pl.BlockSpec((T, Bp, Hp), lambda i, bs: (0, 0, 0))],
        scratch_shapes=[pltpu.VMEM((Bp, 2 * Hp), jnp.float32)],
    )
    # NOTE(v7x): for very long sequences, chunk T (grid over T-chunks with the
    # hidden state carried in the scratch) so the (T,Bp,3Hp) slabs fit 64 MiB.
    return pl.pallas_call(
        _bigru_layer_kernel,
        out_shape=(jax.ShapeDtypeStruct((T, Bp, Hp), jnp.float32),
                   jax.ShapeDtypeStruct((T, Bp, Hp), jnp.float32)),
        grid_spec=grid_spec,
        compiler_params=pltpu.CompilerParams(dimension_semantics=("arbitrary",)),
    )(batch_sizes, gi_f, gi_b, whh_blk, bhh)


# ---------------------------------------------------------------------------
# Forward pass (glue in plain JAX; batch_sizes are static host values)
# ---------------------------------------------------------------------------
def char_classifier_forward(pp, packed_data, batch_sizes_np):
    bs_np = np.asarray(batch_sizes_np, np.int32)
    T = int(len(bs_np))
    B = int(bs_np[0])
    Bp = _round_up(B, 8)                        # pad batch to 8 sublanes
    N = packed_data.shape[0]
    d_in = packed_data.shape[1]
    Hp = pp["l0_w"].shape[1] // 6               # hidden padded to 128 lanes

    # Static packed <-> padded index maps (narrow tensors only).
    off_np = np.zeros((T,), np.int32)
    off_np[1:] = np.cumsum(bs_np)[:-1]
    src = np.full((T, Bp), N, dtype=np.int32)   # N -> extra zero row
    time_idx, row_idx = [], []
    for t in range(T):
        b = int(bs_np[t])
        src[t, :b] = off_np[t] + np.arange(b, dtype=np.int32)
        time_idx.extend([t] * b)
        row_idx.extend(range(b))
    src = jnp.asarray(src)
    time_idx = jnp.asarray(np.asarray(time_idx, np.int32))
    row_idx = jnp.asarray(np.asarray(row_idx, np.int32))
    bs_dev = jnp.asarray(bs_np)

    # packed -> padded time-major on the narrow d_in input only (row gather).
    x_ext = jnp.concatenate(
        [packed_data.astype(jnp.float32), jnp.zeros((1, d_in), jnp.float32)], 0)
    x_flat = x_ext[src].reshape(T * Bp, d_in)

    # Layer 0: char_embedding Linear + dropout(identity) folded into W_ih.
    # TODO(synk): embedding_dropout / GRU inter-layer dropout are stochastic in
    # train mode; implemented as eval-mode identity.
    gif, gib = gi_project_single(x_flat, pp["l0_w"], pp["l0_b"])
    yf, yb = bigru_layer(bs_dev, gif.reshape(T, Bp, -1), gib.reshape(T, Bp, -1),
                         pp["gru"][0]["whh"], pp["gru"][0]["bhh"])

    for li in range(1, len(pp["gru"])):
        lp = pp["gru"][li]
        gif, gib = gi_project_dual(yf.reshape(T * Bp, -1), yb.reshape(T * Bp, -1),
                                   lp["wf"], lp["wb"], lp["bih"])
        yf, yb = bigru_layer(bs_dev, gif.reshape(T, Bp, -1),
                             gib.reshape(T, Bp, -1), lp["whh"], lp["bhh"])

    # Output Linear: d_out=1 is lane-sparse, so do the matvec in plain XLA
    # (per review), then gather valid rows back to packed order.
    out_pad = (jnp.einsum("tbh,ho->tbo", yf, pp["out_wf"])
               + jnp.einsum("tbh,ho->tbo", yb, pp["out_wb"])
               + pp["out_b"])
    return out_pad[time_idx, row_idx]           # (total_tokens, d_out)


# ---------------------------------------------------------------------------
# Parameters: PyTorch-shaped init + one-time padding/folding for Pallas
# ---------------------------------------------------------------------------
def init_params(key, d_in, d_hidden, d_out, layers, bidirectional=True):
    num_dirs = 1 + int(bidirectional)

    def uni(k, shape, bound):
        return jax.random.uniform(k, shape, jnp.float32, -bound, bound)

    keys = iter(jax.random.split(key, 4 + layers * num_dirs * 4))
    bound_emb = 1.0 / np.sqrt(d_in)
    bound_h = 1.0 / np.sqrt(d_hidden)
    bound_out = 1.0 / np.sqrt(d_hidden * num_dirs)

    params = {
        "emb_w_t": uni(next(keys), (d_in, d_hidden), bound_emb),
        "emb_b": uni(next(keys), (d_hidden,), bound_emb),
        "out_w_t": uni(next(keys), (d_hidden * num_dirs, d_out), bound_out),
        "out_b": uni(next(keys), (d_out,), bound_out),
        "gru": [],
    }
    for layer in range(layers):
        in_size = d_hidden if layer == 0 else d_hidden * num_dirs
        layer_p = {}
        for dname in (["fwd", "bwd"] if bidirectional else ["fwd"]):
            layer_p[dname] = {
                "w_ih_t": uni(next(keys), (in_size, 3 * d_hidden), bound_h),
                "w_hh_t": uni(next(keys), (d_hidden, 3 * d_hidden), bound_h),
                "b_ih": uni(next(keys), (3 * d_hidden,), bound_h),
                "b_hh": uni(next(keys), (3 * d_hidden,), bound_h),
            }
        params["gru"].append(layer_p)
    return params


def prepare_pallas_params(params, d_hidden, d_out):
    """One-time host-side packing: fold emb into layer-0 W_ih, pad H->Hp=128
    lanes with an Hp-strided gate layout, build block-diagonal W_hh."""
    H = d_hidden
    Hp = _round_up(H, 128)
    G3 = 3 * Hp

    def pad_gate_cols(w):                       # (rows, 3H) -> (rows, 3Hp)
        w = np.asarray(w, np.float32)
        out = np.zeros((w.shape[0], G3), np.float32)
        for g in range(3):
            out[:, g * Hp:g * Hp + H] = w[:, g * H:(g + 1) * H]
        return out

    def pad_gate_vec(b):                        # (3H,) -> (3Hp,)
        b = np.asarray(b, np.float32)
        out = np.zeros((G3,), np.float32)
        for g in range(3):
            out[g * Hp:g * Hp + H] = b[g * H:(g + 1) * H]
        return out

    def pad_rows(w, rows_p):
        out = np.zeros((rows_p, w.shape[1]), np.float32)
        out[:w.shape[0]] = w
        return out

    emb_wt = np.asarray(params["emb_w_t"], np.float32)     # (d_in, H)
    emb_b = np.asarray(params["emb_b"], np.float32)        # (H,)

    pp = {"gru": []}

    # Layer 0: fold embedding Linear into the input projection of each direction.
    l0 = params["gru"][0]
    w0_cols, b0_cols = [], []
    for dname in ("fwd", "bwd"):
        wih = np.asarray(l0[dname]["w_ih_t"], np.float32)  # (H, 3H)
        bih = np.asarray(l0[dname]["b_ih"], np.float32)
        w0_cols.append(pad_gate_cols(emb_wt @ wih))        # (d_in, 3Hp)
        b0_cols.append(pad_gate_vec(emb_b @ wih + bih))
    pp["l0_w"] = jnp.asarray(np.concatenate(w0_cols, axis=1))      # (d_in, 6Hp)
    pp["l0_b"] = jnp.asarray(np.concatenate(b0_cols)[None, :])     # (1, 6Hp)

    for li, layer in enumerate(params["gru"]):
        whh_blk = np.zeros((2 * Hp, 6 * Hp), np.float32)
        bhh_parts = []
        for d, dname in enumerate(("fwd", "bwd")):
            whh = pad_gate_cols(layer[dname]["w_hh_t"])            # (H, 3Hp)
            whh_blk[d * Hp:d * Hp + H, d * G3:(d + 1) * G3] = whh
            bhh_parts.append(pad_gate_vec(layer[dname]["b_hh"]))
        entry = {"whh": jnp.asarray(whh_blk),
                 "bhh": jnp.asarray(np.concatenate(bhh_parts)[None, :])}
        if li > 0:
            wf_cols, wb_cols, bih_cols = [], [], []
            for dname in ("fwd", "bwd"):
                wih = np.asarray(layer[dname]["w_ih_t"], np.float32)  # (2H, 3H)
                wf_cols.append(pad_rows(pad_gate_cols(wih[:H]), Hp))
                wb_cols.append(pad_rows(pad_gate_cols(wih[H:]), Hp))
                bih_cols.append(pad_gate_vec(layer[dname]["b_ih"]))
            entry["wf"] = jnp.asarray(np.concatenate(wf_cols, axis=1))  # (Hp,6Hp)
            entry["wb"] = jnp.asarray(np.concatenate(wb_cols, axis=1))
            entry["bih"] = jnp.asarray(np.concatenate(bih_cols)[None, :])
        pp["gru"].append(entry)

    owt = np.asarray(params["out_w_t"], np.float32)        # (2H, d_out)
    pp["out_wf"] = jnp.asarray(pad_rows(owt[:H], Hp))       # (Hp, d_out)
    pp["out_wb"] = jnp.asarray(pad_rows(owt[H:], Hp))
    pp["out_b"] = jnp.asarray(np.asarray(params["out_b"], np.float32))
    return pp


# ---------------------------------------------------------------------------
if __name__ == "__main__":
    # Small shapes consistent with the module (d_in=96, d_hidden=100 scaled down)
    d_in, d_hidden, d_out, layers = 16, 32, 1, 3

    # PackedSequence for 4 sequences of lengths [8, 7, 5, 3]
    lengths = [8, 7, 5, 3]
    T = max(lengths)
    batch_sizes_np = np.array([sum(1 for L in lengths if L > t) for t in range(T)],
                              dtype=np.int32)              # [4,4,4,3,3,2,2,1]
    total_tokens = int(batch_sizes_np.sum())               # 23

    key = jax.random.PRNGKey(0)
    k_data, k_params = jax.random.split(key)
    W_data = jax.random.normal(k_data, (total_tokens, d_in), jnp.float32)

    params = init_params(k_params, d_in, d_hidden, d_out, layers,
                         bidirectional=True)
    pp = prepare_pallas_params(params, d_hidden, d_out)

    fwd = jax.jit(functools.partial(char_classifier_forward,
                                    batch_sizes_np=batch_sizes_np))
    y_data = fwd(pp, W_data)
    jax.block_until_ready(y_data)

    assert y_data.shape == (total_tokens, d_out)
    assert bool(jnp.all(jnp.isfinite(y_data)))
    print("KERNEL_OK")
</pallas_src>

<mosaic_0001>
module attributes {stable_mosaic.version = 11 : i64} {
  func.func @_gi_dual_kernel(%arg0: i32, %arg1: memref<64x128xf32, #tpu.memory_space<vmem>>, %arg2: memref<64x128xf32, #tpu.memory_space<vmem>>, %arg3: memref<128x768xf32, #tpu.memory_space<vmem>>, %arg4: memref<128x768xf32, #tpu.memory_space<vmem>>, %arg5: memref<1x768xf32, #tpu.memory_space<vmem>>, %arg6: memref<64x384xf32, #tpu.memory_space<vmem>>, %arg7: memref<64x384xf32, #tpu.memory_space<vmem>>) attributes {dimension_semantics = [#tpu.dimension_semantics<arbitrary>], iteration_bounds = array<i64: 1>, scalar_prefetch = 0 : i64, scratch_operands = 0 : i64, tpu.core_type = #tpu.core_type<tc>, window_params = [{pipeline_mode = #tpu.pipeline_mode<synchronous>, transform_indices = @transform_0, window_bounds = array<i64: 64, 128>}, {pipeline_mode = #tpu.pipeline_mode<synchronous>, transform_indices = @transform_1, window_bounds = array<i64: 64, 128>}, {pipeline_mode = #tpu.pipeline_mode<synchronous>, transform_indices = @transform_2, window_bounds = array<i64: 128, 768>}, {pipeline_mode = #tpu.pipeline_mode<synchronous>, transform_indices = @transform_3, window_bounds = array<i64: 128, 768>}, {pipeline_mode = #tpu.pipeline_mode<synchronous>, transform_indices = @transform_4, window_bounds = array<i64: 1, 768>}, {pipeline_mode = #tpu.pipeline_mode<synchronous>, transform_indices = @transform_5, window_bounds = array<i64: 64, 384>}, {pipeline_mode = #tpu.pipeline_mode<synchronous>, transform_indices = @transform_6, window_bounds = array<i64: 64, 384>}]} {
    %c0 = arith.constant 0 : index
    %c0_0 = arith.constant 0 : index
    %0 = vector.load %arg1[%c0, %c0_0] : memref<64x128xf32, #tpu.memory_space<vmem>>, vector<64x128xf32>
    %c0_1 = arith.constant 0 : index
    %c0_2 = arith.constant 0 : index
    %1 = vector.load %arg3[%c0_1, %c0_2] : memref<128x768xf32, #tpu.memory_space<vmem>>, vector<128x768xf32>
    %cst = arith.constant dense<0.000000e+00> : vector<64x768xf32>
    %2 = tpu.matmul %0, %1, %cst {dimension_numbers = #tpu.dot_dimension_numbers<[1], [0], [0], [1], [0, 0, 1, 1], [], []>} : vector<64x128xf32>, vector<128x768xf32>, vector<64x768xf32> -> vector<64x768xf32>
    %c0_3 = arith.constant 0 : index
    %c0_4 = arith.constant 0 : index
    %3 = vector.load %arg2[%c0_3, %c0_4] : memref<64x128xf32, #tpu.memory_space<vmem>>, vector<64x128xf32>
    %c0_5 = arith.constant 0 : index
    %c0_6 = arith.constant 0 : index
    %4 = vector.load %arg4[%c0_5, %c0_6] : memref<128x768xf32, #tpu.memory_space<vmem>>, vector<128x768xf32>
    %cst_7 = arith.constant dense<0.000000e+00> : vector<64x768xf32>
    %5 = tpu.matmul %3, %4, %cst_7 {dimension_numbers = #tpu.dot_dimension_numbers<[1], [0], [0], [1], [0, 0, 1, 1], [], []>} : vector<64x128xf32>, vector<128x768xf32>, vector<64x768xf32> -> vector<64x768xf32>
    %6 = arith.addf %2, %5 : vector<64x768xf32>
    %c0_8 = arith.constant 0 : index
    %c0_9 = arith.constant 0 : index
    %7 = vector.load %arg5[%c0_8, %c0_9] : memref<1x768xf32, #tpu.memory_space<vmem>>, vector<1x768xf32>
    %8 = vector.broadcast %7 : vector<1x768xf32> to vector<64x768xf32>
    %9 = arith.addf %6, %8 : vector<64x768xf32>
    %10 = vector.extract_strided_slice %9 {offsets = [0, 0], sizes = [64, 384], strides = [1, 1]} : vector<64x768xf32> to vector<64x384xf32>
    %c0_10 = arith.constant 0 : index
    %c0_11 = arith.constant 0 : index
    %11 = vector.load %arg6[%c0_10, %c0_11] : memref<64x384xf32, #tpu.memory_space<vmem>>, vector<64x384xf32>
    tpu.vector_store %arg6[%c0_10, %c0_11], %10 {strides = array<i32>} : memref<64x384xf32, #tpu.memory_space<vmem>>, vector<64x384xf32>,
    %12 = vector.extract_strided_slice %9 {offsets = [0, 384], sizes = [64, 384], strides = [1, 1]} : vector<64x768xf32> to vector<64x384xf32>
    %c0_12 = arith.constant 0 : index
    %c0_13 = arith.constant 0 : index
    %13 = vector.load %arg7[%c0_12, %c0_13] : memref<64x384xf32, #tpu.memory_space<vmem>>, vector<64x384xf32>
    tpu.vector_store %arg7[%c0_12, %c0_13], %12 {strides = array<i32>} : memref<64x384xf32, #tpu.memory_space<vmem>>, vector<64x384xf32>,
    return
  }
  func.func @transform_0(%arg0: i32) -> (i32, i32) {
    %c0_i32 = arith.constant 0 : i32
    %c0_i32_0 = arith.constant 0 : i32
    %c0_i32_1 = arith.constant 0 : i32
    return %c0_i32, %c0_i32_0 : i32, i32
  }
  func.func @transform_1(%arg0: i32) -> (i32, i32) {
    %c0_i32 = arith.constant 0 : i32
    %c0_i32_0 = arith.constant 0 : i32
    %c0_i32_1 = arith.constant 0 : i32
    return %c0_i32, %c0_i32_0 : i32, i32
  }
  func.func @transform_2(%arg0: i32) -> (i32, i32) {
    %c0_i32 = arith.constant 0 : i32
    %c0_i32_0 = arith.constant 0 : i32
    %c0_i32_1 = arith.constant 0 : i32
    return %c0_i32, %c0_i32_0 : i32, i32
  }
  func.func @transform_3(%arg0: i32) -> (i32, i32) {
    %c0_i32 = arith.constant 0 : i32
    %c0_i32_0 = arith.constant 0 : i32
    %c0_i32_1 = arith.constant 0 : i32
    return %c0_i32, %c0_i32_0 : i32, i32
  }
  func.func @transform_4(%arg0: i32) -> (i32, i32) {
    %c0_i32 = arith.constant 0 : i32
    %c0_i32_0 = arith.constant 0 : i32
    %c0_i32_1 = arith.constant 0 : i32
    return %c0_i32, %c0_i32_0 : i32, i32
  }
  func.func @transform_5(%arg0: i32) -> (i32, i32) {
    %c0_i32 = arith.constant 0 : i32
    %c0_i32_0 = arith.constant 0 : i32
    %c0_i32_1 = arith.constant 0 : i32
    return %c0_i32, %c0_i32_0 : i32, i32
  }
  func.func @transform_6(%arg0: i32) -> (i32, i32) {
    %c0_i32 = arith.constant 0 : i32
    %c0_i32_0 = arith.constant 0 : i32
    %c0_i32_1 = arith.constant 0 : i32
    return %c0_i32, %c0_i32_0 : i32, i32
  }
}

module attributes {stable_mosaic.version = 11 : i64} {
  func.func @_bigru_layer_kernel(%arg0: i32, %arg1: memref<8xi32, #tpu.memory_space<smem>>, %arg2: memref<8x8x384xf32, #tpu.memory_space<vmem>>, %arg3: memref<8x8x384xf32, #tpu.memory_space<vmem>>, %arg4: memref<256x768xf32, #tpu.memory_space<vmem>>, %arg5: memref<1x768xf32, #tpu.memory_space<vmem>>, %arg6: memref<8x8x128xf32, #tpu.memory_space<vmem>>, %arg7: memref<8x8x128xf32, #tpu.memory_space<vmem>>, %arg8: memref<8x256xf32, #tpu.memory_space<vmem>>) attributes {dimension_semantics = [#tpu.dimension_semantics<arbitrary>], iteration_bounds = array<i64: 1>, scalar_prefetch = 1 : i64, scratch_operands = 1 : i64, tpu.core_type = #tpu.core_type<tc>, window_params = [{pipeline_mode = #tpu.pipeline_mode<synchronous>, transform_indices = @transform_0, window_bounds = array<i64: 8, 8, 384>}, {pipeline_mode = #tpu.pipeline_mode<synchronous>, transform_indices = @transform_1, window_bounds = array<i64: 8, 8, 384>}, {pipeline_mode = #tpu.pipeline_mode<synchronous>, transform_indices = @transform_2, window_bounds = array<i64: 256, 768>}, {pipeline_mode = #tpu.pipeline_mode<synchronous>, transform_indices = @transform_3, window_bounds = array<i64: 1, 768>}, {pipeline_mode = #tpu.pipeline_mode<synchronous>, transform_indices = @transform_4, window_bounds = array<i64: 8, 8, 128>}, {pipeline_mode = #tpu.pipeline_mode<synchronous>, transform_indices = @transform_5, window_bounds = array<i64: 8, 8, 128>}]} {
    %cst = arith.constant 0.000000e+00 : f32
    %0 = vector.broadcast %cst : f32 to vector<8x256xf32>
    %c0 = arith.constant 0 : index
    %c0_0 = arith.constant 0 : index
    %1 = vector.load %arg8[%c0, %c0_0] : memref<8x256xf32, #tpu.memory_space<vmem>>, vector<8x256xf32>
    tpu.vector_store %arg8[%c0, %c0_0], %0 {strides = array<i32>} : memref<8x256xf32, #tpu.memory_space<vmem>>, vector<8x256xf32>,
    %c0_i32 = arith.constant 0 : i32
    %c8_i32 = arith.constant 8 : i32
    %2 = arith.addi %c0_i32, %c8_i32 : i32
    %c1_i32 = arith.constant 1 : i32
    scf.for %arg9 = %c0_i32 to %2 step %c1_i32  : i32 {
      %c7_i32 = arith.constant 7 : i32
      %3 = arith.subi %c7_i32, %arg9 : i32
      %c0_2 = arith.constant 0 : index
      %c0_3 = arith.constant 0 : index
      %4 = vector.load %arg8[%c0_2, %c0_3] : memref<8x256xf32, #tpu.memory_space<vmem>>, vector<8x256xf32>
      %c0_4 = arith.constant 0 : index
      %c0_5 = arith.constant 0 : index
      %5 = vector.load %arg4[%c0_4, %c0_5] : memref<256x768xf32, #tpu.memory_space<vmem>>, vector<256x768xf32>
      %cst_6 = arith.constant dense<0.000000e+00> : vector<8x768xf32>
      %6 = tpu.matmul %4, %5, %cst_6 {dimension_numbers = #tpu.dot_dimension_numbers<[1], [0], [0], [1], [0, 0, 1, 1], [], []>} : vector<8x256xf32>, vector<256x768xf32>, vector<8x768xf32> -> vector<8x768xf32>
      %c0_7 = arith.constant 0 : index
      %c0_8 = arith.constant 0 : index
      %7 = vector.load %arg5[%c0_7, %c0_8] : memref<1x768xf32, #tpu.memory_space<vmem>>, vector<1x768xf32>
      %8 = vector.broadcast %7 : vector<1x768xf32> to vector<8x768xf32>
      %9 = arith.addf %6, %8 : vector<8x768xf32>
      %10 = vector.extract_strided_slice %4 {offsets = [0, 0], sizes = [8, 128], strides = [1, 1]} : vector<8x256xf32> to vector<8x128xf32>
      %11 = vector.extract_strided_slice %4 {offsets = [0, 128], sizes = [8, 128], strides = [1, 1]} : vector<8x256xf32> to vector<8x128xf32>
      %12 = arith.index_cast %arg9 : i32 to index
      %c0_9 = arith.constant 0 : index
      %c0_10 = arith.constant 0 : index
      %13 = vector.load %arg2[%12, %c0_9, %c0_10] : memref<8x8x384xf32, #tpu.memory_space<vmem>>, vector<1x8x384xf32>
      %14 = vector.shape_cast %13 : vector<1x8x384xf32> to vector<8x384xf32>
      %15 = vector.extract_strided_slice %9 {offsets = [0, 0], sizes = [8, 384], strides = [1, 1]} : vector<8x768xf32> to vector<8x384xf32>
      %16 = vector.extract_strided_slice %14 {offsets = [0, 0], sizes = [8, 128], strides = [1, 1]} : vector<8x384xf32> to vector<8x128xf32>
      %17 = vector.extract_strided_slice %15 {offsets = [0, 0], sizes = [8, 128], strides = [1, 1]} : vector<8x384xf32> to vector<8x128xf32>
      %18 = arith.addf %16, %17 : vector<8x128xf32>
      %19 = arith.negf %18 : vector<8x128xf32>
      %20 = math.exp %19 : vector<8x128xf32>
      %cst_11 = arith.constant 1.000000e+00 : f32
      %21 = vector.broadcast %cst_11 : f32 to vector<8x128xf32>
      %22 = arith.addf %21, %20 : vector<8x128xf32>
      %23 = arith.divf %21, %22 : vector<8x128xf32>
      %24 = vector.extract_strided_slice %14 {offsets = [0, 128], sizes = [8, 128], strides = [1, 1]} : vector<8x384xf32> to vector<8x128xf32>
      %25 = vector.extract_strided_slice %15 {offsets = [0, 128], sizes = [8, 128], strides = [1, 1]} : vector<8x384xf32> to vector<8x128xf32>
      %26 = arith.addf %24, %25 : vector<8x128xf32>
      %27 = arith.negf %26 : vector<8x128xf32>
      %28 = math.exp %27 : vector<8x128xf32>
      %cst_12 = arith.constant 1.000000e+00 : f32
      %29 = vector.broadcast %cst_12 : f32 to vector<8x128xf32>
      %30 = arith.addf %29, %28 : vector<8x128xf32>
      %31 = arith.divf %29, %30 : vector<8x128xf32>
      %32 = vector.extract_strided_slice %14 {offsets = [0, 256], sizes = [8, 128], strides = [1, 1]} : vector<8x384xf32> to vector<8x128xf32>
      %33 = vector.extract_strided_slice %15 {offsets = [0, 256], sizes = [8, 128], strides = [1, 1]} : vector<8x384xf32> to vector<8x128xf32>
      %34 = arith.mulf %23, %33 : vector<8x128xf32>
      %35 = arith.addf %32, %34 : vector<8x128xf32>
      %36 = math.tanh %35 : vector<8x128xf32>
      %cst_13 = arith.constant 1.000000e+00 : f32
      %37 = vector.broadcast %cst_13 : f32 to vector<8x128xf32>
      %38 = arith.subf %37, %31 : vector<8x128xf32>
      %39 = arith.mulf %38, %36 : vector<8x128xf32>
      %40 = arith.mulf %31, %10 : vector<8x128xf32>
      %41 = arith.addf %39, %40 : vector<8x128xf32>
      %42 = arith.index_cast %3 : i32 to index
      %c0_14 = arith.constant 0 : index
      %c0_15 = arith.constant 0 : index
      %43 = vector.load %arg3[%42, %c0_14, %c0_15] : memref<8x8x384xf32, #tpu.memory_space<vmem>>, vector<1x8x384xf32>
      %44 = vector.shape_cast %43 : vector<1x8x384xf32> to vector<8x384xf32>
      %45 = vector.extract_strided_slice %9 {offsets = [0, 384], sizes = [8, 384], strides = [1, 1]} : vector<8x768xf32> to vector<8x384xf32>
      %46 = vector.extract_strided_slice %44 {offsets = [0, 0], sizes = [8, 128], strides = [1, 1]} : vector<8x384xf32> to vector<8x128xf32>
      %47 = vector.extract_strided_slice %45 {offsets = [0, 0], sizes = [8, 128], strides = [1, 1]} : vector<8x384xf32> to vector<8x128xf32>
      %48 = arith.addf %46, %47 : vector<8x128xf32>
      %49 = arith.negf %48 : vector<8x128xf32>
      %50 = math.exp %49 : vector<8x128xf32>
      %cst_16 = arith.constant 1.000000e+00 : f32
      %51 = vector.broadcast %cst_16 : f32 to vector<8x128xf32>
      %52 = arith.addf %51, %50 : vector<8x128xf32>
      %53 = arith.divf %51, %52 : vector<8x128xf32>
      %54 = vector.extract_strided_slice %44 {offsets = [0, 128], sizes = [8, 128], strides = [1, 1]} : vector<8x384xf32> to vector<8x128xf32>
      %55 = vector.extract_strided_slice %45 {offsets = [0, 128], sizes = [8, 128], strides = [1, 1]} : vector<8x384xf32> to vector<8x128xf32>
      %56 = arith.addf %54, %55 : vector<8x128xf32>
      %57 = arith.negf %56 : vector<8x128xf32>
      %58 = math.exp %57 : vector<8x128xf32>
      %cst_17 = arith.constant 1.000000e+00 : f32
      %59 = vector.broadcast %cst_17 : f32 to vector<8x128xf32>
      %60 = arith.addf %59, %58 : vector<8x128xf32>
      %61 = arith.divf %59, %60 : vector<8x128xf32>
      %62 = vector.extract_strided_slice %44 {offsets = [0, 256], sizes = [8, 128], strides = [1, 1]} : vector<8x384xf32> to vector<8x128xf32>
      %63 = vector.extract_strided_slice %45 {offsets = [0, 256], sizes = [8, 128], strides = [1, 1]} : vector<8x384xf32> to vector<8x128xf32>
      %64 = arith.mulf %53, %63 : vector<8x128xf32>
      %65 = arith.addf %62, %64 : vector<8x128xf32>
      %66 = math.tanh %65 : vector<8x128xf32>
      %cst_18 = arith.constant 1.000000e+00 : f32
      %67 = vector.broadcast %cst_18 : f32 to vector<8x128xf32>
      %68 = arith.subf %67, %61 : vector<8x128xf32>
      %69 = arith.mulf %68, %66 : vector<8x128xf32>
      %70 = arith.mulf %61, %11 : vector<8x128xf32>
      %71 = arith.addf %69, %70 : vector<8x128xf32>
      %72 = tpu.iota {dimensions = array<i32: 0>} : vector<8x128xi32>
      %73 = arith.index_cast %arg9 : i32 to index
      %74 = memref.load %arg1[%73] : memref<8xi32, #tpu.memory_space<smem>>
      %75 = vector.broadcast %74 : i32 to vector<8x128xi32>
      %76 = arith.cmpi slt, %72, %75 : vector<8x128xi32>
      %77 = arith.select %76, %41, %10 : vector<8x128xi1>, vector<8x128xf32>
      %78 = arith.index_cast %3 : i32 to index
      %79 = memref.load %arg1[%78] : memref<8xi32, #tpu.memory_space<smem>>
      %80 = vector.broadcast %79 : i32 to vector<8x128xi32>
      %81 = arith.cmpi slt, %72, %80 : vector<8x128xi32>
      %82 = arith.select %81, %71, %11 : vector<8x128xi1>, vector<8x128xf32>
      %c0_19 = arith.constant 0 : index
      %c0_20 = arith.constant 0 : index
      %83 = vector.load %arg8[%c0_19, %c0_20] : memref<8x256xf32, #tpu.memory_space<vmem>>, vector<8x128xf32>
      tpu.vector_store %arg8[%c0_19, %c0_20], %77 {strides = array<i32>} : memref<8x256xf32, #tpu.memory_space<vmem>>, vector<8x128xf32>,
      %c0_21 = arith.constant 0 : index
      %c128 = arith.constant 128 : index
      %84 = vector.load %arg8[%c0_21, %c128] : memref<8x256xf32, #tpu.memory_space<vmem>>, vector<8x128xf32>
      tpu.vector_store %arg8[%c0_21, %c128], %82 {strides = array<i32>} : memref<8x256xf32, #tpu.memory_space<vmem>>, vector<8x128xf32>,
      %85 = arith.index_cast %arg9 : i32 to index
      %c0_22 = arith.constant 0 : index
      %c0_23 = arith.constant 0 : index
      %86 = vector.load %arg6[%85, %c0_22, %c0_23] : memref<8x8x128xf32, #tpu.memory_space<vmem>>, vector<1x8x128xf32>
      %87 = vector.shape_cast %86 : vector<1x8x128xf32> to vector<8x128xf32>
      %88 = vector.shape_cast %77 : vector<8x128xf32> to vector<1x8x128xf32>
      tpu.vector_store %arg6[%85, %c0_22, %c0_23], %88 {strides = array<i32>} : memref<8x8x128xf32, #tpu.memory_space<vmem>>, vector<1x8x128xf32>,
      %89 = arith.index_cast %3 : i32 to index
      %c0_24 = arith.constant 0 : index
      %c0_25 = arith.constant 0 : index
      %90 = vector.load %arg7[%89, %c0_24, %c0_25] : memref<8x8x128xf32, #tpu.memory_space<vmem>>, vector<1x8x128xf32>
      %91 = vector.shape_cast %90 : vector<1x8x128xf32> to vector<8x128xf32>
      %92 = vector.shape_cast %82 : vector<8x128xf32> to vector<1x8x128xf32>
      tpu.vector_store %arg7[%89, %c0_24, %c0_25], %92 {strides = array<i32>} : memref<8x8x128xf32, #tpu.memory_space<vmem>>, vector<1x8x128xf32>,
    }
    %c8_i32_1 = arith.constant 8 : i32
    return
  }
  func.func @transform_0(%arg0: i32, %arg1: memref<8xi32, #tpu.memory_space<smem>>) -> (i32, i32, i32) {
    %c0_i32 = arith.constant 0 : i32
    %c0_i32_0 = arith.constant 0 : i32
    %c0_i32_1 = arith.constant 0 : i32
    %c0_i32_2 = arith.constant 0 : i32
    return %c0_i32, %c0_i32_0, %c0_i32_1 : i32, i32, i32
  }
  func.func @transform_1(%arg0: i32, %arg1: memref<8xi32, #tpu.memory_space<smem>>) -> (i32, i32, i32) {
    %c0_i32 = arith.constant 0 : i32
    %c0_i32_0 = arith.constant 0 : i32
    %c0_i32_1 = arith.constant 0 : i32
    %c0_i32_2 = arith.constant 0 : i32
    return %c0_i32, %c0_i32_0, %c0_i32_1 : i32, i32, i32
  }
  func.func @transform_2(%arg0: i32, %arg1: memref<8xi32, #tpu.memory_space<smem>>) -> (i32, i32) {
    %c0_i32 = arith.constant 0 : i32
    %c0_i32_0 = arith.constant 0 : i32
    %c0_i32_1 = arith.constant 0 : i32
    return %c0_i32, %c0_i32_0 : i32, i32
  }
  func.func @transform_3(%arg0: i32, %arg1: memref<8xi32, #tpu.memory_space<smem>>) -> (i32, i32) {
    %c0_i32 = arith.constant 0 : i32
    %c0_i32_0 = arith.constant 0 : i32
    %c0_i32_1 = arith.constant 0 : i32
    return %c0_i32, %c0_i32_0 : i32, i32
  }
  func.func @transform_4(%arg0: i32, %arg1: memref<8xi32, #tpu.memory_space<smem>>) -> (i32, i32, i32) {
    %c0_i32 = arith.constant 0 : i32
    %c0_i32_0 = arith.constant 0 : i32
    %c0_i32_1 = arith.constant 0 : i32
    %c0_i32_2 = arith.constant 0 : i32
    return %c0_i32, %c0_i32_0, %c0_i32_1 : i32, i32, i32
  }
  func.func @transform_5(%arg0: i32, %arg1: memref<8xi32, #tpu.memory_space<smem>>) -> (i32, i32, i32) {
    %c0_i32 = arith.constant 0 : i32
    %c0_i32_0 = arith.constant 0 : i32
    %c0_i32_1 = arith.constant 0 : i32
    %c0_i32_2 = arith.constant 0 : i32
    return %c0_i32, %c0_i32_0, %c0_i32_1 : i32, i32, i32
  }
}

module attributes {stable_mosaic.version = 11 : i64} {
  func.func @_gi_single_kernel(%arg0: i32, %arg1: memref<64x16xf32, #tpu.memory_space<vmem>>, %arg2: memref<16x768xf32, #tpu.memory_space<vmem>>, %arg3: memref<1x768xf32, #tpu.memory_space<vmem>>, %arg4: memref<64x384xf32, #tpu.memory_space<vmem>>, %arg5: memref<64x384xf32, #tpu.memory_space<vmem>>) attributes {dimension_semantics = [#tpu.dimension_semantics<arbitrary>], iteration_bounds = array<i64: 1>, scalar_prefetch = 0 : i64, scratch_operands = 0 : i64, tpu.core_type = #tpu.core_type<tc>, window_params = [{pipeline_mode = #tpu.pipeline_mode<synchronous>, transform_indices = @transform_0, window_bounds = array<i64: 64, 16>}, {pipeline_mode = #tpu.pipeline_mode<synchronous>, transform_indices = @transform_1, window_bounds = array<i64: 16, 768>}, {pipeline_mode = #tpu.pipeline_mode<synchronous>, transform_indices = @transform_2, window_bounds = array<i64: 1, 768>}, {pipeline_mode = #tpu.pipeline_mode<synchronous>, transform_indices = @transform_3, window_bounds = array<i64: 64, 384>}, {pipeline_mode = #tpu.pipeline_mode<synchronous>, transform_indices = @transform_4, window_bounds = array<i64: 64, 384>}]} {
    %c0 = arith.constant 0 : index
    %c0_0 = arith.constant 0 : index
    %0 = vector.load %arg1[%c0, %c0_0] : memref<64x16xf32, #tpu.memory_space<vmem>>, vector<64x16xf32>
    %c0_1 = arith.constant 0 : index
    %c0_2 = arith.constant 0 : index
    %1 = vector.load %arg2[%c0_1, %c0_2] : memref<16x768xf32, #tpu.memory_space<vmem>>, vector<16x768xf32>
    %cst = arith.constant dense<0.000000e+00> : vector<64x768xf32>
    %2 = tpu.matmul %0, %1, %cst {dimension_numbers = #tpu.dot_dimension_numbers<[1], [0], [0], [1], [0, 0, 1, 1], [], []>} : vector<64x16xf32>, vector<16x768xf32>, vector<64x768xf32> -> vector<64x768xf32>
    %c0_3 = arith.constant 0 : index
    %c0_4 = arith.constant 0 : index
    %3 = vector.load %arg3[%c0_3, %c0_4] : memref<1x768xf32, #tpu.memory_space<vmem>>, vector<1x768xf32>
    %4 = vector.broadcast %3 : vector<1x768xf32> to vector<64x768xf32>
    %5 = arith.addf %2, %4 : vector<64x768xf32>
    %6 = vector.extract_strided_slice %5 {offsets = [0, 0], sizes = [64, 384], strides = [1, 1]} : vector<64x768xf32> to vector<64x384xf32>
    %c0_5 = arith.constant 0 : index
    %c0_6 = arith.constant 0 : index
    %7 = vector.load %arg4[%c0_5, %c0_6] : memref<64x384xf32, #tpu.memory_space<vmem>>, vector<64x384xf32>
    tpu.vector_store %arg4[%c0_5, %c0_6], %6 {strides = array<i32>} : memref<64x384xf32, #tpu.memory_space<vmem>>, vector<64x384xf32>,
    %8 = vector.extract_strided_slice %5 {offsets = [0, 384], sizes = [64, 384], strides = [1, 1]} : vector<64x768xf32> to vector<64x384xf32>
    %c0_7 = arith.constant 0 : index
    %c0_8 = arith.constant 0 : index
    %9 = vector.load %arg5[%c0_7, %c0_8] : memref<64x384xf32, #tpu.memory_space<vmem>>, vector<64x384xf32>
    tpu.vector_store %arg5[%c0_7, %c0_8], %8 {strides = array<i32>} : memref<64x384xf32, #tpu.memory_space<vmem>>, vector<64x384xf32>,
    return
  }
  func.func @transform_0(%arg0: i32) -> (i32, i32) {
    %c0_i32 = arith.constant 0 : i32
    %c0_i32_0 = arith.constant 0 : i32
    %c0_i32_1 = arith.constant 0 : i32
    return %c0_i32, %c0_i32_0 : i32, i32
  }
  func.func @transform_1(%arg0: i32) -> (i32, i32) {
    %c0_i32 = arith.constant 0 : i32
    %c0_i32_0 = arith.constant 0 : i32
    %c0_i32_1 = arith.constant 0 : i32
    return %c0_i32, %c0_i32_0 : i32, i32
  }
  func.func @transform_2(%arg0: i32) -> (i32, i32) {
    %c0_i32 = arith.constant 0 : i32
    %c0_i32_0 = arith.constant 0 : i32
    %c0_i32_1 = arith.constant 0 : i32
    return %c0_i32, %c0_i32_0 : i32, i32
  }
  func.func @transform_3(%arg0: i32) -> (i32, i32) {
    %c0_i32 = arith.constant 0 : i32
    %c0_i32_0 = arith.constant 0 : i32
    %c0_i32_1 = arith.constant 0 : i32
    return %c0_i32, %c0_i32_0 : i32, i32
  }
  func.func @transform_4(%arg0: i32) -> (i32, i32) {
    %c0_i32 = arith.constant 0 : i32
    %c0_i32_0 = arith.constant 0 : i32
    %c0_i32_1 = arith.constant 0 : i32
    return %c0_i32, %c0_i32_0 : i32, i32
  }
}

module attributes {stable_mosaic.version = 11 : i64} {
  func.func @_bigru_layer_kernel(%arg0: i32, %arg1: memref<8xi32, #tpu.memory_space<smem>>, %arg2: memref<8x8x384xf32, #tpu.memory_space<vmem>>, %arg3: memref<8x8x384xf32, #tpu.memory_space<vmem>>, %arg4: memref<256x768xf32, #tpu.memory_space<vmem>>, %arg5: memref<1x768xf32, #tpu.memory_space<vmem>>, %arg6: memref<8x8x128xf32, #tpu.memory_space<vmem>>, %arg7: memref<8x8x128xf32, #tpu.memory_space<vmem>>, %arg8: memref<8x256xf32, #tpu.memory_space<vmem>>) attributes {dimension_semantics = [#tpu.dimension_semantics<arbitrary>], iteration_bounds = array<i64: 1>, scalar_prefetch = 1 : i64, scratch_operands = 1 : i64, tpu.core_type = #tpu.core_type<tc>, window_params = [{pipeline_mode = #tpu.pipeline_mode<synchronous>, transform_indices = @transform_0, window_bounds = array<i64: 8, 8, 384>}, {pipeline_mode = #tpu.pipeline_mode<synchronous>, transform_indices = @transform_1, window_bounds = array<i64: 8, 8, 384>}, {pipeline_mode = #tpu.pipeline_mode<synchronous>, transform_indices = @transform_2, window_bounds = array<i64: 256, 768>}, {pipeline_mode = #tpu.pipeline_mode<synchronous>, transform_indices = @transform_3, window_bounds = array<i64: 1, 768>}, {pipeline_mode = #tpu.pipeline_mode<synchronous>, transform_indices = @transform_4, window_bounds = array<i64: 8, 8, 128>}, {pipeline_mode = #tpu.pipeline_mode<synchronous>, transform_indices = @transform_5, window_bounds = array<i64: 8, 8, 128>}]} {
    %cst = arith.constant 0.000000e+00 : f32
    %0 = vector.broadcast %cst : f32 to vector<8x256xf32>
    %c0 = arith.constant 0 : index
    %c0_0 = arith.constant 0 : index
    %1 = vector.load %arg8[%c0, %c0_0] : memref<8x256xf32, #tpu.memory_space<vmem>>, vector<8x256xf32>
    tpu.vector_store %arg8[%c0, %c0_0], %0 {strides = array<i32>} : memref<8x256xf32, #tpu.memory_space<vmem>>, vector<8x256xf32>,
    %c0_i32 = arith.constant 0 : i32
    %c8_i32 = arith.constant 8 : i32
    %2 = arith.addi %c0_i32, %c8_i32 : i32
    %c1_i32 = arith.constant 1 : i32
    scf.for %arg9 = %c0_i32 to %2 step %c1_i32  : i32 {
      %c7_i32 = arith.constant 7 : i32
      %3 = arith.subi %c7_i32, %arg9 : i32
      %c0_2 = arith.constant 0 : index
      %c0_3 = arith.constant 0 : index
      %4 = vector.load %arg8[%c0_2, %c0_3] : memref<8x256xf32, #tpu.memory_space<vmem>>, vector<8x256xf32>
      %c0_4 = arith.constant 0 : index
      %c0_5 = arith.constant 0 : index
      %5 = vector.load %arg4[%c0_4, %c0_5] : memref<256x768xf32, #tpu.memory_space<vmem>>, vector<256x768xf32>
      %cst_6 = arith.constant dense<0.000000e+00> : vector<8x768xf32>
      %6 = tpu.matmul %4, %5, %cst_6 {dimension_numbers = #tpu.dot_dimension_numbers<[1], [0], [0], [1], [0, 0, 1, 1], [], []>} : vector<8x256xf32>, vector<256x768xf32>, vector<8x768xf32> -> vector<8x768xf32>
      %c0_7 = arith.constant 0 : index
      %c0_8 = arith.constant 0 : index
      %7 = vector.load %arg5[%c0_7, %c0_8] : memref<1x768xf32, #tpu.memory_space<vmem>>, vector<1x768xf32>
      %8 = vector.broadcast %7 : vector<1x768xf32> to vector<8x768xf32>
      %9 = arith.addf %6, %8 : vector<8x768xf32>
      %10 = vector.extract_strided_slice %4 {offsets = [0, 0], sizes = [8, 128], strides = [1, 1]} : vector<8x256xf32> to vector<8x128xf32>
      %11 = vector.extract_strided_slice %4 {offsets = [0, 128], sizes = [8, 128], strides = [1, 1]} : vector<8x256xf32> to vector<8x128xf32>
      %12 = arith.index_cast %arg9 : i32 to index
      %c0_9 = arith.constant 0 : index
      %c0_10 = arith.constant 0 : index
      %13 = vector.load %arg2[%12, %c0_9, %c0_10] : memref<8x8x384xf32, #tpu.memory_space<vmem>>, vector<1x8x384xf32>
      %14 = vector.shape_cast %13 : vector<1x8x384xf32> to vector<8x384xf32>
      %15 = vector.extract_strided_slice %9 {offsets = [0, 0], sizes = [8, 384], strides = [1, 1]} : vector<8x768xf32> to vector<8x384xf32>
      %16 = vector.extract_strided_slice %14 {offsets = [0, 0], sizes = [8, 128], strides = [1, 1]} : vector<8x384xf32> to vector<8x128xf32>
      %17 = vector.extract_strided_slice %15 {offsets = [0, 0], sizes = [8, 128], strides = [1, 1]} : vector<8x384xf32> to vector<8x128xf32>
      %18 = arith.addf %16, %17 : vector<8x128xf32>
      %19 = arith.negf %18 : vector<8x128xf32>
      %20 = math.exp %19 : vector<8x128xf32>
      %cst_11 = arith.constant 1.000000e+00 : f32
      %21 = vector.broadcast %cst_11 : f32 to vector<8x128xf32>
      %22 = arith.addf %21, %20 : vector<8x128xf32>
      %23 = arith.divf %21, %22 : vector<8x128xf32>
      %24 = vector.extract_strided_slice %14 {offsets = [0, 128], sizes = [8, 128], strides = [1, 1]} : vector<8x384xf32> to vector<8x128xf32>
      %25 = vector.extract_strided_slice %15 {offsets = [0, 128], sizes = [8, 128], strides = [1, 1]} : vector<8x384xf32> to vector<8x128xf32>
      %26 = arith.addf %24, %25 : vector<8x128xf32>
      %27 = arith.negf %26 : vector<8x128xf32>
      %28 = math.exp %27 : vector<8x128xf32>
      %cst_12 = arith.constant 1.000000e+00 : f32
      %29 = vector.broadcast %cst_12 : f32 to vector<8x128xf32>
      %30 = arith.addf %29, %28 : vector<8x128xf32>
      %31 = arith.divf %29, %30 : vector<8x128xf32>
      %32 = vector.extract_strided_slice %14 {offsets = [0, 256], sizes = [8, 128], strides = [1, 1]} : vector<8x384xf32> to vector<8x128xf32>
      %33 = vector.extract_strided_slice %15 {offsets = [0, 256], sizes = [8, 128], strides = [1, 1]} : vector<8x384xf32> to vector<8x128xf32>
      %34 = arith.mulf %23, %33 : vector<8x128xf32>
      %35 = arith.addf %32, %34 : vector<8x128xf32>
      %36 = math.tanh %35 : vector<8x128xf32>
      %cst_13 = arith.constant 1.000000e+00 : f32
      %37 = vector.broadcast %cst_13 : f32 to vector<8x128xf32>
      %38 = arith.subf %37, %31 : vector<8x128xf32>
      %39 = arith.mulf %38, %36 : vector<8x128xf32>
      %40 = arith.mulf %31, %10 : vector<8x128xf32>
      %41 = arith.addf %39, %40 : vector<8x128xf32>
      %42 = arith.index_cast %3 : i32 to index
      %c0_14 = arith.constant 0 : index
      %c0_15 = arith.constant 0 : index
      %43 = vector.load %arg3[%42, %c0_14, %c0_15] : memref<8x8x384xf32, #tpu.memory_space<vmem>>, vector<1x8x384xf32>
      %44 = vector.shape_cast %43 : vector<1x8x384xf32> to vector<8x384xf32>
      %45 = vector.extract_strided_slice %9 {offsets = [0, 384], sizes = [8, 384], strides = [1, 1]} : vector<8x768xf32> to vector<8x384xf32>
      %46 = vector.extract_strided_slice %44 {offsets = [0, 0], sizes = [8, 128], strides = [1, 1]} : vector<8x384xf32> to vector<8x128xf32>
      %47 = vector.extract_strided_slice %45 {offsets = [0, 0], sizes = [8, 128], strides = [1, 1]} : vector<8x384xf32> to vector<8x128xf32>
      %48 = arith.addf %46, %47 : vector<8x128xf32>
      %49 = arith.negf %48 : vector<8x128xf32>
      %50 = math.exp %49 : vector<8x128xf32>
      %cst_16 = arith.constant 1.000000e+00 : f32
      %51 = vector.broadcast %cst_16 : f32 to vector<8x128xf32>
      %52 = arith.addf %51, %50 : vector<8x128xf32>
      %53 = arith.divf %51, %52 : vector<8x128xf32>
      %54 = vector.extract_strided_slice %44 {offsets = [0, 128], sizes = [8, 128], strides = [1, 1]} : vector<8x384xf32> to vector<8x128xf32>
      %55 = vector.extract_strided_slice %45 {offsets = [0, 128], sizes = [8, 128], strides = [1, 1]} : vector<8x384xf32> to vector<8x128xf32>
      %56 = arith.addf %54, %55 : vector<8x128xf32>
      %57 = arith.negf %56 : vector<8x128xf32>
      %58 = math.exp %57 : vector<8x128xf32>
      %cst_17 = arith.constant 1.000000e+00 : f32
      %59 = vector.broadcast %cst_17 : f32 to vector<8x128xf32>
      %60 = arith.addf %59, %58 : vector<8x128xf32>
      %61 = arith.divf %59, %60 : vector<8x128xf32>
      %62 = vector.extract_strided_slice %44 {offsets = [0, 256], sizes = [8, 128], strides = [1, 1]} : vector<8x384xf32> to vector<8x128xf32>
      %63 = vector.extract_strided_slice %45 {offsets = [0, 256], sizes = [8, 128], strides = [1, 1]} : vector<8x384xf32> to vector<8x128xf32>
      %64 = arith.mulf %53, %63 : vector<8x128xf32>
      %65 = arith.addf %62, %64 : vector<8x128xf32>
      %66 = math.tanh %65 : vector<8x128xf32>
      %cst_18 = arith.constant 1.000000e+00 : f32
      %67 = vector.broadcast %cst_18 : f32 to vector<8x128xf32>
      %68 = arith.subf %67, %61 : vector<8x128xf32>
      %69 = arith.mulf %68, %66 : vector<8x128xf32>
      %70 = arith.mulf %61, %11 : vector<8x128xf32>
      %71 = arith.addf %69, %70 : vector<8x128xf32>
      %72 = tpu.iota {dimensions = array<i32: 0>} : vector<8x128xi32>
      %73 = arith.index_cast %arg9 : i32 to index
      %74 = memref.load %arg1[%73] : memref<8xi32, #tpu.memory_space<smem>>
      %75 = vector.broadcast %74 : i32 to vector<8x128xi32>
      %76 = arith.cmpi slt, %72, %75 : vector<8x128xi32>
      %77 = arith.select %76, %41, %10 : vector<8x128xi1>, vector<8x128xf32>
      %78 = arith.index_cast %3 : i32 to index
      %79 = memref.load %arg1[%78] : memref<8xi32, #tpu.memory_space<smem>>
      %80 = vector.broadcast %79 : i32 to vector<8x128xi32>
      %81 = arith.cmpi slt, %72, %80 : vector<8x128xi32>
      %82 = arith.select %81, %71, %11 : vector<8x128xi1>, vector<8x128xf32>
      %c0_19 = arith.constant 0 : index
      %c0_20 = arith.constant 0 : index
      %83 = vector.load %arg8[%c0_19, %c0_20] : memref<8x256xf32, #tpu.memory_space<vmem>>, vector<8x128xf32>
      tpu.vector_store %arg8[%c0_19, %c0_20], %77 {strides = array<i32>} : memref<8x256xf32, #tpu.memory_space<vmem>>, vector<8x128xf32>,
      %c0_21 = arith.constant 0 : index
      %c128 = arith.constant 128 : index
      %84 = vector.load %arg8[%c0_21, %c128] : memref<8x256xf32, #tpu.memory_space<vmem>>, vector<8x128xf32>
      tpu.vector_store %arg8[%c0_21, %c128], %82 {strides = array<i32>} : memref<8x256xf32, #tpu.memory_space<vmem>>, vector<8x128xf32>,
      %85 = arith.index_cast %arg9 : i32 to index
      %c0_22 = arith.constant 0 : index
      %c0_23 = arith.constant 0 : index
      %86 = vector.load %arg6[%85, %c0_22, %c0_23] : memref<8x8x128xf32, #tpu.memory_space<vmem>>, vector<1x8x128xf32>
      %87 = vector.shape_cast %86 : vector<1x8x128xf32> to vector<8x128xf32>
      %88 = vector.shape_cast %77 : vector<8x128xf32> to vector<1x8x128xf32>
      tpu.vector_store %arg6[%85, %c0_22, %c0_23], %88 {strides = array<i32>} : memref<8x8x128xf32, #tpu.memory_space<vmem>>, vector<1x8x128xf32>,
      %89 = arith.index_cast %3 : i32 to index
      %c0_24 = arith.constant 0 : index
      %c0_25 = arith.constant 0 : index
      %90 = vector.load %arg7[%89, %c0_24, %c0_25] : memref<8x8x128xf32, #tpu.memory_space<vmem>>, vector<1x8x128xf32>
      %91 = vector.shape_cast %90 : vector<1x8x128xf32> to vector<8x128xf32>
      %92 = vector.shape_cast %82 : vector<8x128xf32> to vector<1x8x128xf32>
      tpu.vector_store %arg7[%89, %c0_24, %c0_25], %92 {strides = array<i32>} : memref<8x8x128xf32, #tpu.memory_space<vmem>>, vector<1x8x128xf32>,
    }
    %c8_i32_1 = arith.constant 8 : i32
    return
  }
  func.func @transform_0(%arg0: i32, %arg1: memref<8xi32, #tpu.memory_space<smem>>) -> (i32, i32, i32) {
    %c0_i32 = arith.constant 0 : i32
    %c0_i32_0 = arith.constant 0 : i32
    %c0_i32_1 = arith.constant 0 : i32
    %c0_i32_2 = arith.constant 0 : i32
    return %c0_i32, %c0_i32_0, %c0_i32_1 : i32, i32, i32
  }
  func.func @transform_1(%arg0: i32, %arg1: memref<8xi32, #tpu.memory_space<smem>>) -> (i32, i32, i32) {
    %c0_i32 = arith.constant 0 : i32
    %c0_i32_0 = arith.constant 0 : i32
    %c0_i32_1 = arith.constant 0 : i32
    %c0_i32_2 = arith.constant 0 : i32
    return %c0_i32, %c0_i32_0, %c0_i32_1 : i32, i32, i32
  }
  func.func @transform_2(%arg0: i32, %arg1: memref<8xi32, #tpu.memory_space<smem>>) -> (i32, i32) {
    %c0_i32 = arith.constant 0 : i32
    %c0_i32_0 = arith.constant 0 : i32
    %c0_i32_1 = arith.constant 0 : i32
    return %c0_i32, %c0_i32_0 : i32, i32
  }
  func.func @transform_3(%arg0: i32, %arg1: memref<8xi32, #tpu.memory_space<smem>>) -> (i32, i32) {
    %c0_i32 = arith.constant 0 : i32
    %c0_i32_0 = arith.constant 0 : i32
    %c0_i32_1 = arith.constant 0 : i32
    return %c0_i32, %c0_i32_0 : i32, i32
  }
  func.func @transform_4(%arg0: i32, %arg1: memref<8xi32, #tpu.memory_space<smem>>) -> (i32, i32, i32) {
    %c0_i32 = arith.constant 0 : i32
    %c0_i32_0 = arith.constant 0 : i32
    %c0_i32_1 = arith.constant 0 : i32
    %c0_i32_2 = arith.constant 0 : i32
    return %c0_i32, %c0_i32_0, %c0_i32_1 : i32, i32, i32
  }
  func.func @transform_5(%arg0: i32, %arg1: memref<8xi32, #tpu.memory_space<smem>>) -> (i32, i32, i32) {
    %c0_i32 = arith.constant 0 : i32
    %c0_i32_0 = arith.constant 0 : i32
    %c0_i32_1 = arith.constant 0 : i32
    %c0_i32_2 = arith.constant 0 : i32
    return %c0_i32, %c0_i32_0, %c0_i32_1 : i32, i32, i32
  }
}

</mosaic_0001>

<llo_original>
// kernel: char_classifier_forward.6
$region0: #{char_classifier_forward.6}
  #allocation0 [shape = 'u32[]', space=smem, size = 0x4, offset = 0x4, fixed_abs, tag = 'smem constant byte address 0x4 - core index']
  #allocation1 [shape = 'u32[144,128]{1,0:T(1,128)}', space=vmem, size = 0x12000, scoped, tag = 'internal scratch']
  %s0 = inlined_call_operand.vmem [shape: f32[64,16], index: 0, kind: input, shape index: {}]
  %s1 = inlined_call_operand.vmem [shape: f32[16,768], index: 1, kind: input, shape index: {}]
  %s2 = inlined_call_operand.vmem [shape: f32[1,768], index: 2, kind: input, shape index: {}]
  %s3 = inlined_call_operand.vmem [shape: f32[64,384], index: 3, kind: output, shape index: {0}]
  %s4 = inlined_call_operand.vmem [shape: f32[64,384], index: 4, kind: output, shape index: {1}]
  %5 = xla_tuple %s3, %s4
  %s6 = sld [smem:[#allocation0]]
  $region30: #{char_classifier_forward.6} parent=0
    _
  %s8 = ssub.s32 1, %s6
  %s9 = scalar_select 0, %s8, %s6
  // Predicated region
  $region2: #{char_classifier_forward.6} parent=0 // pred_check
    _
  $region3: #{char_classifier_forward.6} parent=0 // pred_check_branch
    %11 = sbr.rel (0) target = $region5
  $region4: #{char_classifier_forward.6} parent=0 // pred_region
    _
  $region5: #{char_classifier_forward.6} parent=0 // pred_fallthru
    _
  // Predicated region
  $region6: #{char_classifier_forward.6} parent=0 // pred_check
    _
  $region7: #{char_classifier_forward.6} parent=0 // pred_check_branch
    %13 = sbr.rel (0) target = $region9
  $region8: #{char_classifier_forward.6} parent=0 // pred_region
    _
  $region9: #{char_classifier_forward.6} parent=0 // pred_fallthru
    _
  // Predicated region
  $region10: #{char_classifier_forward.6} parent=0 // pred_check
    _
  $region11: #{char_classifier_forward.6} parent=0 // pred_check_branch
    %15 = sbr.rel (0) target = $region13
  $region12: #{char_classifier_forward.6} parent=0 // pred_region
    _
  $region13: #{char_classifier_forward.6} parent=0 // pred_fallthru
    _
  %v16 = vld [vmem:[%s0] sm:$0xff]
  %v17 = vld [vmem:[%s0 + $0x8] sm:$0xff]
  %v18 = vld [vmem:[%s0 + $0x10] sm:$0xff]
  %v19 = vld [vmem:[%s0 + $0x18] sm:$0xff]
  %v20 = vld [vmem:[%s0 + $0x20] sm:$0xff]
  %v21 = vld [vmem:[%s0 + $0x28] sm:$0xff]
  %v22 = vld [vmem:[%s0 + $0x30] sm:$0xff]
  %v23 = vld [vmem:[%s0 + $0x38] sm:$0xff]
  %v24 = vld [vmem:[%s1] sm:$0xff]
  %v25 = vld [vmem:[%s1 + $0x8] sm:$0xff]
  %v26 = vld [vmem:[%s1 + $0x10] sm:$0xff]
  %v27 = vld [vmem:[%s1 + $0x18] sm:$0xff]
  %v28 = vld [vmem:[%s1 + $0x20] sm:$0xff]
  %v29 = vld [vmem:[%s1 + $0x28] sm:$0xff]
  %v30 = vld [vmem:[%s1 + $0x30] sm:$0xff]
  %v31 = vld [vmem:[%s1 + $0x38] sm:$0xff]
  %v32 = vld [vmem:[%s1 + $0x40] sm:$0xff]
  %v33 = vld [vmem:[%s1 + $0x48] sm:$0xff]
  %v34 = vld [vmem:[%s1 + $0x50] sm:$0xff]
  %v35 = vld [vmem:[%s1 + $0x58] sm:$0xff]
  %v36 = vld [vmem:[%s2] sm:$0x3f]
  %v38 = vlaneseq
  %v39 = vshrl.u32 %v38, 7
  %v40 = vsub.s32 0, %v39
  %v41 = vrot.slane %v36, %v40
  %v42 = vlaneseq
  %v43 = vshrl.u32 %v42, 7
  %v44 = vsub.s32 1, %v43
  %v45 = vrot.slane %v36, %v44
  %v46 = vlaneseq
  %v47 = vshrl.u32 %v46, 7
  %v48 = vsub.s32 2, %v47
  %v49 = vrot.slane %v36, %v48
  %v50 = vlaneseq
  %v51 = vshrl.u32 %v50, 7
  %v52 = vsub.s32 3, %v51
  %v53 = vrot.slane %v36, %v52
  %v54 = vlaneseq
  %v55 = vshrl.u32 %v54, 7
  %v56 = vsub.s32 4, %v55
  %v57 = vrot.slane %v36, %v56
  %v58 = vlaneseq
  %v59 = vshrl.u32 %v58, 7
  %v60 = vsub.s32 5, %v59
  %v61 = vrot.slane %v36, %v60
  %vm68 = vcmask 130048
  %v70 = vsel %vm68, %v16, 0
  %v73 = vsel %vm68, %v17, 0
  %v76 = vsel %vm68, %v18, 0
  %v79 = vsel %vm68, %v19, 0
  %v82 = vsel %vm68, %v20, 0
  %v85 = vsel %vm68, %v21, 0
  %v88 = vsel %vm68, %v22, 0
  %v91 = vsel %vm68, %v23, 0
  %93 = vmatprep.subr.mxu0 0.0
  %94 = vmatpush1.msra.mxu0 0.0
  %95 = vmatprep.subr.mxu0 0.0
  %96 = vmatpush1.msra.mxu0 0.0
  %97 = vmatprep.subr.mxu0 0.0
  %98 = vmatpush1.msra.mxu0 0.0
  %99 = vmatprep.subr.mxu0 0.0
  %100 = vmatpush1.msra.mxu0 0.0
  %101 = vmatprep.subr.mxu0 0.0
  %102 = vmatpush1.msra.mxu0 0.0
  %103 = vmatprep.subr.mxu0 0.0
  %104 = vmatpush1.msra.mxu0 0.0
  %105 = vmatprep.subr.mxu0 0.0
  %106 = vmatpush1.msra.mxu0 0.0
  %107 = vmatprep.subr.mxu0 0.0
  %108 = vmatpush1.msra.mxu0 0.0
  %109 = vmatprep.subr.mxu0 0.0
  %110 = vmatpush1.msra.mxu0 0.0
  %111 = vmatprep.subr.mxu0 0.0
  %112 = vmatpush1.msra.mxu0 0.0
  %113 = vmatprep.subr.mxu0 0.0
  %114 = vmatpush1.msra.mxu0 0.0
  %115 = vmatprep.subr.mxu0 0.0
  %116 = vmatpush1.msra.mxu0 0.0
  %117 = vmatprep.subr.mxu0 0.0
  %118 = vmatpush1.msra.mxu0 0.0
  %119 = vmatprep.subr.mxu0 0.0
  %120 = vmatpush1.msra.mxu0 0.0
  %121 = vmatprep.subr.mxu0 %v31
  %122 = vmatpush1.msra.mxu0 %v30
  %123 = vmatprep.subr.mxu0 %v25
  %124 = vmatpush1.msra.mxu0 %v24
  %125 = vmatprep.subr.mxu0 0.0
  %126 = vmatpush2.msra.mxu0 0.0
  %127 = vmatprep.subr.mxu0 0.0
  %128 = vmatpush2.msra.mxu0 0.0
  %129 = vmatprep.subr.mxu0 0.0
  %130 = vmatpush2.msra.mxu0 0.0
  %131 = vmatprep.subr.mxu0 0.0
  %132 = vmatpush2.msra.mxu0 0.0
  %133 = vmatprep.subr.mxu0 0.0
  %134 = vmatpush2.msra.mxu0 0.0
  %135 = vmatprep.subr.mxu0 0.0
  %136 = vmatpush2.msra.mxu0 0.0
  %137 = vmatprep.subr.mxu0 0.0
  %138 = vmatpush2.msra.mxu0 0.0
  %139 = vmatprep.subr.mxu0 0.0
  %140 = vmatpush2.msra.mxu0 0.0
  %141 = vmatprep.subr.mxu0 0.0
  %142 = vmatpush2.msra.mxu0 0.0
  %143 = vmatprep.subr.mxu0 0.0
  %144 = vmatpush2.msra.mxu0 0.0
  %145 = vmatprep.subr.mxu0 0.0
  %146 = vmatpush2.msra.mxu0 0.0
  %147 = vmatprep.subr.mxu0 0.0
  %148 = vmatpush2.msra.mxu0 0.0
  %149 = vmatprep.subr.mxu0 0.0
  %150 = vmatpush2.msra.mxu0 0.0
  %151 = vmatprep.subr.mxu0 0.0
  %152 = vmatpush2.msra.mxu0 0.0
  %153 = vmatprep.subr.mxu0 0.0
  %154 = vmatpush2.msra.mxu0 0.0
  %155 = vmatprep.subr.mxu0 0.0
  %156 = vmatpush2.msra.mxu0 0.0
  %157 = vmatprep.mubr.f32.mxu0 0.0
  %158 = vmatmul.mubr.f32.gmra.mxu0 %v70
  %v159 = vpop.f32.mrf.mxu0
  %v160 = vadd.f32 %v41, %v159
  %v161 = vpop.f32.mrf.mxu0
  %v162 = vadd.f32 %v45, %v161
  %163 = vmatprep.mubr.f32.mxu0 0.0
  %164 = vmatmul.mubr.f32.gmra.mxu0 %v73
  %v165 = vpop.f32.mrf.mxu0
  %v166 = vadd.f32 %v41, %v165
  %v167 = vpop.f32.mrf.mxu0
  %v168 = vadd.f32 %v45, %v167
  %169 = vmatprep.mubr.f32.mxu0 0.0
  %170 = vmatmul.mubr.f32.gmra.mxu0 %v76
  %v171 = vpop.f32.mrf.mxu0
  %v172 = vadd.f32 %v41, %v171
  %v173 = vpop.f32.mrf.mxu0
  %v174 = vadd.f32 %v45, %v173
  %175 = vmatprep.mubr.f32.mxu0 0.0
  %176 = vmatmul.mubr.f32.gmra.mxu0 %v79
  %v177 = vpop.f32.mrf.mxu0
  %v178 = vadd.f32 %v41, %v177
  %v179 = vpop.f32.mrf.mxu0
  %v180 = vadd.f32 %v45, %v179
  %181 = vmatprep.mubr.f32.mxu0 0.0
  %182 = vmatmul.mubr.f32.gmra.mxu0 %v82
  %v183 = vpop.f32.mrf.mxu0
  %v184 = vadd.f32 %v41, %v183
  %v185 = vpop.f32.mrf.mxu0
  %v186 = vadd.f32 %v45, %v185
  %187 = vmatprep.mubr.f32.mxu0 0.0
  %188 = vmatmul.mubr.f32.gmra.mxu0 %v85
  %v189 = vpop.f32.mrf.mxu0
  %v190 = vadd.f32 %v41, %v189
  %v191 = vpop.f32.mrf.mxu0
  %v192 = vadd.f32 %v45, %v191
  %193 = vmatprep.mubr.f32.mxu0 0.0
  %194 = vmatmul.mubr.f32.gmra.mxu0 %v88
  %v195 = vpop.f32.mrf.mxu0
  %v196 = vadd.f32 %v41, %v195
  %v197 = vpop.f32.mrf.mxu0
  %v198 = vadd.f32 %v45, %v197
  %199 = vmatprep.mubr.f32.mxu0 0.0
  %200 = vmatmul.mubr.f32.gmra.mxu0 %v91
  %v201 = vpop.f32.mrf.mxu0
  %v202 = vadd.f32 %v41, %v201
  %v203 = vpop.f32.mrf.mxu0
  %v204 = vadd.f32 %v45, %v203
  %205 = vdwg.mxu0
  %206 = vmatprep.subr.mxu0 0.0
  %207 = vmatpush1.msra.mxu0 0.0
  %208 = vmatprep.subr.mxu0 0.0
  %209 = vmatpush1.msra.mxu0 0.0
  %210 = vmatprep.subr.mxu0 0.0
  %211 = vmatpush1.msra.mxu0 0.0
  %212 = vmatprep.subr.mxu0 0.0
  %213 = vmatpush1.msra.mxu0 0.0
  %214 = vmatprep.subr.mxu0 0.0
  %215 = vmatpush1.msra.mxu0 0.0
  %216 = vmatprep.subr.mxu0 0.0
  %217 = vmatpush1.msra.mxu0 0.0
  %218 = vmatprep.subr.mxu0 0.0
  %219 = vmatpush1.msra.mxu0 0.0
  %220 = vmatprep.subr.mxu0 0.0
  %221 = vmatpush1.msra.mxu0 0.0
  %222 = vmatprep.subr.mxu0 0.0
  %223 = vmatpush1.msra.mxu0 0.0
  %224 = vmatprep.subr.mxu0 0.0
  %225 = vmatpush1.msra.mxu0 0.0
  %226 = vmatprep.subr.mxu0 0.0
  %227 = vmatpush1.msra.mxu0 0.0
  %228 = vmatprep.subr.mxu0 0.0
  %229 = vmatpush1.msra.mxu0 0.0
  %230 = vmatprep.subr.mxu0 0.0
  %231 = vmatpush1.msra.mxu0 0.0
  %232 = vmatprep.subr.mxu0 0.0
  %233 = vmatpush1.msra.mxu0 0.0
  %234 = vmatprep.subr.mxu0 %v33
  %235 = vmatpush1.msra.mxu0 %v32
  %236 = vmatprep.subr.mxu0 %v27
  %237 = vmatpush1.msra.mxu0 %v26
  %238 = vmatprep.subr.mxu0 0.0
  %239 = vmatpush2.msra.mxu0 0.0
  %240 = vmatprep.subr.mxu0 0.0
  %241 = vmatpush2.msra.mxu0 0.0
  %242 = vmatprep.subr.mxu0 0.0
  %243 = vmatpush2.msra.mxu0 0.0
  %244 = vmatprep.subr.mxu0 0.0
  %245 = vmatpush2.msra.mxu0 0.0
  %246 = vmatprep.subr.mxu0 0.0
  %247 = vmatpush2.msra.mxu0 0.0
  %248 = vmatprep.subr.mxu0 0.0
  %249 = vmatpush2.msra.mxu0 0.0
  %250 = vmatprep.subr.mxu0 0.0
  %251 = vmatpush2.msra.mxu0 0.0
  %252 = vmatprep.subr.mxu0 0.0
  %253 = vmatpush2.msra.mxu0 0.0
  %254 = vmatprep.subr.mxu0 0.0
  %255 = vmatpush2.msra.mxu0 0.0
  %256 = vmatprep.subr.mxu0 0.0
  %257 = vmatpush2.msra.mxu0 0.0
  %258 = vmatprep.subr.mxu0 0.0
  %259 = vmatpush2.msra.mxu0 0.0
  %260 = vmatprep.subr.mxu0 0.0
  %261 = vmatpush2.msra.mxu0 0.0
  %262 = vmatprep.subr.mxu0 0.0
  %263 = vmatpush2.msra.mxu0 0.0
  %264 = vmatprep.subr.mxu0 0.0
  %265 = vmatpush2.msra.mxu0 0.0
  %266 = vmatprep.subr.mxu0 0.0
  %267 = vmatpush2.msra.mxu0 0.0
  %268 = vmatprep.subr.mxu0 0.0
  %269 = vmatpush2.msra.mxu0 0.0
  %270 = vmatprep.mubr.f32.mxu0 0.0
  %271 = vmatmul.mubr.f32.gmra.mxu0 %v70
  %v272 = vpop.f32.mrf.mxu0
  %v273 = vadd.f32 %v49, %v272
  %v274 = vpop.f32.mrf.mxu0
  %v275 = vadd.f32 %v53, %v274
  %276 = vmatprep.mubr.f32.mxu0 0.0
  %277 = vmatmul.mubr.f32.gmra.mxu0 %v73
  %v278 = vpop.f32.mrf.mxu0
  %v279 = vadd.f32 %v49, %v278
  %v280 = vpop.f32.mrf.mxu0
  %v281 = vadd.f32 %v53, %v280
  %282 = vmatprep.mubr.f32.mxu0 0.0
  %283 = vmatmul.mubr.f32.gmra.mxu0 %v76
  %v284 = vpop.f32.mrf.mxu0
  %v285 = vadd.f32 %v49, %v284
  %v286 = vpop.f32.mrf.mxu0
  %v287 = vadd.f32 %v53, %v286
  %288 = vmatprep.mubr.f32.mxu0 0.0
  %289 = vmatmul.mubr.f32.gmra.mxu0 %v79
  %v290 = vpop.f32.mrf.mxu0
  %v291 = vadd.f32 %v49, %v290
  %v292 = vpop.f32.mrf.mxu0
  %v293 = vadd.f32 %v53, %v292
  %294 = vmatprep.mubr.f32.mxu0 0.0
  %295 = vmatmul.mubr.f32.gmra.mxu0 %v82
  %v296 = vpop.f32.mrf.mxu0
  %v297 = vadd.f32 %v49, %v296
  %v298 = vpop.f32.mrf.mxu0
  %v299 = vadd.f32 %v53, %v298
  %300 = vmatprep.mubr.f32.mxu0 0.0
  %301 = vmatmul.mubr.f32.gmra.mxu0 %v85
  %v302 = vpop.f32.mrf.mxu0
  %v303 = vadd.f32 %v49, %v302
  %v304 = vpop.f32.mrf.mxu0
  %v305 = vadd.f32 %v53, %v304
  %306 = vmatprep.mubr.f32.mxu0 0.0
  %307 = vmatmul.mubr.f32.gmra.mxu0 %v88
  %v308 = vpop.f32.mrf.mxu0
  %v309 = vadd.f32 %v49, %v308
  %v310 = vpop.f32.mrf.mxu0
  %v311 = vadd.f32 %v53, %v310
  %312 = vmatprep.mubr.f32.mxu0 0.0
  %313 = vmatmul.mubr.f32.gmra.mxu0 %v91
  %v314 = vpop.f32.mrf.mxu0
  %v315 = vadd.f32 %v49, %v314
  %v316 = vpop.f32.mrf.mxu0
  %v317 = vadd.f32 %v53, %v316
  %318 = vdwg.mxu0
  %319 = vmatprep.subr.mxu0 0.0
  %320 = vmatpush1.msra.mxu0 0.0
  %321 = vmatprep.subr.mxu0 0.0
  %322 = vmatpush1.msra.mxu0 0.0
  %323 = vmatprep.subr.mxu0 0.0
  %324 = vmatpush1.msra.mxu0 0.0
  %325 = vmatprep.subr.mxu0 0.0
  %326 = vmatpush1.msra.mxu0 0.0
  %327 = vmatprep.subr.mxu0 0.0
  %328 = vmatpush1.msra.mxu0 0.0
  %329 = vmatprep.subr.mxu0 0.0
  %330 = vmatpush1.msra.mxu0 0.0
  %331 = vmatprep.subr.mxu0 0.0
  %332 = vmatpush1.msra.mxu0 0.0
  %333 = vmatprep.subr.mxu0 0.0
  %334 = vmatpush1.msra.mxu0 0.0
  %335 = vmatprep.subr.mxu0 0.0
  %336 = vmatpush1.msra.mxu0 0.0
  %337 = vmatprep.subr.mxu0 0.0
  %338 = vmatpush1.msra.mxu0 0.0
  %339 = vmatprep.subr.mxu0 0.0
  %340 = vmatpush1.msra.mxu0 0.0
  %341 = vmatprep.subr.mxu0 0.0
  %342 = vmatpush1.msra.mxu0 0.0
  %343 = vmatprep.subr.mxu0 0.0
  %344 = vmatpush1.msra.mxu0 0.0
  %345 = vmatprep.subr.mxu0 0.0
  %346 = vmatpush1.msra.mxu0 0.0
  %347 = vmatprep.subr.mxu0 %v35
  %348 = vmatpush1.msra.mxu0 %v34
  %349 = vmatprep.subr.mxu0 %v29
  %350 = vmatpush1.msra.mxu0 %v28
  %351 = vmatprep.subr.mxu0 0.0
  %352 = vmatpush2.msra.mxu0 0.0
  %353 = vmatprep.subr.mxu0 0.0
  %354 = vmatpush2.msra.mxu0 0.0
  %355 = vmatprep.subr.mxu0 0.0
  %356 = vmatpush2.msra.mxu0 0.0
  %357 = vmatprep.subr.mxu0 0.0
  %358 = vmatpush2.msra.mxu0 0.0
  %359 = vmatprep.subr.mxu0 0.0
  %360 = vmatpush2.msra.mxu0 0.0
  %361 = vmatprep.subr.mxu0 0.0
  %362 = vmatpush2.msra.mxu0 0.0
  %363 = vmatprep.subr.mxu0 0.0
  %364 = vmatpush2.msra.mxu0 0.0
  %365 = vmatprep.subr.mxu0 0.0
  %366 = vmatpush2.msra.mxu0 0.0
  %367 = vmatprep.subr.mxu0 0.0
  %368 = vmatpush2.msra.mxu0 0.0
  %369 = vmatprep.subr.mxu0 0.0
  %370 = vmatpush2.msra.mxu0 0.0
  %371 = vmatprep.subr.mxu0 0.0
  %372 = vmatpush2.msra.mxu0 0.0
  %373 = vmatprep.subr.mxu0 0.0
  %374 = vmatpush2.msra.mxu0 0.0
  %375 = vmatprep.subr.mxu0 0.0
  %376 = vmatpush2.msra.mxu0 0.0
  %377 = vmatprep.subr.mxu0 0.0
  %378 = vmatpush2.msra.mxu0 0.0
  %379 = vmatprep.subr.mxu0 0.0
  %380 = vmatpush2.msra.mxu0 0.0
  %381 = vmatprep.subr.mxu0 0.0
  %382 = vmatpush2.msra.mxu0 0.0
  %383 = vmatprep.mubr.f32.mxu0 0.0
  %384 = vmatmul.mubr.f32.gmra.mxu0 %v70
  %v385 = vpop.f32.mrf.mxu0
  %v386 = vadd.f32 %v57, %v385
  %v387 = vpop.f32.mrf.mxu0
  %v388 = vadd.f32 %v61, %v387
  %389 = vmatprep.mubr.f32.mxu0 0.0
  %390 = vmatmul.mubr.f32.gmra.mxu0 %v73
  %v391 = vpop.f32.mrf.mxu0
  %v392 = vadd.f32 %v57, %v391
  %v393 = vpop.f32.mrf.mxu0
  %v394 = vadd.f32 %v61, %v393
  %395 = vmatprep.mubr.f32.mxu0 0.0
  %396 = vmatmul.mubr.f32.gmra.mxu0 %v76
  %v397 = vpop.f32.mrf.mxu0
  %v398 = vadd.f32 %v57, %v397
  %v399 = vpop.f32.mrf.mxu0
  %v400 = vadd.f32 %v61, %v399
  %401 = vmatprep.mubr.f32.mxu0 0.0
  %402 = vmatmul.mubr.f32.gmra.mxu0 %v79
  %v403 = vpop.f32.mrf.mxu0
  %v404 = vadd.f32 %v57, %v403
  %v405 = vpop.f32.mrf.mxu0
  %v406 = vadd.f32 %v61, %v405
  %407 = vmatprep.mubr.f32.mxu0 0.0
  %408 = vmatmul.mubr.f32.gmra.mxu0 %v82
  %v409 = vpop.f32.mrf.mxu0
  %v410 = vadd.f32 %v57, %v409
  %v411 = vpop.f32.mrf.mxu0
  %v412 = vadd.f32 %v61, %v411
  %413 = vmatprep.mubr.f32.mxu0 0.0
  %414 = vmatmul.mubr.f32.gmra.mxu0 %v85
  %v415 = vpop.f32.mrf.mxu0
  %v416 = vadd.f32 %v57, %v415
  %v417 = vpop.f32.mrf.mxu0
  %v418 = vadd.f32 %v61, %v417
  %419 = vmatprep.mubr.f32.mxu0 0.0
  %420 = vmatmul.mubr.f32.gmra.mxu0 %v88
  %v421 = vpop.f32.mrf.mxu0
  %v422 = vadd.f32 %v57, %v421
  %v423 = vpop.f32.mrf.mxu0
  %v424 = vadd.f32 %v61, %v423
  %425 = vmatprep.mubr.f32.mxu0 0.0
  %426 = vmatmul.mubr.f32.gmra.mxu0 %v91
  %v427 = vpop.f32.mrf.mxu0
  %v428 = vadd.f32 %v57, %v427
  %v429 = vpop.f32.mrf.mxu0
  %v430 = vadd.f32 %v61, %v429
  %431 = vdwg.mxu0
  %432 = vst [vmem:[%s3] sm:$0xff] %v160
  %433 = vst [vmem:[%s3 + $0x8] sm:$0xff] %v162
  %434 = vst [vmem:[%s3 + $0x10] sm:$0xff] %v273
  %435 = vst [vmem:[%s3 + $0x18] sm:$0xff] %v166
  %436 = vst [vmem:[%s3 + $0x20] sm:$0xff] %v168
  %437 = vst [vmem:[%s3 + $0x28] sm:$0xff] %v279
  %438 = vst [vmem:[%s3 + $0x30] sm:$0xff] %v172
  %439 = vst [vmem:[%s3 + $0x38] sm:$0xff] %v174
  %440 = vst [vmem:[%s3 + $0x40] sm:$0xff] %v285
  %441 = vst [vmem:[%s3 + $0x48] sm:$0xff] %v178
  %442 = vst [vmem:[%s3 + $0x50] sm:$0xff] %v180
  %443 = vst [vmem:[%s3 + $0x58] sm:$0xff] %v291
  %444 = vst [vmem:[%s3 + $0x60] sm:$0xff] %v184
  %445 = vst [vmem:[%s3 + $0x68] sm:$0xff] %v186
  %446 = vst [vmem:[%s3 + $0x70] sm:$0xff] %v297
  %447 = vst [vmem:[%s3 + $0x78] sm:$0xff] %v190
  %448 = vst [vmem:[%s3 + $0x80] sm:$0xff] %v192
  %449 = vst [vmem:[%s3 + $0x88] sm:$0xff] %v303
  %450 = vst [vmem:[%s3 + $0x90] sm:$0xff] %v196
  %451 = vst [vmem:[%s3 + $0x98] sm:$0xff] %v198
  %452 = vst [vmem:[%s3 + $0xa0] sm:$0xff] %v309
  %453 = vst [vmem:[%s3 + $0xa8] sm:$0xff] %v202
  %454 = vst [vmem:[%s3 + $0xb0] sm:$0xff] %v204
  %455 = vst [vmem:[%s3 + $0xb8] sm:$0xff] %v315
  %456 = vst [vmem:[%s4] sm:$0xff] %v275
  %457 = vst [vmem:[%s4 + $0x8] sm:$0xff] %v386
  %458 = vst [vmem:[%s4 + $0x10] sm:$0xff] %v388
  %459 = vst [vmem:[%s4 + $0x18] sm:$0xff] %v281
  %460 = vst [vmem:[%s4 + $0x20] sm:$0xff] %v392
  %461 = vst [vmem:[%s4 + $0x28] sm:$0xff] %v394
  %462 = vst [vmem:[%s4 + $0x30] sm:$0xff] %v287
  %463 = vst [vmem:[%s4 + $0x38] sm:$0xff] %v398
  %464 = vst [vmem:[%s4 + $0x40] sm:$0xff] %v400
  %465 = vst [vmem:[%s4 + $0x48] sm:$0xff] %v293
  %466 = vst [vmem:[%s4 + $0x50] sm:$0xff] %v404
  %467 = vst [vmem:[%s4 + $0x58] sm:$0xff] %v406
  %468 = vst [vmem:[%s4 + $0x60] sm:$0xff] %v299
  %469 = vst [vmem:[%s4 + $0x68] sm:$0xff] %v410
  %470 = vst [vmem:[%s4 + $0x70] sm:$0xff] %v412
  %471 = vst [vmem:[%s4 + $0x78] sm:$0xff] %v305
  %472 = vst [vmem:[%s4 + $0x80] sm:$0xff] %v416
  %473 = vst [vmem:[%s4 + $0x88] sm:$0xff] %v418
  %474 = vst [vmem:[%s4 + $0x90] sm:$0xff] %v311
  %475 = vst [vmem:[%s4 + $0x98] sm:$0xff] %v422
  %476 = vst [vmem:[%s4 + $0xa0] sm:$0xff] %v424
  %477 = vst [vmem:[%s4 + $0xa8] sm:$0xff] %v317
  %478 = vst [vmem:[%s4 + $0xb0] sm:$0xff] %v428
  %479 = vst [vmem:[%s4 + $0xb8] sm:$0xff] %v430
  // Predicated region
  $region14: #{char_classifier_forward.6} parent=0 // pred_check
    _
  $region15: #{char_classifier_forward.6} parent=0 // pred_check_branch
    %481 = sbr.rel (0) target = $region17
  $region16: #{char_classifier_forward.6} parent=0 // pred_region
    _
  $region17: #{char_classifier_forward.6} parent=0 // pred_fallthru
    _
  // Predicated region
  $region18: #{char_classifier_forward.6} parent=0 // pred_check
    _
  $region19: #{char_classifier_forward.6} parent=0 // pred_check_branch
    %483 = sbr.rel (0) target = $region21
  $region20: #{char_classifier_forward.6} parent=0 // pred_region
    _
  $region21: #{char_classifier_forward.6} parent=0 // pred_fallthru
    _
  // Predicated region
  $region22: #{char_classifier_forward.6} parent=0 // pred_check
    _
  $region23: #{char_classifier_forward.6} parent=0 // pred_check_branch
    %485 = sbr.rel (0) target = $region25
  $region24: #{char_classifier_forward.6} parent=0 // pred_region
    _
  $region25: #{char_classifier_forward.6} parent=0 // pred_fallthru
    _
  // Predicated region
  $region26: #{char_classifier_forward.6} parent=0 // pred_check
    _
  $region27: #{char_classifier_forward.6} parent=0 // pred_check_branch
    %487 = sbr.rel (0) target = $region29
  $region28: #{char_classifier_forward.6} parent=0 // pred_region
    _
  $region29: #{char_classifier_forward.6} parent=0 // pred_fallthru
    _

// kernel: char_classifier_forward.7
$region0: #{char_classifier_forward.7}
  #allocation0 [shape = 'u32[]', space=smem, size = 0x4, offset = 0x4, fixed_abs, tag = 'smem constant byte address 0x4 - core index']
  #allocation1 [shape = 'u32[144,128]{1,0:T(1,128)}', space=vmem, size = 0x12000, scoped, tag = 'internal scratch']
  #allocation2 [shape = 'f32[8,256]{1,0:T(8,128)}', space=vmem, size = 0x2000, scoped, tag = 'scratch operand']
  #allocation3 [shape = 's32[1]{0}', space=sflag, size = 0x4, scoped, tag = 'scoped memory for char_classifier_forward.7']
  #allocation4 [shape = 'u8[512]{0}', space=smem, size = 0x200, scoped, tag = 'prefetched SMEM operand 0']
  %s0 = inlined_call_operand.vmem [shape: s32[8], index: 0, kind: input, shape index: {}]
  %s1 = inlined_call_operand.vmem [shape: f32[8,8,384], index: 1, kind: input, shape index: {}]
  %s2 = inlined_call_operand.vmem [shape: f32[8,8,384], index: 2, kind: input, shape index: {}]
  %s3 = inlined_call_operand.hbm [shape: f32[256,768], index: 3, kind: input, shape index: {}]
  %s4 = inlined_call_operand.vmem [shape: f32[1,768], index: 4, kind: input, shape index: {}]
  %s5 = inlined_call_operand.vmem [shape: f32[8,8,128], index: 5, kind: output, shape index: {0}]
  %s6 = inlined_call_operand.vmem [shape: f32[8,8,128], index: 6, kind: output, shape index: {1}]
  %7 = xla_tuple %s5, %s6
  %s8 = sld [smem:[#allocation0]]
  $region45: #{char_classifier_forward.7} parent=0
    _
  %s10 = ssub.s32 1, %s8
  %s11 = scalar_select 0, %s10, %s8
  %s12 = sshll.u32 %s0, 4
  %s13 = int_to_ptr.vmem [resolvable:$true] %s12
  %15 = dma.vmem_to_smem %s13, 16, [#allocation4], [#allocation3]
  %16 = dma.done [#allocation3], 16
  %17 = sfence
  $region1: #{char_classifier_forward.7} parent=0
    #allocation5 [shape = 'u8[786432]{0}', space=vmem, size = 0xc0000, scoped, tag = 'input window, operand 3, single buffered']
    #allocation6 [shape = 's32[1]{0}', space=sflag, size = 0x4, scoped, tag = 'scoped memory for char_classifier_forward.7']
    %18 = vsyncpa [#allocation6], 0
    // Predicated region
    $region2: #{char_classifier_forward.7} parent=1 // pred_check
      _
    $region3: #{char_classifier_forward.7} parent=1 // pred_check_branch
      %20 = sbr.rel (0) target = $region5
    $region4: #{char_classifier_forward.7} parent=1 // pred_region
      _
    $region5: #{char_classifier_forward.7} parent=1 // pred_fallthru
      _
    // Predicated region
    $region6: #{char_classifier_forward.7} parent=1 // pred_check
      _
    $region7: #{char_classifier_forward.7} parent=1 // pred_check_branch
      %22 = sbr.rel (0) target = $region9
    $region8: #{char_classifier_forward.7} parent=1 // pred_region
      _
    $region9: #{char_classifier_forward.7} parent=1 // pred_fallthru
      _
    // Predicated region
    $region10: #{char_classifier_forward.7} parent=1 // pred_check
      _
    $region11: #{char_classifier_forward.7} parent=1 // pred_check_branch
      %24 = sbr.rel (0) target = $region13
    $region12: #{char_classifier_forward.7} parent=1 // pred_region
      %s26 = ssub.s32 24576, 24576
      %27 = vsyncadd [#allocation6], %s26
      %s28 = sshll.u32 [#allocation5], 4
      %s29 = int_to_ptr.vmem [resolvable:$true] %s28
      %34 = dma.hbm_to_vmem [thread:$0]  %s3, 24576, %s29, [#allocation6], 768, 768, 48
    $region13: #{char_classifier_forward.7} parent=1 // pred_fallthru
      _
    // Predicated region
    $region14: #{char_classifier_forward.7} parent=1 // pred_check
      _
    $region15: #{char_classifier_forward.7} parent=1 // pred_check_branch
      %36 = sbr.rel (0) target = $region17
    $region16: #{char_classifier_forward.7} parent=1 // pred_region
      _
    $region17: #{char_classifier_forward.7} parent=1 // pred_fallthru
      _
    // Predicated region
    $region18: #{char_classifier_forward.7} parent=1 // pred_check
      _
    $region19: #{char_classifier_forward.7} parent=1 // pred_check_branch
      %38 = sbr.rel (0) target = $region21
    $region20: #{char_classifier_forward.7} parent=1 // pred_region
      %39 = dma.done [#allocation6], 24576
    $region21: #{char_classifier_forward.7} parent=1 // pred_fallthru
      _
    %40 = vst [vmem:[#allocation2] sm:$0xff] 0.0
    %41 = vst [vmem:[#allocation2 + $0x8] sm:$0xff] 0.0
    loop: start=0, step=1, limit=8
    $region22: #{char_classifier_forward.7} parent=1 // loop_pre_header
      _
    $region23: #{char_classifier_forward.7} parent=1 // loop_header
      %s43 = sphi 0, %s47
      %p44 = scmp.ge.s32.totalorder %s43, 8
    $region24: #{char_classifier_forward.7} parent=1 // loop_header_branch
      %46 = sbr.rel (%p44) target = $region28
    $region25: #{char_classifier_forward.7} parent=1 // loop_body
      %s48 = ssub.s32 7, %s43
      %v49 = vld [vmem:[#allocation2] sm:$0xff]
      %v50 = vld [vmem:[#allocation2 + $0x8] sm:$0xff]
      %v51 = vld [vmem:[#allocation5] sm:$0xff]
      %v52 = vld [vmem:[#allocation5 + $0x8] sm:$0xff]
      %v53 = vld [vmem:[#allocation5 + $0x10] sm:$0xff]
      %v54 = vld [vmem:[#allocation5 + $0x18] sm:$0xff]
      %v55 = vld [vmem:[#allocation5 + $0x20] sm:$0xff]
      %v56 = vld [vmem:[#allocation5 + $0x28] sm:$0xff]
      %v57 = vld [vmem:[#allocation5 + $0x30] sm:$0xff]
      %v58 = vld [vmem:[#allocation5 + $0x38] sm:$0xff]
      %v59 = vld [vmem:[#allocation5 + $0x40] sm:$0xff]
      %v60 = vld [vmem:[#allocation5 + $0x48] sm:$0xff]
      %v61 = vld [vmem:[#allocation5 + $0x50] sm:$0xff]
      %v62 = vld [vmem:[#allocation5 + $0x58] sm:$0xff]
      %v63 = vld [vmem:[#allocation5 + $0x60] sm:$0xff]
      %v64 = vld [vmem:[#allocation5 + $0x68] sm:$0xff]
      %v65 = vld [vmem:[#allocation5 + $0x70] sm:$0xff]
      %v66 = vld [vmem:[#allocation5 + $0x78] sm:$0xff]
      %v67 = vld [vmem:[#allocation5 + $0x80] sm:$0xff]
      %v68 = vld [vmem:[#allocation5 + $0x88] sm:$0xff]
      %v69 = vld [vmem:[#allocation5 + $0x90] sm:$0xff]
      %v70 = vld [vmem:[#allocation5 + $0x98] sm:$0xff]
      %v71 = vld [vmem:[#allocation5 + $0xa0] sm:$0xff]
      %v72 = vld [vmem:[#allocation5 + $0xa8] sm:$0xff]
      %v73 = vld [vmem:[#allocation5 + $0xb0] sm:$0xff]
      %v74 = vld [vmem:[#allocation5 + $0xb8] sm:$0xff]
      %v75 = vld [vmem:[#allocation5 + $0xc0] sm:$0xff]
      %v76 = vld [vmem:[#allocation5 + $0xc8] sm:$0xff]
      %v77 = vld [vmem:[#allocation5 + $0xd0] sm:$0xff]
      %v78 = vld [vmem:[#allocation5 + $0xd8] sm:$0xff]
      %v79 = vld [vmem:[#allocation5 + $0xe0] sm:$0xff]
      %v80 = vld [vmem:[#allocation5 + $0xe8] sm:$0xff]
      %v81 = vld [vmem:[#allocation5 + $0xf0] sm:$0xff]
      %v82 = vld [vmem:[#allocation5 + $0xf8] sm:$0xff]
      %v83 = vld [vmem:[#allocation5 + $0x100] sm:$0xff]
      %v84 = vld [vmem:[#allocation5 + $0x108] sm:$0xff]
      %v85 = vld [vmem:[#allocation5 + $0x110] sm:$0xff]
      %v86 = vld [vmem:[#allocation5 + $0x118] sm:$0xff]
      %v87 = vld [vmem:[#allocation5 + $0x120] sm:$0xff]
      %v88 = vld [vmem:[#allocation5 + $0x128] sm:$0xff]
      %v89 = vld [vmem:[#allocation5 + $0x130] sm:$0xff]
      %v90 = vld [vmem:[#allocation5 + $0x138] sm:$0xff]
      %v91 = vld [vmem:[#allocation5 + $0x140] sm:$0xff]
      %v92 = vld [vmem:[#allocation5 + $0x148] sm:$0xff]
      %v93 = vld [vmem:[#allocation5 + $0x150] sm:$0xff]
      %v94 = vld [vmem:[#allocation5 + $0x158] sm:$0xff]
      %v95 = vld [vmem:[#allocation5 + $0x160] sm:$0xff]
      %v96 = vld [vmem:[#allocation5 + $0x168] sm:$0xff]
      %v97 = vld [vmem:[#allocation5 + $0x170] sm:$0xff]
      %v98 = vld [vmem:[#allocation5 + $0x178] sm:$0xff]
      %v99 = vld [vmem:[#allocation5 + $0x180] sm:$0xff]
      %v100 = vld [vmem:[#allocation5 + $0x188] sm:$0xff]
      %v101 = vld [vmem:[#allocation5 + $0x190] sm:$0xff]
      %v102 = vld [vmem:[#allocation5 + $0x198] sm:$0xff]
      %v103 = vld [vmem:[#allocation5 + $0x1a0] sm:$0xff]
      %v104 = vld [vmem:[#allocation5 + $0x1a8] sm:$0xff]
      %v105 = vld [vmem:[#allocation5 + $0x1b0] sm:$0xff]
      %v106 = vld [vmem:[#allocation5 + $0x1b8] sm:$0xff]
      %v107 = vld [vmem:[#allocation5 + $0x1c0] sm:$0xff]
      %v108 = vld [vmem:[#allocation5 + $0x1c8] sm:$0xff]
      %v109 = vld [vmem:[#allocation5 + $0x1d0] sm:$0xff]
      %v110 = vld [vmem:[#allocation5 + $0x1d8] sm:$0xff]
      %v111 = vld [vmem:[#allocation5 + $0x1e0] sm:$0xff]
      %v112 = vld [vmem:[#allocation5 + $0x1e8] sm:$0xff]
      %v113 = vld [vmem:[#allocation5 + $0x1f0] sm:$0xff]
      %v114 = vld [vmem:[#allocation5 + $0x1f8] sm:$0xff]
      %v115 = vld [vmem:[#allocation5 + $0x200] sm:$0xff]
      %v116 = vld [vmem:[#allocation5 + $0x208] sm:$0xff]
      %v117 = vld [vmem:[#allocation5 + $0x210] sm:$0xff]
      %v118 = vld [vmem:[#allocation5 + $0x218] sm:$0xff]
      %v119 = vld [vmem:[#allocation5 + $0x220] sm:$0xff]
      %v120 = vld [vmem:[#allocation5 + $0x228] sm:$0xff]
      %v121 = vld [vmem:[#allocation5 + $0x230] sm:$0xff]
      %v122 = vld [vmem:[#allocation5 + $0x238] sm:$0xff]
      %v123 = vld [vmem:[#allocation5 + $0x240] sm:$0xff]
      %v124 = vld [vmem:[#allocation5 + $0x248] sm:$0xff]
      %v125 = vld [vmem:[#allocation5 + $0x250] sm:$0xff]
      %v126 = vld [vmem:[#allocation5 + $0x258] sm:$0xff]
      %v127 = vld [vmem:[#allocation5 + $0x260] sm:$0xff]
      %v128 = vld [vmem:[#allocation5 + $0x268] sm:$0xff]
      %v129 = vld [vmem:[#allocation5 + $0x270] sm:$0xff]
      %v130 = vld [vmem:[#allocation5 + $0x278] sm:$0xff]
      %v131 = vld [vmem:[#allocation5 + $0x280] sm:$0xff]
      %v132 = vld [vmem:[#allocation5 + $0x288] sm:$0xff]
      %v133 = vld [vmem:[#allocation5 + $0x290] sm:$0xff]
      %v134 = vld [vmem:[#allocation5 + $0x298] sm:$0xff]
      %v135 = vld [vmem:[#allocation5 + $0x2a0] sm:$0xff]
      %v136 = vld [vmem:[#allocation5 + $0x2a8] sm:$0xff]
      %v137 = vld [vmem:[#allocation5 + $0x2b0] sm:$0xff]
      %v138 = vld [vmem:[#allocation5 + $0x2b8] sm:$0xff]
      %v139 = vld [vmem:[#allocation5 + $0x2c0] sm:$0xff]
      %v140 = vld [vmem:[#allocation5 + $0x2c8] sm:$0xff]
      %v141 = vld [vmem:[#allocation5 + $0x2d0] sm:$0xff]
      %v142 = vld [vmem:[#allocation5 + $0x2d8] sm:$0xff]
      %v143 = vld [vmem:[#allocation5 + $0x2e0] sm:$0xff]
      %v144 = vld [vmem:[#allocation5 + $0x2e8] sm:$0xff]
      %v145 = vld [vmem:[#allocation5 + $0x2f0] sm:$0xff]
      %v146 = vld [vmem:[#allocation5 + $0x2f8] sm:$0xff]
      %v147 = vld [vmem:[#allocation5 + $0x300] sm:$0xff]
      %v148 = vld [vmem:[#allocation5 + $0x308] sm:$0xff]
      %v149 = vld [vmem:[#allocation5 + $0x310] sm:$0xff]
      %v150 = vld [vmem:[#allocation5 + $0x318] sm:$0xff]
      %v151 = vld [vmem:[#allocation5 + $0x320] sm:$0xff]
      %v152 = vld [vmem:[#allocation5 + $0x328] sm:$0xff]
      %v153 = vld [vmem:[#allocation5 + $0x330] sm:$0xff]
      %v154 = vld [vmem:[#allocation5 + $0x338] sm:$0xff]
      %v155 = vld [vmem:[#allocation5 + $0x340] sm:$0xff]
      %v156 = vld [vmem:[#allocation5 + $0x348] sm:$0xff]
      %v157 = vld [vmem:[#allocation5 + $0x350] sm:$0xff]
      %v158 = vld [vmem:[#allocation5 + $0x358] sm:$0xff]
      %v159 = vld [vmem:[#allocation5 + $0x360] sm:$0xff]
      %v160 = vld [vmem:[#allocation5 + $0x368] sm:$0xff]
      %v161 = vld [vmem:[#allocation5 + $0x370] sm:$0xff]
      %v162 = vld [vmem:[#allocation5 + $0x378] sm:$0xff]
      %v163 = vld [vmem:[#allocation5 + $0x380] sm:$0xff]
      %v164 = vld [vmem:[#allocation5 + $0x388] sm:$0xff]
      %v165 = vld [vmem:[#allocation5 + $0x390] sm:$0xff]
      %v166 = vld [vmem:[#allocation5 + $0x398] sm:$0xff]
      %v167 = vld [vmem:[#allocation5 + $0x3a0] sm:$0xff]
      %v168 = vld [vmem:[#allocation5 + $0x3a8] sm:$0xff]
      %v169 = vld [vmem:[#allocation5 + $0x3b0] sm:$0xff]
      %v170 = vld [vmem:[#allocation5 + $0x3b8] sm:$0xff]
      %v171 = vld [vmem:[#allocation5 + $0x3c0] sm:$0xff]
      %v172 = vld [vmem:[#allocation5 + $0x3c8] sm:$0xff]
      %v173 = vld [vmem:[#allocation5 + $0x3d0] sm:$0xff]
      %v174 = vld [vmem:[#allocation5 + $0x3d8] sm:$0xff]
      %v175 = vld [vmem:[#allocation5 + $0x3e0] sm:$0xff]
      %v176 = vld [vmem:[#allocation5 + $0x3e8] sm:$0xff]
      %v177 = vld [vmem:[#allocation5 + $0x3f0] sm:$0xff]
      %v178 = vld [vmem:[#allocation5 + $0x3f8] sm:$0xff]
      %v179 = vld [vmem:[#allocation5 + $0x400] sm:$0xff]
      %v180 = vld [vmem:[#allocation5 + $0x408] sm:$0xff]
      %v181 = vld [vmem:[#allocation5 + $0x410] sm:$0xff]
      %v182 = vld [vmem:[#allocation5 + $0x418] sm:$0xff]
      %v183 = vld [vmem:[#allocation5 + $0x420] sm:$0xff]
      %v184 = vld [vmem:[#allocation5 + $0x428] sm:$0xff]
      %v185 = vld [vmem:[#allocation5 + $0x430] sm:$0xff]
      %v186 = vld [vmem:[#allocation5 + $0x438] sm:$0xff]
      %v187 = vld [vmem:[#allocation5 + $0x440] sm:$0xff]
      %v188 = vld [vmem:[#allocation5 + $0x448] sm:$0xff]
      %v189 = vld [vmem:[#allocation5 + $0x450] sm:$0xff]
      %v190 = vld [vmem:[#allocation5 + $0x458] sm:$0xff]
      %v191 = vld [vmem:[#allocation5 + $0x460] sm:$0xff]
      %v192 = vld [vmem:[#allocation5 + $0x468] sm:$0xff]
      %v193 = vld [vmem:[#allocation5 + $0x470] sm:$0xff]
      %v194 = vld [vmem:[#allocation5 + $0x478] sm:$0xff]
      %v195 = vld [vmem:[#allocation5 + $0x480] sm:$0xff]
      %v196 = vld [vmem:[#allocation5 + $0x488] sm:$0xff]
      %v197 = vld [vmem:[#allocation5 + $0x490] sm:$0xff]
      %v198 = vld [vmem:[#allocation5 + $0x498] sm:$0xff]
      %v199 = vld [vmem:[#allocation5 + $0x4a0] sm:$0xff]
      %v200 = vld [vmem:[#allocation5 + $0x4a8] sm:$0xff]
      %v201 = vld [vmem:[#allocation5 + $0x4b0] sm:$0xff]
      %v202 = vld [vmem:[#allocation5 + $0x4b8] sm:$0xff]
      %v203 = vld [vmem:[#allocation5 + $0x4c0] sm:$0xff]
      %v204 = vld [vmem:[#allocation5 + $0x4c8] sm:$0xff]
      %v205 = vld [vmem:[#allocation5 + $0x4d0] sm:$0xff]
      %v206 = vld [vmem:[#allocation5 + $0x4d8] sm:$0xff]
      %v207 = vld [vmem:[#allocation5 + $0x4e0] sm:$0xff]
      %v208 = vld [vmem:[#allocation5 + $0x4e8] sm:$0xff]
      %v209 = vld [vmem:[#allocation5 + $0x4f0] sm:$0xff]
      %v210 = vld [vmem:[#allocation5 + $0x4f8] sm:$0xff]
      %v211 = vld [vmem:[#allocation5 + $0x500] sm:$0xff]
      %v212 = vld [vmem:[#allocation5 + $0x508] sm:$0xff]
      %v213 = vld [vmem:[#allocation5 + $0x510] sm:$0xff]
      %v214 = vld [vmem:[#allocation5 + $0x518] sm:$0xff]
      %v215 = vld [vmem:[#allocation5 + $0x520] sm:$0xff]
      %v216 = vld [vmem:[#allocation5 + $0x528] sm:$0xff]
      %v217 = vld [vmem:[#allocation5 + $0x530] sm:$0xff]
      %v218 = vld [vmem:[#allocation5 + $0x538] sm:$0xff]
      %v219 = vld [vmem:[#allocation5 + $0x540] sm:$0xff]
      %v220 = vld [vmem:[#allocation5 + $0x548] sm:$0xff]
      %v221 = vld [vmem:[#allocation5 + $0x550] sm:$0xff]
      %v222 = vld [vmem:[#allocation5 + $0x558] sm:$0xff]
      %v223 = vld [vmem:[#allocation5 + $0x560] sm:$0xff]
      %v224 = vld [vmem:[#allocation5 + $0x568] sm:$0xff]
      %v225 = vld [vmem:[#allocation5 + $0x570] sm:$0xff]
      %v226 = vld [vmem:[#allocation5 + $0x578] sm:$0xff]
      %v227 = vld [vmem:[#allocation5 + $0x580] sm:$0xff]
      %v228 = vld [vmem:[#allocation5 + $0x588] sm:$0xff]
      %v229 = vld [vmem:[#allocation5 + $0x590] sm:$0xff]
      %v230 = vld [vmem:[#allocation5 + $0x598] sm:$0xff]
      %v231 = vld [vmem:[#allocation5 + $0x5a0] sm:$0xff]
      %v232 = vld [vmem:[#allocation5 + $0x5a8] sm:$0xff]
      %v233 = vld [vmem:[#allocation5 + $0x5b0] sm:$0xff]
      %v234 = vld [vmem:[#allocation5 + $0x5b8] sm:$0xff]
      %v235 = vld [vmem:[#allocation5 + $0x5c0] sm:$0xff]
      %v236 = vld [vmem:[#allocation5 + $0x5c8] sm:$0xff]
      %v237 = vld [vmem:[#allocation5 + $0x5d0] sm:$0xff]
      %v238 = vld [vmem:[#allocation5 + $0x5d8] sm:$0xff]
      %v239 = vld [vmem:[#allocation5 + $0x5e0] sm:$0xff]
      %v240 = vld [vmem:[#allocation5 + $0x5e8] sm:$0xff]
      %v241 = vld [vmem:[#allocation5 + $0x5f0] sm:$0xff]
      %v242 = vld [vmem:[#allocation5 + $0x5f8] sm:$0xff]
      %v243 = vld [vmem:[%s4] sm:$0x3f]
      %v245 = vlaneseq
      %v246 = vshrl.u32 %v245, 7
      %v247 = vsub.s32 0, %v246
      %v248 = vrot.slane %v243, %v247
      %v249 = vlaneseq
      %v250 = vshrl.u32 %v249, 7
      %v251 = vsub.s32 1, %v250
      %v252 = vrot.slane %v243, %v251
      %v253 = vlaneseq
      %v254 = vshrl.u32 %v253, 7
      %v255 = vsub.s32 2, %v254
      %v256 = vrot.slane %v243, %v255
      %v257 = vlaneseq
      %v258 = vshrl.u32 %v257, 7
      %v259 = vsub.s32 3, %v258
      %v260 = vrot.slane %v243, %v259
      %v261 = vlaneseq
      %v262 = vshrl.u32 %v261, 7
      %v263 = vsub.s32 4, %v262
      %v264 = vrot.slane %v243, %v263
      %v265 = vlaneseq
      %v266 = vshrl.u32 %v265, 7
      %v267 = vsub.s32 5, %v266
      %v268 = vrot.slane %v243, %v267
      %275 = vmatprep.subr.mxu0 %v142
      %276 = vmatpush1.msra.mxu0 %v141
      %277 = vmatprep.subr.mxu0 %v136
      %278 = vmatpush1.msra.mxu0 %v135
      %279 = vmatprep.subr.mxu0 %v130
      %280 = vmatpush1.msra.mxu0 %v129
      %281 = vmatprep.subr.mxu0 %v124
      %282 = vmatpush1.msra.mxu0 %v123
      %283 = vmatprep.subr.mxu0 %v118
      %284 = vmatpush1.msra.mxu0 %v117
      %285 = vmatprep.subr.mxu0 %v112
      %286 = vmatpush1.msra.mxu0 %v111
      %287 = vmatprep.subr.mxu0 %v106
      %288 = vmatpush1.msra.mxu0 %v105
      %289 = vmatprep.subr.mxu0 %v100
      %290 = vmatpush1.msra.mxu0 %v99
      %291 = vmatprep.subr.mxu0 %v94
      %292 = vmatpush1.msra.mxu0 %v93
      %293 = vmatprep.subr.mxu0 %v88
      %294 = vmatpush1.msra.mxu0 %v87
      %295 = vmatprep.subr.mxu0 %v82
      %296 = vmatpush1.msra.mxu0 %v81
      %297 = vmatprep.subr.mxu0 %v76
      %298 = vmatpush1.msra.mxu0 %v75
      %299 = vmatprep.subr.mxu0 %v70
      %300 = vmatpush1.msra.mxu0 %v69
      %301 = vmatprep.subr.mxu0 %v64
      %302 = vmatpush1.msra.mxu0 %v63
      %303 = vmatprep.subr.mxu0 %v58
      %304 = vmatpush1.msra.mxu0 %v57
      %305 = vmatprep.subr.mxu0 %v52
      %306 = vmatpush1.msra.mxu0 %v51
      %307 = vmatprep.subr.mxu0 %v238
      %308 = vmatpush2.msra.mxu0 %v237
      %309 = vmatprep.subr.mxu0 %v232
      %310 = vmatpush2.msra.mxu0 %v231
      %311 = vmatprep.subr.mxu0 %v226
      %312 = vmatpush2.msra.mxu0 %v225
      %313 = vmatprep.subr.mxu0 %v220
      %314 = vmatpush2.msra.mxu0 %v219
      %315 = vmatprep.subr.mxu0 %v214
      %316 = vmatpush2.msra.mxu0 %v213
      %317 = vmatprep.subr.mxu0 %v208
      %318 = vmatpush2.msra.mxu0 %v207
      %319 = vmatprep.subr.mxu0 %v202
      %320 = vmatpush2.msra.mxu0 %v201
      %321 = vmatprep.subr.mxu0 %v196
      %322 = vmatpush2.msra.mxu0 %v195
      %323 = vmatprep.subr.mxu0 %v190
      %324 = vmatpush2.msra.mxu0 %v189
      %325 = vmatprep.subr.mxu0 %v184
      %326 = vmatpush2.msra.mxu0 %v183
      %327 = vmatprep.subr.mxu0 %v178
      %328 = vmatpush2.msra.mxu0 %v177
      %329 = vmatprep.subr.mxu0 %v172
      %330 = vmatpush2.msra.mxu0 %v171
      %331 = vmatprep.subr.mxu0 %v166
      %332 = vmatpush2.msra.mxu0 %v165
      %333 = vmatprep.subr.mxu0 %v160
      %334 = vmatpush2.msra.mxu0 %v159
      %335 = vmatprep.subr.mxu0 %v154
      %336 = vmatpush2.msra.mxu0 %v153
      %337 = vmatprep.subr.mxu0 %v148
      %338 = vmatpush2.msra.mxu0 %v147
      %339 = vmatprep.mubr.f32.mxu0 %v50
      %340 = vmatmul.mubr.f32.gmra.mxu0 %v49
      %v341 = vpop.f32.mrf.mxu0
      %v342 = vadd.f32 %v248, %v341
      %v343 = vpop.f32.mrf.mxu0
      %v344 = vadd.f32 %v252, %v343
      %345 = vdwg.mxu0
      %346 = vmatprep.subr.mxu0 %v144
      %347 = vmatpush1.msra.mxu0 %v143
      %348 = vmatprep.subr.mxu0 %v138
      %349 = vmatpush1.msra.mxu0 %v137
      %350 = vmatprep.subr.mxu0 %v132
      %351 = vmatpush1.msra.mxu0 %v131
      %352 = vmatprep.subr.mxu0 %v126
      %353 = vmatpush1.msra.mxu0 %v125
      %354 = vmatprep.subr.mxu0 %v120
      %355 = vmatpush1.msra.mxu0 %v119
      %356 = vmatprep.subr.mxu0 %v114
      %357 = vmatpush1.msra.mxu0 %v113
      %358 = vmatprep.subr.mxu0 %v108
      %359 = vmatpush1.msra.mxu0 %v107
      %360 = vmatprep.subr.mxu0 %v102
      %361 = vmatpush1.msra.mxu0 %v101
      %362 = vmatprep.subr.mxu0 %v96
      %363 = vmatpush1.msra.mxu0 %v95
      %364 = vmatprep.subr.mxu0 %v90
      %365 = vmatpush1.msra.mxu0 %v89
      %366 = vmatprep.subr.mxu0 %v84
      %367 = vmatpush1.msra.mxu0 %v83
      %368 = vmatprep.subr.mxu0 %v78
      %369 = vmatpush1.msra.mxu0 %v77
      %370 = vmatprep.subr.mxu0 %v72
      %371 = vmatpush1.msra.mxu0 %v71
      %372 = vmatprep.subr.mxu0 %v66
      %373 = vmatpush1.msra.mxu0 %v65
      %374 = vmatprep.subr.mxu0 %v60
      %375 = vmatpush1.msra.mxu0 %v59
      %376 = vmatprep.subr.mxu0 %v54
      %377 = vmatpush1.msra.mxu0 %v53
      %378 = vmatprep.subr.mxu0 %v240
      %379 = vmatpush2.msra.mxu0 %v239
      %380 = vmatprep.subr.mxu0 %v234
      %381 = vmatpush2.msra.mxu0 %v233
      %382 = vmatprep.subr.mxu0 %v228
      %383 = vmatpush2.msra.mxu0 %v227
      %384 = vmatprep.subr.mxu0 %v222
      %385 = vmatpush2.msra.mxu0 %v221
      %386 = vmatprep.subr.mxu0 %v216
      %387 = vmatpush2.msra.mxu0 %v215
      %388 = vmatprep.subr.mxu0 %v210
      %389 = vmatpush2.msra.mxu0 %v209
      %390 = vmatprep.subr.mxu0 %v204
      %391 = vmatpush2.msra.mxu0 %v203
      %392 = vmatprep.subr.mxu0 %v198
      %393 = vmatpush2.msra.mxu0 %v197
      %394 = vmatprep.subr.mxu0 %v192
      %395 = vmatpush2.msra.mxu0 %v191
      %396 = vmatprep.subr.mxu0 %v186
      %397 = vmatpush2.msra.mxu0 %v185
      %398 = vmatprep.subr.mxu0 %v180
      %399 = vmatpush2.msra.mxu0 %v179
      %400 = vmatprep.subr.mxu0 %v174
      %401 = vmatpush2.msra.mxu0 %v173
      %402 = vmatprep.subr.mxu0 %v168
      %403 = vmatpush2.msra.mxu0 %v167
      %404 = vmatprep.subr.mxu0 %v162
      %405 = vmatpush2.msra.mxu0 %v161
      %406 = vmatprep.subr.mxu0 %v156
      %407 = vmatpush2.msra.mxu0 %v155
      %408 = vmatprep.subr.mxu0 %v150
      %409 = vmatpush2.msra.mxu0 %v149
      %410 = vmatprep.mubr.f32.mxu0 %v50
      %411 = vmatmul.mubr.f32.gmra.mxu0 %v49
      %v412 = vpop.f32.mrf.mxu0
      %v413 = vadd.f32 %v256, %v412
      %v414 = vpop.f32.mrf.mxu0
      %v415 = vadd.f32 %v260, %v414
      %416 = vdwg.mxu0
      %417 = vmatprep.subr.mxu0 %v146
      %418 = vmatpush1.msra.mxu0 %v145
      %419 = vmatprep.subr.mxu0 %v140
      %420 = vmatpush1.msra.mxu0 %v139
      %421 = vmatprep.subr.mxu0 %v134
      %422 = vmatpush1.msra.mxu0 %v133
      %423 = vmatprep.subr.mxu0 %v128
      %424 = vmatpush1.msra.mxu0 %v127
      %425 = vmatprep.subr.mxu0 %v122
      %426 = vmatpush1.msra.mxu0 %v121
      %427 = vmatprep.subr.mxu0 %v116
      %428 = vmatpush1.msra.mxu0 %v115
      %429 = vmatprep.subr.mxu0 %v110
      %430 = vmatpush1.msra.mxu0 %v109
      %431 = vmatprep.subr.mxu0 %v104
      %432 = vmatpush1.msra.mxu0 %v103
      %433 = vmatprep.subr.mxu0 %v98
      %434 = vmatpush1.msra.mxu0 %v97
      %435 = vmatprep.subr.mxu0 %v92
      %436 = vmatpush1.msra.mxu0 %v91
      %437 = vmatprep.subr.mxu0 %v86
      %438 = vmatpush1.msra.mxu0 %v85
      %439 = vmatprep.subr.mxu0 %v80
      %440 = vmatpush1.msra.mxu0 %v79
      %441 = vmatprep.subr.mxu0 %v74
      %442 = vmatpush1.msra.mxu0 %v73
      %443 = vmatprep.subr.mxu0 %v68
      %444 = vmatpush1.msra.mxu0 %v67
      %445 = vmatprep.subr.mxu0 %v62
      %446 = vmatpush1.msra.mxu0 %v61
      %447 = vmatprep.subr.mxu0 %v56
      %448 = vmatpush1.msra.mxu0 %v55
      %449 = vmatprep.subr.mxu0 %v242
      %450 = vmatpush2.msra.mxu0 %v241
      %451 = vmatprep.subr.mxu0 %v236
      %452 = vmatpush2.msra.mxu0 %v235
      %453 = vmatprep.subr.mxu0 %v230
      %454 = vmatpush2.msra.mxu0 %v229
      %455 = vmatprep.subr.mxu0 %v224
      %456 = vmatpush2.msra.mxu0 %v223
      %457 = vmatprep.subr.mxu0 %v218
      %458 = vmatpush2.msra.mxu0 %v217
      %459 = vmatprep.subr.mxu0 %v212
      %460 = vmatpush2.msra.mxu0 %v211
      %461 = vmatprep.subr.mxu0 %v206
      %462 = vmatpush2.msra.mxu0 %v205
      %463 = vmatprep.subr.mxu0 %v200
      %464 = vmatpush2.msra.mxu0 %v199
      %465 = vmatprep.subr.mxu0 %v194
      %466 = vmatpush2.msra.mxu0 %v193
      %467 = vmatprep.subr.mxu0 %v188
      %468 = vmatpush2.msra.mxu0 %v187
      %469 = vmatprep.subr.mxu0 %v182
      %470 = vmatpush2.msra.mxu0 %v181
      %471 = vmatprep.subr.mxu0 %v176
      %472 = vmatpush2.msra.mxu0 %v175
      %473 = vmatprep.subr.mxu0 %v170
      %474 = vmatpush2.msra.mxu0 %v169
      %475 = vmatprep.subr.mxu0 %v164
      %476 = vmatpush2.msra.mxu0 %v163
      %477 = vmatprep.subr.mxu0 %v158
      %478 = vmatpush2.msra.mxu0 %v157
      %479 = vmatprep.subr.mxu0 %v152
      %480 = vmatpush2.msra.mxu0 %v151
      %481 = vmatprep.mubr.f32.mxu0 %v50
      %482 = vmatmul.mubr.f32.gmra.mxu0 %v49
      %v483 = vpop.f32.mrf.mxu0
      %v484 = vadd.f32 %v264, %v483
      %v485 = vpop.f32.mrf.mxu0
      %v486 = vadd.f32 %v268, %v485
      %487 = vdwg.mxu0
      %s488 = smul.u32 %s43, 3
      %s489 = smul.addr %s488, 8
      %s490 = scalar_lea.vmem %s1, %s489
      %v491 = vld [vmem:[%s490] sm:$0xff]
      %v492 = vld [vmem:[%s490 + $0x8] sm:$0xff]
      %v493 = vld [vmem:[%s490 + $0x10] sm:$0xff]
      %v494 = vadd.f32 %v491, %v342
      %v495 = vxor.u32 %v494, 2147483648
      %v496 = vmul.f32 %v495, 1.442695
      %v497 = vpow.pop %v496
      %v498 = vadd.f32 %v497, 1.0
      %v499 = vrcp.pop %v498
      %v500 = vmul.f32 1.0, %v499
      %v501 = vadd.f32 %v492, %v344
      %v502 = vxor.u32 %v501, 2147483648
      %v503 = vmul.f32 %v502, 1.442695
      %v504 = vpow.pop %v503
      %v505 = vadd.f32 %v504, 1.0
      %v506 = vrcp.pop %v505
      %v507 = vmul.f32 1.0, %v506
      %v508 = vmul.f32 %v500, %v413
      %v509 = vadd.f32 %v493, %v508
      %v510 = vtanh.pop %v509
      %v511 = vsub.f32 1.0, %v507
      %v512 = vmul.f32 %v511, %v510
      %v513 = vmul.f32 %v507, %v49
      %v514 = vadd.f32 %v512, %v513
      %s515 = smul.u32 %s48, 3
      %s516 = smul.addr %s515, 8
      %s517 = scalar_lea.vmem %s2, %s516
      %v518 = vld [vmem:[%s517] sm:$0xff]
      %v519 = vld [vmem:[%s517 + $0x8] sm:$0xff]
      %v520 = vld [vmem:[%s517 + $0x10] sm:$0xff]
      %v521 = vadd.f32 %v518, %v415
      %v522 = vxor.u32 %v521, 2147483648
      %v523 = vmul.f32 %v522, 1.442695
      %v524 = vpow.pop %v523
      %v525 = vadd.f32 %v524, 1.0
      %v526 = vrcp.pop %v525
      %v527 = vmul.f32 1.0, %v526
      %v528 = vadd.f32 %v519, %v484
      %v529 = vxor.u32 %v528, 2147483648
      %v530 = vmul.f32 %v529, 1.442695
      %v531 = vpow.pop %v530
      %v532 = vadd.f32 %v531, 1.0
      %v533 = vrcp.pop %v532
      %v534 = vmul.f32 1.0, %v533
      %v535 = vmul.f32 %v527, %v486
      %v536 = vadd.f32 %v520, %v535
      %v537 = vtanh.pop %v536
      %v538 = vsub.f32 1.0, %v534
      %v539 = vmul.f32 %v538, %v537
      %v540 = vmul.f32 %v534, %v50
      %v541 = vadd.f32 %v539, %v540
      %v542 = vlaneseq
      %v543 = vshrl.u32 %v542, 7
      %s544 = sld [smem:[#allocation4 + %s43]]
      %v545 = vstv %s544
      %vm546 = vcmp.lt.s32.totalorder %v543, %v545
      %v547 = vsel %vm546, %v514, %v49
      %s548 = sld [smem:[#allocation4 + %s48]]
      %v549 = vstv %s548
      %vm550 = vcmp.lt.s32.totalorder %v543, %v549
      %v551 = vsel %vm550, %v541, %v50
      %552 = vst [vmem:[#allocation2] sm:$0xff] %v547
      %553 = vst [vmem:[#allocation2 + $0x8] sm:$0xff] %v551
      %s554 = smul.u32 %s43, 8
      %s555 = scalar_lea.vmem %s5, %s554
      %556 = vst [vmem:[%s555] sm:$0xff] %v547
      %s557 = smul.u32 %s48, 8
      %s558 = scalar_lea.vmem %s6, %s557
      %559 = vst [vmem:[%s558] sm:$0xff] %v551
    $region26: #{char_classifier_forward.7} parent=1 // loop_footer
      %s47 = sadd.s32 1, %s43
    $region27: #{char_classifier_forward.7} parent=1 // loop_footer_branch
      %42 = sbr.rel target = $region23
    $region28: #{char_classifier_forward.7} parent=1 // loop_exit
      _
    // Predicated region
    $region29: #{char_classifier_forward.7} parent=1 // pred_check
      _
    $region30: #{char_classifier_forward.7} parent=1 // pred_check_branch
      %561 = sbr.rel (0) target = $region32
    $region31: #{char_classifier_forward.7} parent=1 // pred_region
      _
    $region32: #{char_classifier_forward.7} parent=1 // pred_fallthru
      _
    // Predicated region
    $region33: #{char_classifier_forward.7} parent=1 // pred_check
      _
    $region34: #{char_classifier_forward.7} parent=1 // pred_check_branch
      %563 = sbr.rel (0) target = $region36
    $region35: #{char_classifier_forward.7} parent=1 // pred_region
      _
    $region36: #{char_classifier_forward.7} parent=1 // pred_fallthru
      _
    // Predicated region
    $region37: #{char_classifier_forward.7} parent=1 // pred_check
      _
    $region38: #{char_classifier_forward.7} parent=1 // pred_check_branch
      %565 = sbr.rel (0) target = $region40
    $region39: #{char_classifier_forward.7} parent=1 // pred_region
      _
    $region40: #{char_classifier_forward.7} parent=1 // pred_fallthru
      _
    // Predicated region
    $region41: #{char_classifier_forward.7} parent=1 // pred_check
      _
    $region42: #{char_classifier_forward.7} parent=1 // pred_check_branch
      %567 = sbr.rel (0) target = $region44
    $region43: #{char_classifier_forward.7} parent=1 // pred_region
      _
    $region44: #{char_classifier_forward.7} parent=1 // pred_fallthru
      _
    %568 = vsyncpa [#allocation6], 1

// kernel: char_classifier_forward.9
$region0: #{char_classifier_forward.9}
  #allocation0 [shape = 'u32[]', space=smem, size = 0x4, offset = 0x4, fixed_abs, tag = 'smem constant byte address 0x4 - core index']
  #allocation1 [shape = 'u32[144,128]{1,0:T(1,128)}', space=vmem, size = 0x12000, scoped, tag = 'internal scratch']
  #allocation2 [shape = 'f32[8,256]{1,0:T(8,128)}', space=vmem, size = 0x2000, scoped, tag = 'scratch operand']
  #allocation3 [shape = 's32[1]{0}', space=sflag, size = 0x4, scoped, tag = 'scoped memory for char_classifier_forward.9']
  #allocation4 [shape = 'u8[512]{0}', space=smem, size = 0x200, scoped, tag = 'prefetched SMEM operand 0']
  %s0 = inlined_call_operand.vmem [shape: s32[8], index: 0, kind: input, shape index: {}]
  %s1 = inlined_call_operand.vmem [shape: f32[8,8,384], index: 1, kind: input, shape index: {}]
  %s2 = inlined_call_operand.vmem [shape: f32[8,8,384], index: 2, kind: input, shape index: {}]
  %s3 = inlined_call_operand.vmem [shape: f32[256,768], index: 3, kind: input, shape index: {}]
  %s4 = inlined_call_operand.vmem [shape: f32[1,768], index: 4, kind: input, shape index: {}]
  %s5 = inlined_call_operand.vmem [shape: f32[8,8,128], index: 5, kind: output, shape index: {0}]
  %s6 = inlined_call_operand.vmem [shape: f32[8,8,128], index: 6, kind: output, shape index: {1}]
  %7 = xla_tuple %s5, %s6
  %s8 = sld [smem:[#allocation0]]
  $region41: #{char_classifier_forward.9} parent=0
    _
  %s10 = ssub.s32 1, %s8
  %s11 = scalar_select 0, %s10, %s8
  %s12 = sshll.u32 %s0, 4
  %s13 = int_to_ptr.vmem [resolvable:$true] %s12
  %15 = dma.vmem_to_smem %s13, 16, [#allocation4], [#allocation3]
  %16 = dma.done [#allocation3], 16
  %17 = sfence
  // Predicated region
  $region2: #{char_classifier_forward.9} parent=0 // pred_check
    _
  $region3: #{char_classifier_forward.9} parent=0 // pred_check_branch
    %19 = sbr.rel (0) target = $region5
  $region4: #{char_classifier_forward.9} parent=0 // pred_region
    _
  $region5: #{char_classifier_forward.9} parent=0 // pred_fallthru
    _
  // Predicated region
  $region6: #{char_classifier_forward.9} parent=0 // pred_check
    _
  $region7: #{char_classifier_forward.9} parent=0 // pred_check_branch
    %21 = sbr.rel (0) target = $region9
  $region8: #{char_classifier_forward.9} parent=0 // pred_region
    _
  $region9: #{char_classifier_forward.9} parent=0 // pred_fallthru
    _
  // Predicated region
  $region10: #{char_classifier_forward.9} parent=0 // pred_check
    _
  $region11: #{char_classifier_forward.9} parent=0 // pred_check_branch
    %23 = sbr.rel (0) target = $region13
  $region12: #{char_classifier_forward.9} parent=0 // pred_region
    _
  $region13: #{char_classifier_forward.9} parent=0 // pred_fallthru
    _
  // Predicated region
  $region14: #{char_classifier_forward.9} parent=0 // pred_check
    _
  $region15: #{char_classifier_forward.9} parent=0 // pred_check_branch
    %25 = sbr.rel (0) target = $region17
  $region16: #{char_classifier_forward.9} parent=0 // pred_region
    _
  $region17: #{char_classifier_forward.9} parent=0 // pred_fallthru
    _
  %26 = vst [vmem:[#allocation2] sm:$0xff] 0.0
  %27 = vst [vmem:[#allocation2 + $0x8] sm:$0xff] 0.0
  loop: start=0, step=1, limit=8
  $region18: #{char_classifier_forward.9} parent=0 // loop_pre_header
    _
  $region19: #{char_classifier_forward.9} parent=0 // loop_header
    %s29 = sphi 0, %s33
    %p30 = scmp.ge.s32.totalorder %s29, 8
  $region20: #{char_classifier_forward.9} parent=0 // loop_header_branch
    %32 = sbr.rel (%p30) target = $region24
  $region21: #{char_classifier_forward.9} parent=0 // loop_body
    %s34 = ssub.s32 7, %s29
    %v35 = vld [vmem:[#allocation2] sm:$0xff]
    %v36 = vld [vmem:[#allocation2 + $0x8] sm:$0xff]
    %v37 = vld [vmem:[%s3] sm:$0xff]
    %v38 = vld [vmem:[%s3 + $0x8] sm:$0xff]
    %v39 = vld [vmem:[%s3 + $0x10] sm:$0xff]
    %v40 = vld [vmem:[%s3 + $0x18] sm:$0xff]
    %v41 = vld [vmem:[%s3 + $0x20] sm:$0xff]
    %v42 = vld [vmem:[%s3 + $0x28] sm:$0xff]
    %v43 = vld [vmem:[%s3 + $0x30] sm:$0xff]
    %v44 = vld [vmem:[%s3 + $0x38] sm:$0xff]
    %v45 = vld [vmem:[%s3 + $0x40] sm:$0xff]
    %v46 = vld [vmem:[%s3 + $0x48] sm:$0xff]
    %v47 = vld [vmem:[%s3 + $0x50] sm:$0xff]
    %v48 = vld [vmem:[%s3 + $0x58] sm:$0xff]
    %v49 = vld [vmem:[%s3 + $0x60] sm:$0xff]
    %v50 = vld [vmem:[%s3 + $0x68] sm:$0xff]
    %v51 = vld [vmem:[%s3 + $0x70] sm:$0xff]
    %v52 = vld [vmem:[%s3 + $0x78] sm:$0xff]
    %v53 = vld [vmem:[%s3 + $0x80] sm:$0xff]
    %v54 = vld [vmem:[%s3 + $0x88] sm:$0xff]
    %v55 = vld [vmem:[%s3 + $0x90] sm:$0xff]
    %v56 = vld [vmem:[%s3 + $0x98] sm:$0xff]
    %v57 = vld [vmem:[%s3 + $0xa0] sm:$0xff]
    %v58 = vld [vmem:[%s3 + $0xa8] sm:$0xff]
    %v59 = vld [vmem:[%s3 + $0xb0] sm:$0xff]
    %v60 = vld [vmem:[%s3 + $0xb8] sm:$0xff]
    %v61 = vld [vmem:[%s3 + $0xc0] sm:$0xff]
    %v62 = vld [vmem:[%s3 + $0xc8] sm:$0xff]
    %v63 = vld [vmem:[%s3 + $0xd0] sm:$0xff]
    %v64 = vld [vmem:[%s3 + $0xd8] sm:$0xff]
    %v65 = vld [vmem:[%s3 + $0xe0] sm:$0xff]
    %v66 = vld [vmem:[%s3 + $0xe8] sm:$0xff]
    %v67 = vld [vmem:[%s3 + $0xf0] sm:$0xff]
    %v68 = vld [vmem:[%s3 + $0xf8] sm:$0xff]
    %v69 = vld [vmem:[%s3 + $0x100] sm:$0xff]
    %v70 = vld [vmem:[%s3 + $0x108] sm:$0xff]
    %v71 = vld [vmem:[%s3 + $0x110] sm:$0xff]
    %v72 = vld [vmem:[%s3 + $0x118] sm:$0xff]
    %v73 = vld [vmem:[%s3 + $0x120] sm:$0xff]
    %v74 = vld [vmem:[%s3 + $0x128] sm:$0xff]
    %v75 = vld [vmem:[%s3 + $0x130] sm:$0xff]
    %v76 = vld [vmem:[%s3 + $0x138] sm:$0xff]
    %v77 = vld [vmem:[%s3 + $0x140] sm:$0xff]
    %v78 = vld [vmem:[%s3 + $0x148] sm:$0xff]
    %v79 = vld [vmem:[%s3 + $0x150] sm:$0xff]
    %v80 = vld [vmem:[%s3 + $0x158] sm:$0xff]
    %v81 = vld [vmem:[%s3 + $0x160] sm:$0xff]
    %v82 = vld [vmem:[%s3 + $0x168] sm:$0xff]
    %v83 = vld [vmem:[%s3 + $0x170] sm:$0xff]
    %v84 = vld [vmem:[%s3 + $0x178] sm:$0xff]
    %v85 = vld [vmem:[%s3 + $0x180] sm:$0xff]
    %v86 = vld [vmem:[%s3 + $0x188] sm:$0xff]
    %v87 = vld [vmem:[%s3 + $0x190] sm:$0xff]
    %v88 = vld [vmem:[%s3 + $0x198] sm:$0xff]
    %v89 = vld [vmem:[%s3 + $0x1a0] sm:$0xff]
    %v90 = vld [vmem:[%s3 + $0x1a8] sm:$0xff]
    %v91 = vld [vmem:[%s3 + $0x1b0] sm:$0xff]
    %v92 = vld [vmem:[%s3 + $0x1b8] sm:$0xff]
    %v93 = vld [vmem:[%s3 + $0x1c0] sm:$0xff]
    %v94 = vld [vmem:[%s3 + $0x1c8] sm:$0xff]
    %v95 = vld [vmem:[%s3 + $0x1d0] sm:$0xff]
    %v96 = vld [vmem:[%s3 + $0x1d8] sm:$0xff]
    %v97 = vld [vmem:[%s3 + $0x1e0] sm:$0xff]
    %v98 = vld [vmem:[%s3 + $0x1e8] sm:$0xff]
    %v99 = vld [vmem:[%s3 + $0x1f0] sm:$0xff]
    %v100 = vld [vmem:[%s3 + $0x1f8] sm:$0xff]
    %v101 = vld [vmem:[%s3 + $0x200] sm:$0xff]
    %v102 = vld [vmem:[%s3 + $0x208] sm:$0xff]
    %v103 = vld [vmem:[%s3 + $0x210] sm:$0xff]
    %v104 = vld [vmem:[%s3 + $0x218] sm:$0xff]
    %v105 = vld [vmem:[%s3 + $0x220] sm:$0xff]
    %v106 = vld [vmem:[%s3 + $0x228] sm:$0xff]
    %v107 = vld [vmem:[%s3 + $0x230] sm:$0xff]
    %v108 = vld [vmem:[%s3 + $0x238] sm:$0xff]
    %v109 = vld [vmem:[%s3 + $0x240] sm:$0xff]
    %v110 = vld [vmem:[%s3 + $0x248] sm:$0xff]
    %v111 = vld [vmem:[%s3 + $0x250] sm:$0xff]
    %v112 = vld [vmem:[%s3 + $0x258] sm:$0xff]
    %v113 = vld [vmem:[%s3 + $0x260] sm:$0xff]
    %v114 = vld [vmem:[%s3 + $0x268] sm:$0xff]
    %v115 = vld [vmem:[%s3 + $0x270] sm:$0xff]
    %v116 = vld [vmem:[%s3 + $0x278] sm:$0xff]
    %v117 = vld [vmem:[%s3 + $0x280] sm:$0xff]
    %v118 = vld [vmem:[%s3 + $0x288] sm:$0xff]
    %v119 = vld [vmem:[%s3 + $0x290] sm:$0xff]
    %v120 = vld [vmem:[%s3 + $0x298] sm:$0xff]
    %v121 = vld [vmem:[%s3 + $0x2a0] sm:$0xff]
    %v122 = vld [vmem:[%s3 + $0x2a8] sm:$0xff]
    %v123 = vld [vmem:[%s3 + $0x2b0] sm:$0xff]
    %v124 = vld [vmem:[%s3 + $0x2b8] sm:$0xff]
    %v125 = vld [vmem:[%s3 + $0x2c0] sm:$0xff]
    %v126 = vld [vmem:[%s3 + $0x2c8] sm:$0xff]
    %v127 = vld [vmem:[%s3 + $0x2d0] sm:$0xff]
    %v128 = vld [vmem:[%s3 + $0x2d8] sm:$0xff]
    %v129 = vld [vmem:[%s3 + $0x2e0] sm:$0xff]
    %v130 = vld [vmem:[%s3 + $0x2e8] sm:$0xff]
    %v131 = vld [vmem:[%s3 + $0x2f0] sm:$0xff]
    %v132 = vld [vmem:[%s3 + $0x2f8] sm:$0xff]
    %v133 = vld [vmem:[%s3 + $0x300] sm:$0xff]
    %v134 = vld [vmem:[%s3 + $0x308] sm:$0xff]
    %v135 = vld [vmem:[%s3 + $0x310] sm:$0xff]
    %v136 = vld [vmem:[%s3 + $0x318] sm:$0xff]
    %v137 = vld [vmem:[%s3 + $0x320] sm:$0xff]
    %v138 = vld [vmem:[%s3 + $0x328] sm:$0xff]
    %v139 = vld [vmem:[%s3 + $0x330] sm:$0xff]
    %v140 = vld [vmem:[%s3 + $0x338] sm:$0xff]
    %v141 = vld [vmem:[%s3 + $0x340] sm:$0xff]
    %v142 = vld [vmem:[%s3 + $0x348] sm:$0xff]
    %v143 = vld [vmem:[%s3 + $0x350] sm:$0xff]
    %v144 = vld [vmem:[%s3 + $0x358] sm:$0xff]
    %v145 = vld [vmem:[%s3 + $0x360] sm:$0xff]
    %v146 = vld [vmem:[%s3 + $0x368] sm:$0xff]
    %v147 = vld [vmem:[%s3 + $0x370] sm:$0xff]
    %v148 = vld [vmem:[%s3 + $0x378] sm:$0xff]
    %v149 = vld [vmem:[%s3 + $0x380] sm:$0xff]
    %v150 = vld [vmem:[%s3 + $0x388] sm:$0xff]
    %v151 = vld [vmem:[%s3 + $0x390] sm:$0xff]
    %v152 = vld [vmem:[%s3 + $0x398] sm:$0xff]
    %v153 = vld [vmem:[%s3 + $0x3a0] sm:$0xff]
    %v154 = vld [vmem:[%s3 + $0x3a8] sm:$0xff]
    %v155 = vld [vmem:[%s3 + $0x3b0] sm:$0xff]
    %v156 = vld [vmem:[%s3 + $0x3b8] sm:$0xff]
    %v157 = vld [vmem:[%s3 + $0x3c0] sm:$0xff]
    %v158 = vld [vmem:[%s3 + $0x3c8] sm:$0xff]
    %v159 = vld [vmem:[%s3 + $0x3d0] sm:$0xff]
    %v160 = vld [vmem:[%s3 + $0x3d8] sm:$0xff]
    %v161 = vld [vmem:[%s3 + $0x3e0] sm:$0xff]
    %v162 = vld [vmem:[%s3 + $0x3e8] sm:$0xff]
    %v163 = vld [vmem:[%s3 + $0x3f0] sm:$0xff]
    %v164 = vld [vmem:[%s3 + $0x3f8] sm:$0xff]
    %v165 = vld [vmem:[%s3 + $0x400] sm:$0xff]
    %v166 = vld [vmem:[%s3 + $0x408] sm:$0xff]
    %v167 = vld [vmem:[%s3 + $0x410] sm:$0xff]
    %v168 = vld [vmem:[%s3 + $0x418] sm:$0xff]
    %v169 = vld [vmem:[%s3 + $0x420] sm:$0xff]
    %v170 = vld [vmem:[%s3 + $0x428] sm:$0xff]
    %v171 = vld [vmem:[%s3 + $0x430] sm:$0xff]
    %v172 = vld [vmem:[%s3 + $0x438] sm:$0xff]
    %v173 = vld [vmem:[%s3 + $0x440] sm:$0xff]
    %v174 = vld [vmem:[%s3 + $0x448] sm:$0xff]
    %v175 = vld [vmem:[%s3 + $0x450] sm:$0xff]
    %v176 = vld [vmem:[%s3 + $0x458] sm:$0xff]
    %v177 = vld [vmem:[%s3 + $0x460] sm:$0xff]
    %v178 = vld [vmem:[%s3 + $0x468] sm:$0xff]
    %v179 = vld [vmem:[%s3 + $0x470] sm:$0xff]
    %v180 = vld [vmem:[%s3 + $0x478] sm:$0xff]
    %v181 = vld [vmem:[%s3 + $0x480] sm:$0xff]
    %v182 = vld [vmem:[%s3 + $0x488] sm:$0xff]
    %v183 = vld [vmem:[%s3 + $0x490] sm:$0xff]
    %v184 = vld [vmem:[%s3 + $0x498] sm:$0xff]
    %v185 = vld [vmem:[%s3 + $0x4a0] sm:$0xff]
    %v186 = vld [vmem:[%s3 + $0x4a8] sm:$0xff]
    %v187 = vld [vmem:[%s3 + $0x4b0] sm:$0xff]
    %v188 = vld [vmem:[%s3 + $0x4b8] sm:$0xff]
    %v189 = vld [vmem:[%s3 + $0x4c0] sm:$0xff]
    %v190 = vld [vmem:[%s3 + $0x4c8] sm:$0xff]
    %v191 = vld [vmem:[%s3 + $0x4d0] sm:$0xff]
    %v192 = vld [vmem:[%s3 + $0x4d8] sm:$0xff]
    %v193 = vld [vmem:[%s3 + $0x4e0] sm:$0xff]
    %v194 = vld [vmem:[%s3 + $0x4e8] sm:$0xff]
    %v195 = vld [vmem:[%s3 + $0x4f0] sm:$0xff]
    %v196 = vld [vmem:[%s3 + $0x4f8] sm:$0xff]
    %v197 = vld [vmem:[%s3 + $0x500] sm:$0xff]
    %v198 = vld [vmem:[%s3 + $0x508] sm:$0xff]
    %v199 = vld [vmem:[%s3 + $0x510] sm:$0xff]
    %v200 = vld [vmem:[%s3 + $0x518] sm:$0xff]
    %v201 = vld [vmem:[%s3 + $0x520] sm:$0xff]
    %v202 = vld [vmem:[%s3 + $0x528] sm:$0xff]
    %v203 = vld [vmem:[%s3 + $0x530] sm:$0xff]
    %v204 = vld [vmem:[%s3 + $0x538] sm:$0xff]
    %v205 = vld [vmem:[%s3 + $0x540] sm:$0xff]
    %v206 = vld [vmem:[%s3 + $0x548] sm:$0xff]
    %v207 = vld [vmem:[%s3 + $0x550] sm:$0xff]
    %v208 = vld [vmem:[%s3 + $0x558] sm:$0xff]
    %v209 = vld [vmem:[%s3 + $0x560] sm:$0xff]
    %v210 = vld [vmem:[%s3 + $0x568] sm:$0xff]
    %v211 = vld [vmem:[%s3 + $0x570] sm:$0xff]
    %v212 = vld [vmem:[%s3 + $0x578] sm:$0xff]
    %v213 = vld [vmem:[%s3 + $0x580] sm:$0xff]
    %v214 = vld [vmem:[%s3 + $0x588] sm:$0xff]
    %v215 = vld [vmem:[%s3 + $0x590] sm:$0xff]
    %v216 = vld [vmem:[%s3 + $0x598] sm:$0xff]
    %v217 = vld [vmem:[%s3 + $0x5a0] sm:$0xff]
    %v218 = vld [vmem:[%s3 + $0x5a8] sm:$0xff]
    %v219 = vld [vmem:[%s3 + $0x5b0] sm:$0xff]
    %v220 = vld [vmem:[%s3 + $0x5b8] sm:$0xff]
    %v221 = vld [vmem:[%s3 + $0x5c0] sm:$0xff]
    %v222 = vld [vmem:[%s3 + $0x5c8] sm:$0xff]
    %v223 = vld [vmem:[%s3 + $0x5d0] sm:$0xff]
    %v224 = vld [vmem:[%s3 + $0x5d8] sm:$0xff]
    %v225 = vld [vmem:[%s3 + $0x5e0] sm:$0xff]
    %v226 = vld [vmem:[%s3 + $0x5e8] sm:$0xff]
    %v227 = vld [vmem:[%s3 + $0x5f0] sm:$0xff]
    %v228 = vld [vmem:[%s3 + $0x5f8] sm:$0xff]
    %v229 = vld [vmem:[%s4] sm:$0x3f]
    %v231 = vlaneseq
    %v232 = vshrl.u32 %v231, 7
    %v233 = vsub.s32 0, %v232
    %v234 = vrot.slane %v229, %v233
    %v235 = vlaneseq
    %v236 = vshrl.u32 %v235, 7
    %v237 = vsub.s32 1, %v236
    %v238 = vrot.slane %v229, %v237
    %v239 = vlaneseq
    %v240 = vshrl.u32 %v239, 7
    %v241 = vsub.s32 2, %v240
    %v242 = vrot.slane %v229, %v241
    %v243 = vlaneseq
    %v244 = vshrl.u32 %v243, 7
    %v245 = vsub.s32 3, %v244
    %v246 = vrot.slane %v229, %v245
    %v247 = vlaneseq
    %v248 = vshrl.u32 %v247, 7
    %v249 = vsub.s32 4, %v248
    %v250 = vrot.slane %v229, %v249
    %v251 = vlaneseq
    %v252 = vshrl.u32 %v251, 7
    %v253 = vsub.s32 5, %v252
    %v254 = vrot.slane %v229, %v253
    %261 = vmatprep.subr.mxu0 %v128
    %262 = vmatpush1.msra.mxu0 %v127
    %263 = vmatprep.subr.mxu0 %v122
    %264 = vmatpush1.msra.mxu0 %v121
    %265 = vmatprep.subr.mxu0 %v116
    %266 = vmatpush1.msra.mxu0 %v115
    %267 = vmatprep.subr.mxu0 %v110
    %268 = vmatpush1.msra.mxu0 %v109
    %269 = vmatprep.subr.mxu0 %v104
    %270 = vmatpush1.msra.mxu0 %v103
    %271 = vmatprep.subr.mxu0 %v98
    %272 = vmatpush1.msra.mxu0 %v97
    %273 = vmatprep.subr.mxu0 %v92
    %274 = vmatpush1.msra.mxu0 %v91
    %275 = vmatprep.subr.mxu0 %v86
    %276 = vmatpush1.msra.mxu0 %v85
    %277 = vmatprep.subr.mxu0 %v80
    %278 = vmatpush1.msra.mxu0 %v79
    %279 = vmatprep.subr.mxu0 %v74
    %280 = vmatpush1.msra.mxu0 %v73
    %281 = vmatprep.subr.mxu0 %v68
    %282 = vmatpush1.msra.mxu0 %v67
    %283 = vmatprep.subr.mxu0 %v62
    %284 = vmatpush1.msra.mxu0 %v61
    %285 = vmatprep.subr.mxu0 %v56
    %286 = vmatpush1.msra.mxu0 %v55
    %287 = vmatprep.subr.mxu0 %v50
    %288 = vmatpush1.msra.mxu0 %v49
    %289 = vmatprep.subr.mxu0 %v44
    %290 = vmatpush1.msra.mxu0 %v43
    %291 = vmatprep.subr.mxu0 %v38
    %292 = vmatpush1.msra.mxu0 %v37
    %293 = vmatprep.subr.mxu0 %v224
    %294 = vmatpush2.msra.mxu0 %v223
    %295 = vmatprep.subr.mxu0 %v218
    %296 = vmatpush2.msra.mxu0 %v217
    %297 = vmatprep.subr.mxu0 %v212
    %298 = vmatpush2.msra.mxu0 %v211
    %299 = vmatprep.subr.mxu0 %v206
    %300 = vmatpush2.msra.mxu0 %v205
    %301 = vmatprep.subr.mxu0 %v200
    %302 = vmatpush2.msra.mxu0 %v199
    %303 = vmatprep.subr.mxu0 %v194
    %304 = vmatpush2.msra.mxu0 %v193
    %305 = vmatprep.subr.mxu0 %v188
    %306 = vmatpush2.msra.mxu0 %v187
    %307 = vmatprep.subr.mxu0 %v182
    %308 = vmatpush2.msra.mxu0 %v181
    %309 = vmatprep.subr.mxu0 %v176
    %310 = vmatpush2.msra.mxu0 %v175
    %311 = vmatprep.subr.mxu0 %v170
    %312 = vmatpush2.msra.mxu0 %v169
    %313 = vmatprep.subr.mxu0 %v164
    %314 = vmatpush2.msra.mxu0 %v163
    %315 = vmatprep.subr.mxu0 %v158
    %316 = vmatpush2.msra.mxu0 %v157
    %317 = vmatprep.subr.mxu0 %v152
    %318 = vmatpush2.msra.mxu0 %v151
    %319 = vmatprep.subr.mxu0 %v146
    %320 = vmatpush2.msra.mxu0 %v145
    %321 = vmatprep.subr.mxu0 %v140
    %322 = vmatpush2.msra.mxu0 %v139
    %323 = vmatprep.subr.mxu0 %v134
    %324 = vmatpush2.msra.mxu0 %v133
    %325 = vmatprep.mubr.f32.mxu0 %v36
    %326 = vmatmul.mubr.f32.gmra.mxu0 %v35
    %v327 = vpop.f32.mrf.mxu0
    %v328 = vadd.f32 %v234, %v327
    %v329 = vpop.f32.mrf.mxu0
    %v330 = vadd.f32 %v238, %v329
    %331 = vdwg.mxu0
    %332 = vmatprep.subr.mxu0 %v130
    %333 = vmatpush1.msra.mxu0 %v129
    %334 = vmatprep.subr.mxu0 %v124
    %335 = vmatpush1.msra.mxu0 %v123
    %336 = vmatprep.subr.mxu0 %v118
    %337 = vmatpush1.msra.mxu0 %v117
    %338 = vmatprep.subr.mxu0 %v112
    %339 = vmatpush1.msra.mxu0 %v111
    %340 = vmatprep.subr.mxu0 %v106
    %341 = vmatpush1.msra.mxu0 %v105
    %342 = vmatprep.subr.mxu0 %v100
    %343 = vmatpush1.msra.mxu0 %v99
    %344 = vmatprep.subr.mxu0 %v94
    %345 = vmatpush1.msra.mxu0 %v93
    %346 = vmatprep.subr.mxu0 %v88
    %347 = vmatpush1.msra.mxu0 %v87
    %348 = vmatprep.subr.mxu0 %v82
    %349 = vmatpush1.msra.mxu0 %v81
    %350 = vmatprep.subr.mxu0 %v76
    %351 = vmatpush1.msra.mxu0 %v75
    %352 = vmatprep.subr.mxu0 %v70
    %353 = vmatpush1.msra.mxu0 %v69
    %354 = vmatprep.subr.mxu0 %v64
    %355 = vmatpush1.msra.mxu0 %v63
    %356 = vmatprep.subr.mxu0 %v58
    %357 = vmatpush1.msra.mxu0 %v57
    %358 = vmatprep.subr.mxu0 %v52
    %359 = vmatpush1.msra.mxu0 %v51
    %360 = vmatprep.subr.mxu0 %v46
    %361 = vmatpush1.msra.mxu0 %v45
    %362 = vmatprep.subr.mxu0 %v40
    %363 = vmatpush1.msra.mxu0 %v39
    %364 = vmatprep.subr.mxu0 %v226
    %365 = vmatpush2.msra.mxu0 %v225
    %366 = vmatprep.subr.mxu0 %v220
    %367 = vmatpush2.msra.mxu0 %v219
    %368 = vmatprep.subr.mxu0 %v214
    %369 = vmatpush2.msra.mxu0 %v213
    %370 = vmatprep.subr.mxu0 %v208
    %371 = vmatpush2.msra.mxu0 %v207
    %372 = vmatprep.subr.mxu0 %v202
    %373 = vmatpush2.msra.mxu0 %v201
    %374 = vmatprep.subr.mxu0 %v196
    %375 = vmatpush2.msra.mxu0 %v195
    %376 = vmatprep.subr.mxu0 %v190
    %377 = vmatpush2.msra.mxu0 %v189
    %378 = vmatprep.subr.mxu0 %v184
    %379 = vmatpush2.msra.mxu0 %v183
    %380 = vmatprep.subr.mxu0 %v178
    %381 = vmatpush2.msra.mxu0 %v177
    %382 = vmatprep.subr.mxu0 %v172
    %383 = vmatpush2.msra.mxu0 %v171
    %384 = vmatprep.subr.mxu0 %v166
    %385 = vmatpush2.msra.mxu0 %v165
    %386 = vmatprep.subr.mxu0 %v160
    %387 = vmatpush2.msra.mxu0 %v159
    %388 = vmatprep.subr.mxu0 %v154
    %389 = vmatpush2.msra.mxu0 %v153
    %390 = vmatprep.subr.mxu0 %v148
    %391 = vmatpush2.msra.mxu0 %v147
    %392 = vmatprep.subr.mxu0 %v142
    %393 = vmatpush2.msra.mxu0 %v141
    %394 = vmatprep.subr.mxu0 %v136
    %395 = vmatpush2.msra.mxu0 %v135
    %396 = vmatprep.mubr.f32.mxu0 %v36
    %397 = vmatmul.mubr.f32.gmra.mxu0 %v35
    %v398 = vpop.f32.mrf.mxu0
    %v399 = vadd.f32 %v242, %v398
    %v400 = vpop.f32.mrf.mxu0
    %v401 = vadd.f32 %v246, %v400
    %402 = vdwg.mxu0
    %403 = vmatprep.subr.mxu0 %v132
    %404 = vmatpush1.msra.mxu0 %v131
    %405 = vmatprep.subr.mxu0 %v126
    %406 = vmatpush1.msra.mxu0 %v125
    %407 = vmatprep.subr.mxu0 %v120
    %408 = vmatpush1.msra.mxu0 %v119
    %409 = vmatprep.subr.mxu0 %v114
    %410 = vmatpush1.msra.mxu0 %v113
    %411 = vmatprep.subr.mxu0 %v108
    %412 = vmatpush1.msra.mxu0 %v107
    %413 = vmatprep.subr.mxu0 %v102
    %414 = vmatpush1.msra.mxu0 %v101
    %415 = vmatprep.subr.mxu0 %v96
    %416 = vmatpush1.msra.mxu0 %v95
    %417 = vmatprep.subr.mxu0 %v90
    %418 = vmatpush1.msra.mxu0 %v89
    %419 = vmatprep.subr.mxu0 %v84
    %420 = vmatpush1.msra.mxu0 %v83
    %421 = vmatprep.subr.mxu0 %v78
    %422 = vmatpush1.msra.mxu0 %v77
    %423 = vmatprep.subr.mxu0 %v72
    %424 = vmatpush1.msra.mxu0 %v71
    %425 = vmatprep.subr.mxu0 %v66
    %426 = vmatpush1.msra.mxu0 %v65
    %427 = vmatprep.subr.mxu0 %v60
    %428 = vmatpush1.msra.mxu0 %v59
    %429 = vmatprep.subr.mxu0 %v54
    %430 = vmatpush1.msra.mxu0 %v53
    %431 = vmatprep.subr.mxu0 %v48
    %432 = vmatpush1.msra.mxu0 %v47
    %433 = vmatprep.subr.mxu0 %v42
    %434 = vmatpush1.msra.mxu0 %v41
    %435 = vmatprep.subr.mxu0 %v228
    %436 = vmatpush2.msra.mxu0 %v227
    %437 = vmatprep.subr.mxu0 %v222
    %438 = vmatpush2.msra.mxu0 %v221
    %439 = vmatprep.subr.mxu0 %v216
    %440 = vmatpush2.msra.mxu0 %v215
    %441 = vmatprep.subr.mxu0 %v210
    %442 = vmatpush2.msra.mxu0 %v209
    %443 = vmatprep.subr.mxu0 %v204
    %444 = vmatpush2.msra.mxu0 %v203
    %445 = vmatprep.subr.mxu0 %v198
    %446 = vmatpush2.msra.mxu0 %v197
    %447 = vmatprep.subr.mxu0 %v192
    %448 = vmatpush2.msra.mxu0 %v191
    %449 = vmatprep.subr.mxu0 %v186
    %450 = vmatpush2.msra.mxu0 %v185
    %451 = vmatprep.subr.mxu0 %v180
    %452 = vmatpush2.msra.mxu0 %v179
    %453 = vmatprep.subr.mxu0 %v174
    %454 = vmatpush2.msra.mxu0 %v173
    %455 = vmatprep.subr.mxu0 %v168
    %456 = vmatpush2.msra.mxu0 %v167
    %457 = vmatprep.subr.mxu0 %v162
    %458 = vmatpush2.msra.mxu0 %v161
    %459 = vmatprep.subr.mxu0 %v156
    %460 = vmatpush2.msra.mxu0 %v155
    %461 = vmatprep.subr.mxu0 %v150
    %462 = vmatpush2.msra.mxu0 %v149
    %463 = vmatprep.subr.mxu0 %v144
    %464 = vmatpush2.msra.mxu0 %v143
    %465 = vmatprep.subr.mxu0 %v138
    %466 = vmatpush2.msra.mxu0 %v137
    %467 = vmatprep.mubr.f32.mxu0 %v36
    %468 = vmatmul.mubr.f32.gmra.mxu0 %v35
    %v469 = vpop.f32.mrf.mxu0
    %v470 = vadd.f32 %v250, %v469
    %v471 = vpop.f32.mrf.mxu0
    %v472 = vadd.f32 %v254, %v471
    %473 = vdwg.mxu0
    %s474 = smul.u32 %s29, 3
    %s475 = smul.addr %s474, 8
    %s476 = scalar_lea.vmem %s1, %s475
    %v477 = vld [vmem:[%s476] sm:$0xff]
    %v478 = vld [vmem:[%s476 + $0x8] sm:$0xff]
    %v479 = vld [vmem:[%s476 + $0x10] sm:$0xff]
    %v480 = vadd.f32 %v477, %v328
    %v481 = vxor.u32 %v480, 2147483648
    %v482 = vmul.f32 %v481, 1.442695
    %v483 = vpow.pop %v482
    %v484 = vadd.f32 %v483, 1.0
    %v485 = vrcp.pop %v484
    %v486 = vmul.f32 1.0, %v485
    %v487 = vadd.f32 %v478, %v330
    %v488 = vxor.u32 %v487, 2147483648
    %v489 = vmul.f32 %v488, 1.442695
    %v490 = vpow.pop %v489
    %v491 = vadd.f32 %v490, 1.0
    %v492 = vrcp.pop %v491
    %v493 = vmul.f32 1.0, %v492
    %v494 = vmul.f32 %v486, %v399
    %v495 = vadd.f32 %v479, %v494
    %v496 = vtanh.pop %v495
    %v497 = vsub.f32 1.0, %v493
    %v498 = vmul.f32 %v497, %v496
    %v499 = vmul.f32 %v493, %v35
    %v500 = vadd.f32 %v498, %v499
    %s501 = smul.u32 %s34, 3
    %s502 = smul.addr %s501, 8
    %s503 = scalar_lea.vmem %s2, %s502
    %v504 = vld [vmem:[%s503] sm:$0xff]
    %v505 = vld [vmem:[%s503 + $0x8] sm:$0xff]
    %v506 = vld [vmem:[%s503 + $0x10] sm:$0xff]
    %v507 = vadd.f32 %v504, %v401
    %v508 = vxor.u32 %v507, 2147483648
    %v509 = vmul.f32 %v508, 1.442695
    %v510 = vpow.pop %v509
    %v511 = vadd.f32 %v510, 1.0
    %v512 = vrcp.pop %v511
    %v513 = vmul.f32 1.0, %v512
    %v514 = vadd.f32 %v505, %v470
    %v515 = vxor.u32 %v514, 2147483648
    %v516 = vmul.f32 %v515, 1.442695
    %v517 = vpow.pop %v516
    %v518 = vadd.f32 %v517, 1.0
    %v519 = vrcp.pop %v518
    %v520 = vmul.f32 1.0, %v519
    %v521 = vmul.f32 %v513, %v472
    %v522 = vadd.f32 %v506, %v521
    %v523 = vtanh.pop %v522
    %v524 = vsub.f32 1.0, %v520
    %v525 = vmul.f32 %v524, %v523
    %v526 = vmul.f32 %v520, %v36
    %v527 = vadd.f32 %v525, %v526
    %v528 = vlaneseq
    %v529 = vshrl.u32 %v528, 7
    %s530 = sld [smem:[#allocation4 + %s29]]
    %v531 = vstv %s530
    %vm532 = vcmp.lt.s32.totalorder %v529, %v531
    %v533 = vsel %vm532, %v500, %v35
    %s534 = sld [smem:[#allocation4 + %s34]]
    %v535 = vstv %s534
    %vm536 = vcmp.lt.s32.totalorder %v529, %v535
    %v537 = vsel %vm536, %v527, %v36
    %538 = vst [vmem:[#allocation2] sm:$0xff] %v533
    %539 = vst [vmem:[#allocation2 + $0x8] sm:$0xff] %v537
    %s540 = smul.u32 %s29, 8
    %s541 = scalar_lea.vmem %s5, %s540
    %542 = vst [vmem:[%s541] sm:$0xff] %v533
    %s543 = smul.u32 %s34, 8
    %s544 = scalar_lea.vmem %s6, %s543
    %545 = vst [vmem:[%s544] sm:$0xff] %v537
  $region22: #{char_classifier_forward.9} parent=0 // loop_footer
    %s33 = sadd.s32 1, %s29
  $region23: #{char_classifier_forward.9} parent=0 // loop_footer_branch
    %28 = sbr.rel target = $region19
  $region24: #{char_classifier_forward.9} parent=0 // loop_exit
    _
  // Predicated region
  $region25: #{char_classifier_forward.9} parent=0 // pred_check
    _
  $region26: #{char_classifier_forward.9} parent=0 // pred_check_branch
    %547 = sbr.rel (0) target = $region28
  $region27: #{char_classifier_forward.9} parent=0 // pred_region
    _
  $region28: #{char_classifier_forward.9} parent=0 // pred_fallthru
    _
  // Predicated region
  $region29: #{char_classifier_forward.9} parent=0 // pred_check
    _
  $region30: #{char_classifier_forward.9} parent=0 // pred_check_branch
    %549 = sbr.rel (0) target = $region32
  $region31: #{char_classifier_forward.9} parent=0 // pred_region
    _
  $region32: #{char_classifier_forward.9} parent=0 // pred_fallthru
    _
  // Predicated region
  $region33: #{char_classifier_forward.9} parent=0 // pred_check
    _
  $region34: #{char_classifier_forward.9} parent=0 // pred_check_branch
    %551 = sbr.rel (0) target = $region36
  $region35: #{char_classifier_forward.9} parent=0 // pred_region
    _
  $region36: #{char_classifier_forward.9} parent=0 // pred_fallthru
    _
  // Predicated region
  $region37: #{char_classifier_forward.9} parent=0 // pred_check
    _
  $region38: #{char_classifier_forward.9} parent=0 // pred_check_branch
    %553 = sbr.rel (0) target = $region40
  $region39: #{char_classifier_forward.9} parent=0 // pred_region
    _
  $region40: #{char_classifier_forward.9} parent=0 // pred_fallthru
    _

// kernel: char_classifier_forward.8
$region0: #{char_classifier_forward.8}
  #allocation0 [shape = 'u32[]', space=smem, size = 0x4, offset = 0x4, fixed_abs, tag = 'smem constant byte address 0x4 - core index']
  #allocation1 [shape = 'u32[144,128]{1,0:T(1,128)}', space=vmem, size = 0x12000, scoped, tag = 'internal scratch']
  %s0 = inlined_call_operand.vmem [shape: f32[64,128], index: 0, kind: input, shape index: {}]
  %s1 = inlined_call_operand.vmem [shape: f32[64,128], index: 1, kind: input, shape index: {}]
  %s2 = inlined_call_operand.vmem [shape: f32[128,768], index: 2, kind: input, shape index: {}]
  %s3 = inlined_call_operand.vmem [shape: f32[128,768], index: 3, kind: input, shape index: {}]
  %s4 = inlined_call_operand.vmem [shape: f32[1,768], index: 4, kind: input, shape index: {}]
  %s5 = inlined_call_operand.vmem [shape: f32[64,384], index: 5, kind: output, shape index: {0}]
  %s6 = inlined_call_operand.vmem [shape: f32[64,384], index: 6, kind: output, shape index: {1}]
  %7 = xla_tuple %s5, %s6
  %s8 = sld [smem:[#allocation0]]
  $region38: #{char_classifier_forward.8} parent=0
    _
  %s10 = ssub.s32 1, %s8
  %s11 = scalar_select 0, %s10, %s8
  // Predicated region
  $region2: #{char_classifier_forward.8} parent=0 // pred_check
    _
  $region3: #{char_classifier_forward.8} parent=0 // pred_check_branch
    %13 = sbr.rel (0) target = $region5
  $region4: #{char_classifier_forward.8} parent=0 // pred_region
    _
  $region5: #{char_classifier_forward.8} parent=0 // pred_fallthru
    _
  // Predicated region
  $region6: #{char_classifier_forward.8} parent=0 // pred_check
    _
  $region7: #{char_classifier_forward.8} parent=0 // pred_check_branch
    %15 = sbr.rel (0) target = $region9
  $region8: #{char_classifier_forward.8} parent=0 // pred_region
    _
  $region9: #{char_classifier_forward.8} parent=0 // pred_fallthru
    _
  // Predicated region
  $region10: #{char_classifier_forward.8} parent=0 // pred_check
    _
  $region11: #{char_classifier_forward.8} parent=0 // pred_check_branch
    %17 = sbr.rel (0) target = $region13
  $region12: #{char_classifier_forward.8} parent=0 // pred_region
    _
  $region13: #{char_classifier_forward.8} parent=0 // pred_fallthru
    _
  // Predicated region
  $region14: #{char_classifier_forward.8} parent=0 // pred_check
    _
  $region15: #{char_classifier_forward.8} parent=0 // pred_check_branch
    %19 = sbr.rel (0) target = $region17
  $region16: #{char_classifier_forward.8} parent=0 // pred_region
    _
  $region17: #{char_classifier_forward.8} parent=0 // pred_fallthru
    _
  // Predicated region
  $region18: #{char_classifier_forward.8} parent=0 // pred_check
    _
  $region19: #{char_classifier_forward.8} parent=0 // pred_check_branch
    %21 = sbr.rel (0) target = $region21
  $region20: #{char_classifier_forward.8} parent=0 // pred_region
    _
  $region21: #{char_classifier_forward.8} parent=0 // pred_fallthru
    _
  %v22 = vld [vmem:[%s0] sm:$0xff]
  %v23 = vld [vmem:[%s0 + $0x8] sm:$0xff]
  %v24 = vld [vmem:[%s0 + $0x10] sm:$0xff]
  %v25 = vld [vmem:[%s0 + $0x18] sm:$0xff]
  %v26 = vld [vmem:[%s0 + $0x20] sm:$0xff]
  %v27 = vld [vmem:[%s0 + $0x28] sm:$0xff]
  %v28 = vld [vmem:[%s0 + $0x30] sm:$0xff]
  %v29 = vld [vmem:[%s0 + $0x38] sm:$0xff]
  %v30 = vld [vmem:[%s2] sm:$0xff]
  %v31 = vld [vmem:[%s2 + $0x8] sm:$0xff]
  %v32 = vld [vmem:[%s2 + $0x10] sm:$0xff]
  %v33 = vld [vmem:[%s2 + $0x18] sm:$0xff]
  %v34 = vld [vmem:[%s2 + $0x20] sm:$0xff]
  %v35 = vld [vmem:[%s2 + $0x28] sm:$0xff]
  %v36 = vld [vmem:[%s2 + $0x30] sm:$0xff]
  %v37 = vld [vmem:[%s2 + $0x38] sm:$0xff]
  %v38 = vld [vmem:[%s2 + $0x40] sm:$0xff]
  %v39 = vld [vmem:[%s2 + $0x48] sm:$0xff]
  %v40 = vld [vmem:[%s2 + $0x50] sm:$0xff]
  %v41 = vld [vmem:[%s2 + $0x58] sm:$0xff]
  %v42 = vld [vmem:[%s2 + $0x60] sm:$0xff]
  %v43 = vld [vmem:[%s2 + $0x68] sm:$0xff]
  %v44 = vld [vmem:[%s2 + $0x70] sm:$0xff]
  %v45 = vld [vmem:[%s2 + $0x78] sm:$0xff]
  %v46 = vld [vmem:[%s2 + $0x80] sm:$0xff]
  %v47 = vld [vmem:[%s2 + $0x88] sm:$0xff]
  %v48 = vld [vmem:[%s2 + $0x90] sm:$0xff]
  %v49 = vld [vmem:[%s2 + $0x98] sm:$0xff]
  %v50 = vld [vmem:[%s2 + $0xa0] sm:$0xff]
  %v51 = vld [vmem:[%s2 + $0xa8] sm:$0xff]
  %v52 = vld [vmem:[%s2 + $0xb0] sm:$0xff]
  %v53 = vld [vmem:[%s2 + $0xb8] sm:$0xff]
  %v54 = vld [vmem:[%s2 + $0xc0] sm:$0xff]
  %v55 = vld [vmem:[%s2 + $0xc8] sm:$0xff]
  %v56 = vld [vmem:[%s2 + $0xd0] sm:$0xff]
  %v57 = vld [vmem:[%s2 + $0xd8] sm:$0xff]
  %v58 = vld [vmem:[%s2 + $0xe0] sm:$0xff]
  %v59 = vld [vmem:[%s2 + $0xe8] sm:$0xff]
  %v60 = vld [vmem:[%s2 + $0xf0] sm:$0xff]
  %v61 = vld [vmem:[%s2 + $0xf8] sm:$0xff]
  %v62 = vld [vmem:[%s2 + $0x100] sm:$0xff]
  %v63 = vld [vmem:[%s2 + $0x108] sm:$0xff]
  %v64 = vld [vmem:[%s2 + $0x110] sm:$0xff]
  %v65 = vld [vmem:[%s2 + $0x118] sm:$0xff]
  %v66 = vld [vmem:[%s2 + $0x120] sm:$0xff]
  %v67 = vld [vmem:[%s2 + $0x128] sm:$0xff]
  %v68 = vld [vmem:[%s2 + $0x130] sm:$0xff]
  %v69 = vld [vmem:[%s2 + $0x138] sm:$0xff]
  %v70 = vld [vmem:[%s2 + $0x140] sm:$0xff]
  %v71 = vld [vmem:[%s2 + $0x148] sm:$0xff]
  %v72 = vld [vmem:[%s2 + $0x150] sm:$0xff]
  %v73 = vld [vmem:[%s2 + $0x158] sm:$0xff]
  %v74 = vld [vmem:[%s2 + $0x160] sm:$0xff]
  %v75 = vld [vmem:[%s2 + $0x168] sm:$0xff]
  %v76 = vld [vmem:[%s2 + $0x170] sm:$0xff]
  %v77 = vld [vmem:[%s2 + $0x178] sm:$0xff]
  %v78 = vld [vmem:[%s2 + $0x180] sm:$0xff]
  %v79 = vld [vmem:[%s2 + $0x188] sm:$0xff]
  %v80 = vld [vmem:[%s2 + $0x190] sm:$0xff]
  %v81 = vld [vmem:[%s2 + $0x198] sm:$0xff]
  %v82 = vld [vmem:[%s2 + $0x1a0] sm:$0xff]
  %v83 = vld [vmem:[%s2 + $0x1a8] sm:$0xff]
  %v84 = vld [vmem:[%s2 + $0x1b0] sm:$0xff]
  %v85 = vld [vmem:[%s2 + $0x1b8] sm:$0xff]
  %v86 = vld [vmem:[%s2 + $0x1c0] sm:$0xff]
  %v87 = vld [vmem:[%s2 + $0x1c8] sm:$0xff]
  %v88 = vld [vmem:[%s2 + $0x1d0] sm:$0xff]
  %v89 = vld [vmem:[%s2 + $0x1d8] sm:$0xff]
  %v90 = vld [vmem:[%s2 + $0x1e0] sm:$0xff]
  %v91 = vld [vmem:[%s2 + $0x1e8] sm:$0xff]
  %v92 = vld [vmem:[%s2 + $0x1f0] sm:$0xff]
  %v93 = vld [vmem:[%s2 + $0x1f8] sm:$0xff]
  %v94 = vld [vmem:[%s2 + $0x200] sm:$0xff]
  %v95 = vld [vmem:[%s2 + $0x208] sm:$0xff]
  %v96 = vld [vmem:[%s2 + $0x210] sm:$0xff]
  %v97 = vld [vmem:[%s2 + $0x218] sm:$0xff]
  %v98 = vld [vmem:[%s2 + $0x220] sm:$0xff]
  %v99 = vld [vmem:[%s2 + $0x228] sm:$0xff]
  %v100 = vld [vmem:[%s2 + $0x230] sm:$0xff]
  %v101 = vld [vmem:[%s2 + $0x238] sm:$0xff]
  %v102 = vld [vmem:[%s2 + $0x240] sm:$0xff]
  %v103 = vld [vmem:[%s2 + $0x248] sm:$0xff]
  %v104 = vld [vmem:[%s2 + $0x250] sm:$0xff]
  %v105 = vld [vmem:[%s2 + $0x258] sm:$0xff]
  %v106 = vld [vmem:[%s2 + $0x260] sm:$0xff]
  %v107 = vld [vmem:[%s2 + $0x268] sm:$0xff]
  %v108 = vld [vmem:[%s2 + $0x270] sm:$0xff]
  %v109 = vld [vmem:[%s2 + $0x278] sm:$0xff]
  %v110 = vld [vmem:[%s2 + $0x280] sm:$0xff]
  %v111 = vld [vmem:[%s2 + $0x288] sm:$0xff]
  %v112 = vld [vmem:[%s2 + $0x290] sm:$0xff]
  %v113 = vld [vmem:[%s2 + $0x298] sm:$0xff]
  %v114 = vld [vmem:[%s2 + $0x2a0] sm:$0xff]
  %v115 = vld [vmem:[%s2 + $0x2a8] sm:$0xff]
  %v116 = vld [vmem:[%s2 + $0x2b0] sm:$0xff]
  %v117 = vld [vmem:[%s2 + $0x2b8] sm:$0xff]
  %v118 = vld [vmem:[%s2 + $0x2c0] sm:$0xff]
  %v119 = vld [vmem:[%s2 + $0x2c8] sm:$0xff]
  %v120 = vld [vmem:[%s2 + $0x2d0] sm:$0xff]
  %v121 = vld [vmem:[%s2 + $0x2d8] sm:$0xff]
  %v122 = vld [vmem:[%s2 + $0x2e0] sm:$0xff]
  %v123 = vld [vmem:[%s2 + $0x2e8] sm:$0xff]
  %v124 = vld [vmem:[%s2 + $0x2f0] sm:$0xff]
  %v125 = vld [vmem:[%s2 + $0x2f8] sm:$0xff]
  %v126 = vld [vmem:[%s1] sm:$0xff]
  %v127 = vld [vmem:[%s1 + $0x8] sm:$0xff]
  %v128 = vld [vmem:[%s1 + $0x10] sm:$0xff]
  %v129 = vld [vmem:[%s1 + $0x18] sm:$0xff]
  %v130 = vld [vmem:[%s1 + $0x20] sm:$0xff]
  %v131 = vld [vmem:[%s1 + $0x28] sm:$0xff]
  %v132 = vld [vmem:[%s1 + $0x30] sm:$0xff]
  %v133 = vld [vmem:[%s1 + $0x38] sm:$0xff]
  %v134 = vld [vmem:[%s3] sm:$0xff]
  %v135 = vld [vmem:[%s3 + $0x8] sm:$0xff]
  %v136 = vld [vmem:[%s3 + $0x10] sm:$0xff]
  %v137 = vld [vmem:[%s3 + $0x18] sm:$0xff]
  %v138 = vld [vmem:[%s3 + $0x20] sm:$0xff]
  %v139 = vld [vmem:[%s3 + $0x28] sm:$0xff]
  %v140 = vld [vmem:[%s3 + $0x30] sm:$0xff]
  %v141 = vld [vmem:[%s3 + $0x38] sm:$0xff]
  %v142 = vld [vmem:[%s3 + $0x40] sm:$0xff]
  %v143 = vld [vmem:[%s3 + $0x48] sm:$0xff]
  %v144 = vld [vmem:[%s3 + $0x50] sm:$0xff]
  %v145 = vld [vmem:[%s3 + $0x58] sm:$0xff]
  %v146 = vld [vmem:[%s3 + $0x60] sm:$0xff]
  %v147 = vld [vmem:[%s3 + $0x68] sm:$0xff]
  %v148 = vld [vmem:[%s3 + $0x70] sm:$0xff]
  %v149 = vld [vmem:[%s3 + $0x78] sm:$0xff]
  %v150 = vld [vmem:[%s3 + $0x80] sm:$0xff]
  %v151 = vld [vmem:[%s3 + $0x88] sm:$0xff]
  %v152 = vld [vmem:[%s3 + $0x90] sm:$0xff]
  %v153 = vld [vmem:[%s3 + $0x98] sm:$0xff]
  %v154 = vld [vmem:[%s3 + $0xa0] sm:$0xff]
  %v155 = vld [vmem:[%s3 + $0xa8] sm:$0xff]
  %v156 = vld [vmem:[%s3 + $0xb0] sm:$0xff]
  %v157 = vld [vmem:[%s3 + $0xb8] sm:$0xff]
  %v158 = vld [vmem:[%s3 + $0xc0] sm:$0xff]
  %v159 = vld [vmem:[%s3 + $0xc8] sm:$0xff]
  %v160 = vld [vmem:[%s3 + $0xd0] sm:$0xff]
  %v161 = vld [vmem:[%s3 + $0xd8] sm:$0xff]
  %v162 = vld [vmem:[%s3 + $0xe0] sm:$0xff]
  %v163 = vld [vmem:[%s3 + $0xe8] sm:$0xff]
  %v164 = vld [vmem:[%s3 + $0xf0] sm:$0xff]
  %v165 = vld [vmem:[%s3 + $0xf8] sm:$0xff]
  %v166 = vld [vmem:[%s3 + $0x100] sm:$0xff]
  %v167 = vld [vmem:[%s3 + $0x108] sm:$0xff]
  %v168 = vld [vmem:[%s3 + $0x110] sm:$0xff]
  %v169 = vld [vmem:[%s3 + $0x118] sm:$0xff]
  %v170 = vld [vmem:[%s3 + $0x120] sm:$0xff]
  %v171 = vld [vmem:[%s3 + $0x128] sm:$0xff]
  %v172 = vld [vmem:[%s3 + $0x130] sm:$0xff]
  %v173 = vld [vmem:[%s3 + $0x138] sm:$0xff]
  %v174 = vld [vmem:[%s3 + $0x140] sm:$0xff]
  %v175 = vld [vmem:[%s3 + $0x148] sm:$0xff]
  %v176 = vld [vmem:[%s3 + $0x150] sm:$0xff]
  %v177 = vld [vmem:[%s3 + $0x158] sm:$0xff]
  %v178 = vld [vmem:[%s3 + $0x160] sm:$0xff]
  %v179 = vld [vmem:[%s3 + $0x168] sm:$0xff]
  %v180 = vld [vmem:[%s3 + $0x170] sm:$0xff]
  %v181 = vld [vmem:[%s3 + $0x178] sm:$0xff]
  %v182 = vld [vmem:[%s3 + $0x180] sm:$0xff]
  %v183 = vld [vmem:[%s3 + $0x188] sm:$0xff]
  %v184 = vld [vmem:[%s3 + $0x190] sm:$0xff]
  %v185 = vld [vmem:[%s3 + $0x198] sm:$0xff]
  %v186 = vld [vmem:[%s3 + $0x1a0] sm:$0xff]
  %v187 = vld [vmem:[%s3 + $0x1a8] sm:$0xff]
  %v188 = vld [vmem:[%s3 + $0x1b0] sm:$0xff]
  %v189 = vld [vmem:[%s3 + $0x1b8] sm:$0xff]
  %v190 = vld [vmem:[%s3 + $0x1c0] sm:$0xff]
  %v191 = vld [vmem:[%s3 + $0x1c8] sm:$0xff]
  %v192 = vld [vmem:[%s3 + $0x1d0] sm:$0xff]
  %v193 = vld [vmem:[%s3 + $0x1d8] sm:$0xff]
  %v194 = vld [vmem:[%s3 + $0x1e0] sm:$0xff]
  %v195 = vld [vmem:[%s3 + $0x1e8] sm:$0xff]
  %v196 = vld [vmem:[%s3 + $0x1f0] sm:$0xff]
  %v197 = vld [vmem:[%s3 + $0x1f8] sm:$0xff]
  %v198 = vld [vmem:[%s3 + $0x200] sm:$0xff]
  %v199 = vld [vmem:[%s3 + $0x208] sm:$0xff]
  %v200 = vld [vmem:[%s3 + $0x210] sm:$0xff]
  %v201 = vld [vmem:[%s3 + $0x218] sm:$0xff]
  %v202 = vld [vmem:[%s3 + $0x220] sm:$0xff]
  %v203 = vld [vmem:[%s3 + $0x228] sm:$0xff]
  %v204 = vld [vmem:[%s3 + $0x230] sm:$0xff]
  %v205 = vld [vmem:[%s3 + $0x238] sm:$0xff]
  %v206 = vld [vmem:[%s3 + $0x240] sm:$0xff]
  %v207 = vld [vmem:[%s3 + $0x248] sm:$0xff]
  %v208 = vld [vmem:[%s3 + $0x250] sm:$0xff]
  %v209 = vld [vmem:[%s3 + $0x258] sm:$0xff]
  %v210 = vld [vmem:[%s3 + $0x260] sm:$0xff]
  %v211 = vld [vmem:[%s3 + $0x268] sm:$0xff]
  %v212 = vld [vmem:[%s3 + $0x270] sm:$0xff]
  %v213 = vld [vmem:[%s3 + $0x278] sm:$0xff]
  %v214 = vld [vmem:[%s3 + $0x280] sm:$0xff]
  %v215 = vld [vmem:[%s3 + $0x288] sm:$0xff]
  %v216 = vld [vmem:[%s3 + $0x290] sm:$0xff]
  %v217 = vld [vmem:[%s3 + $0x298] sm:$0xff]
  %v218 = vld [vmem:[%s3 + $0x2a0] sm:$0xff]
  %v219 = vld [vmem:[%s3 + $0x2a8] sm:$0xff]
  %v220 = vld [vmem:[%s3 + $0x2b0] sm:$0xff]
  %v221 = vld [vmem:[%s3 + $0x2b8] sm:$0xff]
  %v222 = vld [vmem:[%s3 + $0x2c0] sm:$0xff]
  %v223 = vld [vmem:[%s3 + $0x2c8] sm:$0xff]
  %v224 = vld [vmem:[%s3 + $0x2d0] sm:$0xff]
  %v225 = vld [vmem:[%s3 + $0x2d8] sm:$0xff]
  %v226 = vld [vmem:[%s3 + $0x2e0] sm:$0xff]
  %v227 = vld [vmem:[%s3 + $0x2e8] sm:$0xff]
  %v228 = vld [vmem:[%s3 + $0x2f0] sm:$0xff]
  %v229 = vld [vmem:[%s3 + $0x2f8] sm:$0xff]
  %230 = vmatprep.subr.mxu0 %v225
  %231 = vmatpush1.msra.mxu0 %v224
  %232 = vmatprep.subr.mxu0 %v219
  %233 = vmatpush1.msra.mxu0 %v218
  %234 = vmatprep.subr.mxu0 %v213
  %235 = vmatpush1.msra.mxu0 %v212
  %236 = vmatprep.subr.mxu0 %v207
  %237 = vmatpush1.msra.mxu0 %v206
  %238 = vmatprep.subr.mxu0 %v201
  %239 = vmatpush1.msra.mxu0 %v200
  %240 = vmatprep.subr.mxu0 %v195
  %241 = vmatpush1.msra.mxu0 %v194
  %242 = vmatprep.subr.mxu0 %v189
  %243 = vmatpush1.msra.mxu0 %v188
  %244 = vmatprep.subr.mxu0 %v183
  %245 = vmatpush1.msra.mxu0 %v182
  %246 = vmatprep.subr.mxu0 %v177
  %247 = vmatpush1.msra.mxu0 %v176
  %248 = vmatprep.subr.mxu0 %v171
  %249 = vmatpush1.msra.mxu0 %v170
  %250 = vmatprep.subr.mxu0 %v165
  %251 = vmatpush1.msra.mxu0 %v164
  %252 = vmatprep.subr.mxu0 %v159
  %253 = vmatpush1.msra.mxu0 %v158
  %254 = vmatprep.subr.mxu0 %v153
  %255 = vmatpush1.msra.mxu0 %v152
  %256 = vmatprep.subr.mxu0 %v147
  %257 = vmatpush1.msra.mxu0 %v146
  %258 = vmatprep.subr.mxu0 %v141
  %259 = vmatpush1.msra.mxu0 %v140
  %260 = vmatprep.subr.mxu0 %v135
  %261 = vmatpush1.msra.mxu0 %v134
  %262 = vmatprep.subr.mxu0 0.0
  %263 = vmatpush2.msra.mxu0 0.0
  %264 = vmatprep.subr.mxu0 0.0
  %265 = vmatpush2.msra.mxu0 0.0
  %266 = vmatprep.subr.mxu0 0.0
  %267 = vmatpush2.msra.mxu0 0.0
  %268 = vmatprep.subr.mxu0 0.0
  %269 = vmatpush2.msra.mxu0 0.0
  %270 = vmatprep.subr.mxu0 0.0
  %271 = vmatpush2.msra.mxu0 0.0
  %272 = vmatprep.subr.mxu0 0.0
  %273 = vmatpush2.msra.mxu0 0.0
  %274 = vmatprep.subr.mxu0 0.0
  %275 = vmatpush2.msra.mxu0 0.0
  %276 = vmatprep.subr.mxu0 0.0
  %277 = vmatpush2.msra.mxu0 0.0
  %278 = vmatprep.subr.mxu0 0.0
  %279 = vmatpush2.msra.mxu0 0.0
  %280 = vmatprep.subr.mxu0 0.0
  %281 = vmatpush2.msra.mxu0 0.0
  %282 = vmatprep.subr.mxu0 0.0
  %283 = vmatpush2.msra.mxu0 0.0
  %284 = vmatprep.subr.mxu0 0.0
  %285 = vmatpush2.msra.mxu0 0.0
  %286 = vmatprep.subr.mxu0 0.0
  %287 = vmatpush2.msra.mxu0 0.0
  %288 = vmatprep.subr.mxu0 0.0
  %289 = vmatpush2.msra.mxu0 0.0
  %290 = vmatprep.subr.mxu0 0.0
  %291 = vmatpush2.msra.mxu0 0.0
  %292 = vmatprep.subr.mxu0 0.0
  %293 = vmatpush2.msra.mxu0 0.0
  %294 = vmatprep.mubr.f32.mxu0 0.0
  %295 = vmatmul.mubr.f32.gmra.mxu0 %v126
  %v296 = vpop.f32.mrf.mxu0
  %v297 = vadd.f32 0.0, %v296
  %v298 = vpop.f32.mrf.mxu0
  %v299 = vadd.f32 0.0, %v298
  %300 = vmatprep.mubr.f32.mxu0 0.0
  %301 = vmatmul.mubr.f32.gmra.mxu0 %v127
  %v302 = vpop.f32.mrf.mxu0
  %v303 = vadd.f32 0.0, %v302
  %v304 = vpop.f32.mrf.mxu0
  %v305 = vadd.f32 0.0, %v304
  %306 = vmatprep.mubr.f32.mxu0 0.0
  %307 = vmatmul.mubr.f32.gmra.mxu0 %v128
  %v308 = vpop.f32.mrf.mxu0
  %v309 = vadd.f32 0.0, %v308
  %v310 = vpop.f32.mrf.mxu0
  %v311 = vadd.f32 0.0, %v310
  %312 = vmatprep.mubr.f32.mxu0 0.0
  %313 = vmatmul.mubr.f32.gmra.mxu0 %v129
  %v314 = vpop.f32.mrf.mxu0
  %v315 = vadd.f32 0.0, %v314
  %v316 = vpop.f32.mrf.mxu0
  %v317 = vadd.f32 0.0, %v316
  %318 = vmatprep.mubr.f32.mxu0 0.0
  %319 = vmatmul.mubr.f32.gmra.mxu0 %v130
  %v320 = vpop.f32.mrf.mxu0
  %v321 = vadd.f32 0.0, %v320
  %v322 = vpop.f32.mrf.mxu0
  %v323 = vadd.f32 0.0, %v322
  %324 = vmatprep.mubr.f32.mxu0 0.0
  %325 = vmatmul.mubr.f32.gmra.mxu0 %v131
  %v326 = vpop.f32.mrf.mxu0
  %v327 = vadd.f32 0.0, %v326
  %v328 = vpop.f32.mrf.mxu0
  %v329 = vadd.f32 0.0, %v328
  %330 = vmatprep.mubr.f32.mxu0 0.0
  %331 = vmatmul.mubr.f32.gmra.mxu0 %v132
  %v332 = vpop.f32.mrf.mxu0
  %v333 = vadd.f32 0.0, %v332
  %v334 = vpop.f32.mrf.mxu0
  %v335 = vadd.f32 0.0, %v334
  %336 = vmatprep.mubr.f32.mxu0 0.0
  %337 = vmatmul.mubr.f32.gmra.mxu0 %v133
  %v338 = vpop.f32.mrf.mxu0
  %v339 = vadd.f32 0.0, %v338
  %v340 = vpop.f32.mrf.mxu0
  %v341 = vadd.f32 0.0, %v340
  %342 = vdwg.mxu0
  %343 = vmatprep.subr.mxu0 %v227
  %344 = vmatpush1.msra.mxu0 %v226
  %345 = vmatprep.subr.mxu0 %v221
  %346 = vmatpush1.msra.mxu0 %v220
  %347 = vmatprep.subr.mxu0 %v215
  %348 = vmatpush1.msra.mxu0 %v214
  %349 = vmatprep.subr.mxu0 %v209
  %350 = vmatpush1.msra.mxu0 %v208
  %351 = vmatprep.subr.mxu0 %v203
  %352 = vmatpush1.msra.mxu0 %v202
  %353 = vmatprep.subr.mxu0 %v197
  %354 = vmatpush1.msra.mxu0 %v196
  %355 = vmatprep.subr.mxu0 %v191
  %356 = vmatpush1.msra.mxu0 %v190
  %357 = vmatprep.subr.mxu0 %v185
  %358 = vmatpush1.msra.mxu0 %v184
  %359 = vmatprep.subr.mxu0 %v179
  %360 = vmatpush1.msra.mxu0 %v178
  %361 = vmatprep.subr.mxu0 %v173
  %362 = vmatpush1.msra.mxu0 %v172
  %363 = vmatprep.subr.mxu0 %v167
  %364 = vmatpush1.msra.mxu0 %v166
  %365 = vmatprep.subr.mxu0 %v161
  %366 = vmatpush1.msra.mxu0 %v160
  %367 = vmatprep.subr.mxu0 %v155
  %368 = vmatpush1.msra.mxu0 %v154
  %369 = vmatprep.subr.mxu0 %v149
  %370 = vmatpush1.msra.mxu0 %v148
  %371 = vmatprep.subr.mxu0 %v143
  %372 = vmatpush1.msra.mxu0 %v142
  %373 = vmatprep.subr.mxu0 %v137
  %374 = vmatpush1.msra.mxu0 %v136
  %375 = vmatprep.subr.mxu0 0.0
  %376 = vmatpush2.msra.mxu0 0.0
  %377 = vmatprep.subr.mxu0 0.0
  %378 = vmatpush2.msra.mxu0 0.0
  %379 = vmatprep.subr.mxu0 0.0
  %380 = vmatpush2.msra.mxu0 0.0
  %381 = vmatprep.subr.mxu0 0.0
  %382 = vmatpush2.msra.mxu0 0.0
  %383 = vmatprep.subr.mxu0 0.0
  %384 = vmatpush2.msra.mxu0 0.0
  %385 = vmatprep.subr.mxu0 0.0
  %386 = vmatpush2.msra.mxu0 0.0
  %387 = vmatprep.subr.mxu0 0.0
  %388 = vmatpush2.msra.mxu0 0.0
  %389 = vmatprep.subr.mxu0 0.0
  %390 = vmatpush2.msra.mxu0 0.0
  %391 = vmatprep.subr.mxu0 0.0
  %392 = vmatpush2.msra.mxu0 0.0
  %393 = vmatprep.subr.mxu0 0.0
  %394 = vmatpush2.msra.mxu0 0.0
  %395 = vmatprep.subr.mxu0 0.0
  %396 = vmatpush2.msra.mxu0 0.0
  %397 = vmatprep.subr.mxu0 0.0
  %398 = vmatpush2.msra.mxu0 0.0
  %399 = vmatprep.subr.mxu0 0.0
  %400 = vmatpush2.msra.mxu0 0.0
  %401 = vmatprep.subr.mxu0 0.0
  %402 = vmatpush2.msra.mxu0 0.0
  %403 = vmatprep.subr.mxu0 0.0
  %404 = vmatpush2.msra.mxu0 0.0
  %405 = vmatprep.subr.mxu0 0.0
  %406 = vmatpush2.msra.mxu0 0.0
  %407 = vmatprep.mubr.f32.mxu0 0.0
  %408 = vmatmul.mubr.f32.gmra.mxu0 %v126
  %v409 = vpop.f32.mrf.mxu0
  %v410 = vadd.f32 0.0, %v409
  %v411 = vpop.f32.mrf.mxu0
  %v412 = vadd.f32 0.0, %v411
  %413 = vmatprep.mubr.f32.mxu0 0.0
  %414 = vmatmul.mubr.f32.gmra.mxu0 %v127
  %v415 = vpop.f32.mrf.mxu0
  %v416 = vadd.f32 0.0, %v415
  %v417 = vpop.f32.mrf.mxu0
  %v418 = vadd.f32 0.0, %v417
  %419 = vmatprep.mubr.f32.mxu0 0.0
  %420 = vmatmul.mubr.f32.gmra.mxu0 %v128
  %v421 = vpop.f32.mrf.mxu0
  %v422 = vadd.f32 0.0, %v421
  %v423 = vpop.f32.mrf.mxu0
  %v424 = vadd.f32 0.0, %v423
  %425 = vmatprep.mubr.f32.mxu0 0.0
  %426 = vmatmul.mubr.f32.gmra.mxu0 %v129
  %v427 = vpop.f32.mrf.mxu0
  %v428 = vadd.f32 0.0, %v427
  %v429 = vpop.f32.mrf.mxu0
  %v430 = vadd.f32 0.0, %v429
  %431 = vmatprep.mubr.f32.mxu0 0.0
  %432 = vmatmul.mubr.f32.gmra.mxu0 %v130
  %v433 = vpop.f32.mrf.mxu0
  %v434 = vadd.f32 0.0, %v433
  %v435 = vpop.f32.mrf.mxu0
  %v436 = vadd.f32 0.0, %v435
  %437 = vmatprep.mubr.f32.mxu0 0.0
  %438 = vmatmul.mubr.f32.gmra.mxu0 %v131
  %v439 = vpop.f32.mrf.mxu0
  %v440 = vadd.f32 0.0, %v439
  %v441 = vpop.f32.mrf.mxu0
  %v442 = vadd.f32 0.0, %v441
  %443 = vmatprep.mubr.f32.mxu0 0.0
  %444 = vmatmul.mubr.f32.gmra.mxu0 %v132
  %v445 = vpop.f32.mrf.mxu0
  %v446 = vadd.f32 0.0, %v445
  %v447 = vpop.f32.mrf.mxu0
  %v448 = vadd.f32 0.0, %v447
  %449 = vmatprep.mubr.f32.mxu0 0.0
  %450 = vmatmul.mubr.f32.gmra.mxu0 %v133
  %v451 = vpop.f32.mrf.mxu0
  %v452 = vadd.f32 0.0, %v451
  %v453 = vpop.f32.mrf.mxu0
  %v454 = vadd.f32 0.0, %v453
  %455 = vdwg.mxu0
  %456 = vmatprep.subr.mxu0 %v229
  %457 = vmatpush1.msra.mxu0 %v228
  %458 = vmatprep.subr.mxu0 %v223
  %459 = vmatpush1.msra.mxu0 %v222
  %460 = vmatprep.subr.mxu0 %v217
  %461 = vmatpush1.msra.mxu0 %v216
  %462 = vmatprep.subr.mxu0 %v211
  %463 = vmatpush1.msra.mxu0 %v210
  %464 = vmatprep.subr.mxu0 %v205
  %465 = vmatpush1.msra.mxu0 %v204
  %466 = vmatprep.subr.mxu0 %v199
  %467 = vmatpush1.msra.mxu0 %v198
  %468 = vmatprep.subr.mxu0 %v193
  %469 = vmatpush1.msra.mxu0 %v192
  %470 = vmatprep.subr.mxu0 %v187
  %471 = vmatpush1.msra.mxu0 %v186
  %472 = vmatprep.subr.mxu0 %v181
  %473 = vmatpush1.msra.mxu0 %v180
  %474 = vmatprep.subr.mxu0 %v175
  %475 = vmatpush1.msra.mxu0 %v174
  %476 = vmatprep.subr.mxu0 %v169
  %477 = vmatpush1.msra.mxu0 %v168
  %478 = vmatprep.subr.mxu0 %v163
  %479 = vmatpush1.msra.mxu0 %v162
  %480 = vmatprep.subr.mxu0 %v157
  %481 = vmatpush1.msra.mxu0 %v156
  %482 = vmatprep.subr.mxu0 %v151
  %483 = vmatpush1.msra.mxu0 %v150
  %484 = vmatprep.subr.mxu0 %v145
  %485 = vmatpush1.msra.mxu0 %v144
  %486 = vmatprep.subr.mxu0 %v139
  %487 = vmatpush1.msra.mxu0 %v138
  %488 = vmatprep.subr.mxu0 0.0
  %489 = vmatpush2.msra.mxu0 0.0
  %490 = vmatprep.subr.mxu0 0.0
  %491 = vmatpush2.msra.mxu0 0.0
  %492 = vmatprep.subr.mxu0 0.0
  %493 = vmatpush2.msra.mxu0 0.0
  %494 = vmatprep.subr.mxu0 0.0
  %495 = vmatpush2.msra.mxu0 0.0
  %496 = vmatprep.subr.mxu0 0.0
  %497 = vmatpush2.msra.mxu0 0.0
  %498 = vmatprep.subr.mxu0 0.0
  %499 = vmatpush2.msra.mxu0 0.0
  %500 = vmatprep.subr.mxu0 0.0
  %501 = vmatpush2.msra.mxu0 0.0
  %502 = vmatprep.subr.mxu0 0.0
  %503 = vmatpush2.msra.mxu0 0.0
  %504 = vmatprep.subr.mxu0 0.0
  %505 = vmatpush2.msra.mxu0 0.0
  %506 = vmatprep.subr.mxu0 0.0
  %507 = vmatpush2.msra.mxu0 0.0
  %508 = vmatprep.subr.mxu0 0.0
  %509 = vmatpush2.msra.mxu0 0.0
  %510 = vmatprep.subr.mxu0 0.0
  %511 = vmatpush2.msra.mxu0 0.0
  %512 = vmatprep.subr.mxu0 0.0
  %513 = vmatpush2.msra.mxu0 0.0
  %514 = vmatprep.subr.mxu0 0.0
  %515 = vmatpush2.msra.mxu0 0.0
  %516 = vmatprep.subr.mxu0 0.0
  %517 = vmatpush2.msra.mxu0 0.0
  %518 = vmatprep.subr.mxu0 0.0
  %519 = vmatpush2.msra.mxu0 0.0
  %520 = vmatprep.mubr.f32.mxu0 0.0
  %521 = vmatmul.mubr.f32.gmra.mxu0 %v126
  %v522 = vpop.f32.mrf.mxu0
  %v523 = vadd.f32 0.0, %v522
  %v524 = vpop.f32.mrf.mxu0
  %v525 = vadd.f32 0.0, %v524
  %526 = vmatprep.mubr.f32.mxu0 0.0
  %527 = vmatmul.mubr.f32.gmra.mxu0 %v127
  %v528 = vpop.f32.mrf.mxu0
  %v529 = vadd.f32 0.0, %v528
  %v530 = vpop.f32.mrf.mxu0
  %v531 = vadd.f32 0.0, %v530
  %532 = vmatprep.mubr.f32.mxu0 0.0
  %533 = vmatmul.mubr.f32.gmra.mxu0 %v128
  %v534 = vpop.f32.mrf.mxu0
  %v535 = vadd.f32 0.0, %v534
  %v536 = vpop.f32.mrf.mxu0
  %v537 = vadd.f32 0.0, %v536
  %538 = vmatprep.mubr.f32.mxu0 0.0
  %539 = vmatmul.mubr.f32.gmra.mxu0 %v129
  %v540 = vpop.f32.mrf.mxu0
  %v541 = vadd.f32 0.0, %v540
  %v542 = vpop.f32.mrf.mxu0
  %v543 = vadd.f32 0.0, %v542
  %544 = vmatprep.mubr.f32.mxu0 0.0
  %545 = vmatmul.mubr.f32.gmra.mxu0 %v130
  %v546 = vpop.f32.mrf.mxu0
  %v547 = vadd.f32 0.0, %v546
  %v548 = vpop.f32.mrf.mxu0
  %v549 = vadd.f32 0.0, %v548
  %550 = vmatprep.mubr.f32.mxu0 0.0
  %551 = vmatmul.mubr.f32.gmra.mxu0 %v131
  %v552 = vpop.f32.mrf.mxu0
  %v553 = vadd.f32 0.0, %v552
  %v554 = vpop.f32.mrf.mxu0
  %v555 = vadd.f32 0.0, %v554
  %556 = vmatprep.mubr.f32.mxu0 0.0
  %557 = vmatmul.mubr.f32.gmra.mxu0 %v132
  %v558 = vpop.f32.mrf.mxu0
  %v559 = vadd.f32 0.0, %v558
  %v560 = vpop.f32.mrf.mxu0
  %v561 = vadd.f32 0.0, %v560
  %562 = vmatprep.mubr.f32.mxu0 0.0
  %563 = vmatmul.mubr.f32.gmra.mxu0 %v133
  %v564 = vpop.f32.mrf.mxu0
  %v565 = vadd.f32 0.0, %v564
  %v566 = vpop.f32.mrf.mxu0
  %v567 = vadd.f32 0.0, %v566
  %568 = vdwg.mxu0
  %569 = vmatprep.subr.mxu0 %v121
  %570 = vmatpush1.msra.mxu0 %v120
  %571 = vmatprep.subr.mxu0 %v115
  %572 = vmatpush1.msra.mxu0 %v114
  %573 = vmatprep.subr.mxu0 %v109
  %574 = vmatpush1.msra.mxu0 %v108
  %575 = vmatprep.subr.mxu0 %v103
  %576 = vmatpush1.msra.mxu0 %v102
  %577 = vmatprep.subr.mxu0 %v97
  %578 = vmatpush1.msra.mxu0 %v96
  %579 = vmatprep.subr.mxu0 %v91
  %580 = vmatpush1.msra.mxu0 %v90
  %581 = vmatprep.subr.mxu0 %v85
  %582 = vmatpush1.msra.mxu0 %v84
  %583 = vmatprep.subr.mxu0 %v79
  %584 = vmatpush1.msra.mxu0 %v78
  %585 = vmatprep.subr.mxu0 %v73
  %586 = vmatpush1.msra.mxu0 %v72
  %587 = vmatprep.subr.mxu0 %v67
  %588 = vmatpush1.msra.mxu0 %v66
  %589 = vmatprep.subr.mxu0 %v61
  %590 = vmatpush1.msra.mxu0 %v60
  %591 = vmatprep.subr.mxu0 %v55
  %592 = vmatpush1.msra.mxu0 %v54
  %593 = vmatprep.subr.mxu0 %v49
  %594 = vmatpush1.msra.mxu0 %v48
  %595 = vmatprep.subr.mxu0 %v43
  %596 = vmatpush1.msra.mxu0 %v42
  %597 = vmatprep.subr.mxu0 %v37
  %598 = vmatpush1.msra.mxu0 %v36
  %599 = vmatprep.subr.mxu0 %v31
  %600 = vmatpush1.msra.mxu0 %v30
  %601 = vmatprep.subr.mxu0 0.0
  %602 = vmatpush2.msra.mxu0 0.0
  %603 = vmatprep.subr.mxu0 0.0
  %604 = vmatpush2.msra.mxu0 0.0
  %605 = vmatprep.subr.mxu0 0.0
  %606 = vmatpush2.msra.mxu0 0.0
  %607 = vmatprep.subr.mxu0 0.0
  %608 = vmatpush2.msra.mxu0 0.0
  %609 = vmatprep.subr.mxu0 0.0
  %610 = vmatpush2.msra.mxu0 0.0
  %611 = vmatprep.subr.mxu0 0.0
  %612 = vmatpush2.msra.mxu0 0.0
  %613 = vmatprep.subr.mxu0 0.0
  %614 = vmatpush2.msra.mxu0 0.0
  %615 = vmatprep.subr.mxu0 0.0
  %616 = vmatpush2.msra.mxu0 0.0
  %617 = vmatprep.subr.mxu0 0.0
  %618 = vmatpush2.msra.mxu0 0.0
  %619 = vmatprep.subr.mxu0 0.0
  %620 = vmatpush2.msra.mxu0 0.0
  %621 = vmatprep.subr.mxu0 0.0
  %622 = vmatpush2.msra.mxu0 0.0
  %623 = vmatprep.subr.mxu0 0.0
  %624 = vmatpush2.msra.mxu0 0.0
  %625 = vmatprep.subr.mxu0 0.0
  %626 = vmatpush2.msra.mxu0 0.0
  %627 = vmatprep.subr.mxu0 0.0
  %628 = vmatpush2.msra.mxu0 0.0
  %629 = vmatprep.subr.mxu0 0.0
  %630 = vmatpush2.msra.mxu0 0.0
  %631 = vmatprep.subr.mxu0 0.0
  %632 = vmatpush2.msra.mxu0 0.0
  %633 = vmatprep.mubr.f32.mxu0 0.0
  %634 = vmatmul.mubr.f32.gmra.mxu0 %v22
  %v635 = vpop.f32.mrf.mxu0
  %v636 = vadd.f32 %v297, %v635
  %v637 = vpop.f32.mrf.mxu0
  %v638 = vadd.f32 %v299, %v637
  %639 = vmatprep.mubr.f32.mxu0 0.0
  %640 = vmatmul.mubr.f32.gmra.mxu0 %v23
  %v641 = vpop.f32.mrf.mxu0
  %v642 = vadd.f32 %v303, %v641
  %v643 = vpop.f32.mrf.mxu0
  %v644 = vadd.f32 %v305, %v643
  %645 = vmatprep.mubr.f32.mxu0 0.0
  %646 = vmatmul.mubr.f32.gmra.mxu0 %v24
  %v647 = vpop.f32.mrf.mxu0
  %v648 = vadd.f32 %v309, %v647
  %v649 = vpop.f32.mrf.mxu0
  %v650 = vadd.f32 %v311, %v649
  %651 = vmatprep.mubr.f32.mxu0 0.0
  %652 = vmatmul.mubr.f32.gmra.mxu0 %v25
  %v653 = vpop.f32.mrf.mxu0
  %v654 = vadd.f32 %v315, %v653
  %v655 = vpop.f32.mrf.mxu0
  %v656 = vadd.f32 %v317, %v655
  %657 = vmatprep.mubr.f32.mxu0 0.0
  %658 = vmatmul.mubr.f32.gmra.mxu0 %v26
  %v659 = vpop.f32.mrf.mxu0
  %v660 = vadd.f32 %v321, %v659
  %v661 = vpop.f32.mrf.mxu0
  %v662 = vadd.f32 %v323, %v661
  %663 = vmatprep.mubr.f32.mxu0 0.0
  %664 = vmatmul.mubr.f32.gmra.mxu0 %v27
  %v665 = vpop.f32.mrf.mxu0
  %v666 = vadd.f32 %v327, %v665
  %v667 = vpop.f32.mrf.mxu0
  %v668 = vadd.f32 %v329, %v667
  %669 = vmatprep.mubr.f32.mxu0 0.0
  %670 = vmatmul.mubr.f32.gmra.mxu0 %v28
  %v671 = vpop.f32.mrf.mxu0
  %v672 = vadd.f32 %v333, %v671
  %v673 = vpop.f32.mrf.mxu0
  %v674 = vadd.f32 %v335, %v673
  %675 = vmatprep.mubr.f32.mxu0 0.0
  %676 = vmatmul.mubr.f32.gmra.mxu0 %v29
  %v677 = vpop.f32.mrf.mxu0
  %v678 = vadd.f32 %v339, %v677
  %v679 = vpop.f32.mrf.mxu0
  %v680 = vadd.f32 %v341, %v679
  %681 = vdwg.mxu0
  %682 = vmatprep.subr.mxu0 %v123
  %683 = vmatpush1.msra.mxu0 %v122
  %684 = vmatprep.subr.mxu0 %v117
  %685 = vmatpush1.msra.mxu0 %v116
  %686 = vmatprep.subr.mxu0 %v111
  %687 = vmatpush1.msra.mxu0 %v110
  %688 = vmatprep.subr.mxu0 %v105
  %689 = vmatpush1.msra.mxu0 %v104
  %690 = vmatprep.subr.mxu0 %v99
  %691 = vmatpush1.msra.mxu0 %v98
  %692 = vmatprep.subr.mxu0 %v93
  %693 = vmatpush1.msra.mxu0 %v92
  %694 = vmatprep.subr.mxu0 %v87
  %695 = vmatpush1.msra.mxu0 %v86
  %696 = vmatprep.subr.mxu0 %v81
  %697 = vmatpush1.msra.mxu0 %v80
  %698 = vmatprep.subr.mxu0 %v75
  %699 = vmatpush1.msra.mxu0 %v74
  %700 = vmatprep.subr.mxu0 %v69
  %701 = vmatpush1.msra.mxu0 %v68
  %702 = vmatprep.subr.mxu0 %v63
  %703 = vmatpush1.msra.mxu0 %v62
  %704 = vmatprep.subr.mxu0 %v57
  %705 = vmatpush1.msra.mxu0 %v56
  %706 = vmatprep.subr.mxu0 %v51
  %707 = vmatpush1.msra.mxu0 %v50
  %708 = vmatprep.subr.mxu0 %v45
  %709 = vmatpush1.msra.mxu0 %v44
  %710 = vmatprep.subr.mxu0 %v39
  %711 = vmatpush1.msra.mxu0 %v38
  %712 = vmatprep.subr.mxu0 %v33
  %713 = vmatpush1.msra.mxu0 %v32
  %714 = vmatprep.subr.mxu0 0.0
  %715 = vmatpush2.msra.mxu0 0.0
  %716 = vmatprep.subr.mxu0 0.0
  %717 = vmatpush2.msra.mxu0 0.0
  %718 = vmatprep.subr.mxu0 0.0
  %719 = vmatpush2.msra.mxu0 0.0
  %720 = vmatprep.subr.mxu0 0.0
  %721 = vmatpush2.msra.mxu0 0.0
  %722 = vmatprep.subr.mxu0 0.0
  %723 = vmatpush2.msra.mxu0 0.0
  %724 = vmatprep.subr.mxu0 0.0
  %725 = vmatpush2.msra.mxu0 0.0
  %726 = vmatprep.subr.mxu0 0.0
  %727 = vmatpush2.msra.mxu0 0.0
  %728 = vmatprep.subr.mxu0 0.0
  %729 = vmatpush2.msra.mxu0 0.0
  %730 = vmatprep.subr.mxu0 0.0
  %731 = vmatpush2.msra.mxu0 0.0
  %732 = vmatprep.subr.mxu0 0.0
  %733 = vmatpush2.msra.mxu0 0.0
  %734 = vmatprep.subr.mxu0 0.0
  %735 = vmatpush2.msra.mxu0 0.0
  %736 = vmatprep.subr.mxu0 0.0
  %737 = vmatpush2.msra.mxu0 0.0
  %738 = vmatprep.subr.mxu0 0.0
  %739 = vmatpush2.msra.mxu0 0.0
  %740 = vmatprep.subr.mxu0 0.0
  %741 = vmatpush2.msra.mxu0 0.0
  %742 = vmatprep.subr.mxu0 0.0
  %743 = vmatpush2.msra.mxu0 0.0
  %744 = vmatprep.subr.mxu0 0.0
  %745 = vmatpush2.msra.mxu0 0.0
  %746 = vmatprep.mubr.f32.mxu0 0.0
  %747 = vmatmul.mubr.f32.gmra.mxu0 %v22
  %v748 = vpop.f32.mrf.mxu0
  %v749 = vadd.f32 %v410, %v748
  %v750 = vpop.f32.mrf.mxu0
  %v751 = vadd.f32 %v412, %v750
  %752 = vmatprep.mubr.f32.mxu0 0.0
  %753 = vmatmul.mubr.f32.gmra.mxu0 %v23
  %v754 = vpop.f32.mrf.mxu0
  %v755 = vadd.f32 %v416, %v754
  %v756 = vpop.f32.mrf.mxu0
  %v757 = vadd.f32 %v418, %v756
  %758 = vmatprep.mubr.f32.mxu0 0.0
  %759 = vmatmul.mubr.f32.gmra.mxu0 %v24
  %v760 = vpop.f32.mrf.mxu0
  %v761 = vadd.f32 %v422, %v760
  %v762 = vpop.f32.mrf.mxu0
  %v763 = vadd.f32 %v424, %v762
  %764 = vmatprep.mubr.f32.mxu0 0.0
  %765 = vmatmul.mubr.f32.gmra.mxu0 %v25
  %v766 = vpop.f32.mrf.mxu0
  %v767 = vadd.f32 %v428, %v766
  %v768 = vpop.f32.mrf.mxu0
  %v769 = vadd.f32 %v430, %v768
  %770 = vmatprep.mubr.f32.mxu0 0.0
  %771 = vmatmul.mubr.f32.gmra.mxu0 %v26
  %v772 = vpop.f32.mrf.mxu0
  %v773 = vadd.f32 %v434, %v772
  %v774 = vpop.f32.mrf.mxu0
  %v775 = vadd.f32 %v436, %v774
  %776 = vmatprep.mubr.f32.mxu0 0.0
  %777 = vmatmul.mubr.f32.gmra.mxu0 %v27
  %v778 = vpop.f32.mrf.mxu0
  %v779 = vadd.f32 %v440, %v778
  %v780 = vpop.f32.mrf.mxu0
  %v781 = vadd.f32 %v442, %v780
  %782 = vmatprep.mubr.f32.mxu0 0.0
  %783 = vmatmul.mubr.f32.gmra.mxu0 %v28
  %v784 = vpop.f32.mrf.mxu0
  %v785 = vadd.f32 %v446, %v784
  %v786 = vpop.f32.mrf.mxu0
  %v787 = vadd.f32 %v448, %v786
  %788 = vmatprep.mubr.f32.mxu0 0.0
  %789 = vmatmul.mubr.f32.gmra.mxu0 %v29
  %v790 = vpop.f32.mrf.mxu0
  %v791 = vadd.f32 %v452, %v790
  %v792 = vpop.f32.mrf.mxu0
  %v793 = vadd.f32 %v454, %v792
  %794 = vdwg.mxu0
  %795 = vmatprep.subr.mxu0 %v125
  %796 = vmatpush1.msra.mxu0 %v124
  %797 = vmatprep.subr.mxu0 %v119
  %798 = vmatpush1.msra.mxu0 %v118
  %799 = vmatprep.subr.mxu0 %v113
  %800 = vmatpush1.msra.mxu0 %v112
  %801 = vmatprep.subr.mxu0 %v107
  %802 = vmatpush1.msra.mxu0 %v106
  %803 = vmatprep.subr.mxu0 %v101
  %804 = vmatpush1.msra.mxu0 %v100
  %805 = vmatprep.subr.mxu0 %v95
  %806 = vmatpush1.msra.mxu0 %v94
  %807 = vmatprep.subr.mxu0 %v89
  %808 = vmatpush1.msra.mxu0 %v88
  %809 = vmatprep.subr.mxu0 %v83
  %810 = vmatpush1.msra.mxu0 %v82
  %811 = vmatprep.subr.mxu0 %v77
  %812 = vmatpush1.msra.mxu0 %v76
  %813 = vmatprep.subr.mxu0 %v71
  %814 = vmatpush1.msra.mxu0 %v70
  %815 = vmatprep.subr.mxu0 %v65
  %816 = vmatpush1.msra.mxu0 %v64
  %817 = vmatprep.subr.mxu0 %v59
  %818 = vmatpush1.msra.mxu0 %v58
  %819 = vmatprep.subr.mxu0 %v53
  %820 = vmatpush1.msra.mxu0 %v52
  %821 = vmatprep.subr.mxu0 %v47
  %822 = vmatpush1.msra.mxu0 %v46
  %823 = vmatprep.subr.mxu0 %v41
  %824 = vmatpush1.msra.mxu0 %v40
  %825 = vmatprep.subr.mxu0 %v35
  %826 = vmatpush1.msra.mxu0 %v34
  %827 = vmatprep.subr.mxu0 0.0
  %828 = vmatpush2.msra.mxu0 0.0
  %829 = vmatprep.subr.mxu0 0.0
  %830 = vmatpush2.msra.mxu0 0.0
  %831 = vmatprep.subr.mxu0 0.0
  %832 = vmatpush2.msra.mxu0 0.0
  %833 = vmatprep.subr.mxu0 0.0
  %834 = vmatpush2.msra.mxu0 0.0
  %835 = vmatprep.subr.mxu0 0.0
  %836 = vmatpush2.msra.mxu0 0.0
  %837 = vmatprep.subr.mxu0 0.0
  %838 = vmatpush2.msra.mxu0 0.0
  %839 = vmatprep.subr.mxu0 0.0
  %840 = vmatpush2.msra.mxu0 0.0
  %841 = vmatprep.subr.mxu0 0.0
  %842 = vmatpush2.msra.mxu0 0.0
  %843 = vmatprep.subr.mxu0 0.0
  %844 = vmatpush2.msra.mxu0 0.0
  %845 = vmatprep.subr.mxu0 0.0
  %846 = vmatpush2.msra.mxu0 0.0
  %847 = vmatprep.subr.mxu0 0.0
  %848 = vmatpush2.msra.mxu0 0.0
  %849 = vmatprep.subr.mxu0 0.0
  %850 = vmatpush2.msra.mxu0 0.0
  %851 = vmatprep.subr.mxu0 0.0
  %852 = vmatpush2.msra.mxu0 0.0
  %853 = vmatprep.subr.mxu0 0.0
  %854 = vmatpush2.msra.mxu0 0.0
  %855 = vmatprep.subr.mxu0 0.0
  %856 = vmatpush2.msra.mxu0 0.0
  %857 = vmatprep.subr.mxu0 0.0
  %858 = vmatpush2.msra.mxu0 0.0
  %859 = vmatprep.mubr.f32.mxu0 0.0
  %860 = vmatmul.mubr.f32.gmra.mxu0 %v22
  %v861 = vpop.f32.mrf.mxu0
  %v862 = vadd.f32 %v523, %v861
  %v863 = vpop.f32.mrf.mxu0
  %v864 = vadd.f32 %v525, %v863
  %865 = vmatprep.mubr.f32.mxu0 0.0
  %866 = vmatmul.mubr.f32.gmra.mxu0 %v23
  %v867 = vpop.f32.mrf.mxu0
  %v868 = vadd.f32 %v529, %v867
  %v869 = vpop.f32.mrf.mxu0
  %v870 = vadd.f32 %v531, %v869
  %871 = vmatprep.mubr.f32.mxu0 0.0
  %872 = vmatmul.mubr.f32.gmra.mxu0 %v24
  %v873 = vpop.f32.mrf.mxu0
  %v874 = vadd.f32 %v535, %v873
  %v875 = vpop.f32.mrf.mxu0
  %v876 = vadd.f32 %v537, %v875
  %877 = vmatprep.mubr.f32.mxu0 0.0
  %878 = vmatmul.mubr.f32.gmra.mxu0 %v25
  %v879 = vpop.f32.mrf.mxu0
  %v880 = vadd.f32 %v541, %v879
  %v881 = vpop.f32.mrf.mxu0
  %v882 = vadd.f32 %v543, %v881
  %883 = vmatprep.mubr.f32.mxu0 0.0
  %884 = vmatmul.mubr.f32.gmra.mxu0 %v26
  %v885 = vpop.f32.mrf.mxu0
  %v886 = vadd.f32 %v547, %v885
  %v887 = vpop.f32.mrf.mxu0
  %v888 = vadd.f32 %v549, %v887
  %889 = vmatprep.mubr.f32.mxu0 0.0
  %890 = vmatmul.mubr.f32.gmra.mxu0 %v27
  %v891 = vpop.f32.mrf.mxu0
  %v892 = vadd.f32 %v553, %v891
  %v893 = vpop.f32.mrf.mxu0
  %v894 = vadd.f32 %v555, %v893
  %895 = vmatprep.mubr.f32.mxu0 0.0
  %896 = vmatmul.mubr.f32.gmra.mxu0 %v28
  %v897 = vpop.f32.mrf.mxu0
  %v898 = vadd.f32 %v559, %v897
  %v899 = vpop.f32.mrf.mxu0
  %v900 = vadd.f32 %v561, %v899
  %901 = vmatprep.mubr.f32.mxu0 0.0
  %902 = vmatmul.mubr.f32.gmra.mxu0 %v29
  %v903 = vpop.f32.mrf.mxu0
  %v904 = vadd.f32 %v565, %v903
  %v905 = vpop.f32.mrf.mxu0
  %v906 = vadd.f32 %v567, %v905
  %907 = vdwg.mxu0
  %v908 = vld [vmem:[%s4] sm:$0x3f]
  %v910 = vlaneseq
  %v911 = vshrl.u32 %v910, 7
  %v912 = vsub.s32 0, %v911
  %v913 = vrot.slane %v908, %v912
  %v914 = vlaneseq
  %v915 = vshrl.u32 %v914, 7
  %v916 = vsub.s32 1, %v915
  %v917 = vrot.slane %v908, %v916
  %v918 = vlaneseq
  %v919 = vshrl.u32 %v918, 7
  %v920 = vsub.s32 2, %v919
  %v921 = vrot.slane %v908, %v920
  %v922 = vlaneseq
  %v923 = vshrl.u32 %v922, 7
  %v924 = vsub.s32 3, %v923
  %v925 = vrot.slane %v908, %v924
  %v926 = vlaneseq
  %v927 = vshrl.u32 %v926, 7
  %v928 = vsub.s32 4, %v927
  %v929 = vrot.slane %v908, %v928
  %v930 = vlaneseq
  %v931 = vshrl.u32 %v930, 7
  %v932 = vsub.s32 5, %v931
  %v933 = vrot.slane %v908, %v932
  %v940 = vadd.f32 %v636, %v913
  %v941 = vadd.f32 %v638, %v917
  %v942 = vadd.f32 %v749, %v921
  %v943 = vadd.f32 %v751, %v925
  %v944 = vadd.f32 %v862, %v929
  %v945 = vadd.f32 %v864, %v933
  %v946 = vadd.f32 %v642, %v913
  %v947 = vadd.f32 %v644, %v917
  %v948 = vadd.f32 %v755, %v921
  %v949 = vadd.f32 %v757, %v925
  %v950 = vadd.f32 %v868, %v929
  %v951 = vadd.f32 %v870, %v933
  %v952 = vadd.f32 %v648, %v913
  %v953 = vadd.f32 %v650, %v917
  %v954 = vadd.f32 %v761, %v921
  %v955 = vadd.f32 %v763, %v925
  %v956 = vadd.f32 %v874, %v929
  %v957 = vadd.f32 %v876, %v933
  %v958 = vadd.f32 %v654, %v913
  %v959 = vadd.f32 %v656, %v917
  %v960 = vadd.f32 %v767, %v921
  %v961 = vadd.f32 %v769, %v925
  %v962 = vadd.f32 %v880, %v929
  %v963 = vadd.f32 %v882, %v933
  %v964 = vadd.f32 %v660, %v913
  %v965 = vadd.f32 %v662, %v917
  %v966 = vadd.f32 %v773, %v921
  %v967 = vadd.f32 %v775, %v925
  %v968 = vadd.f32 %v886, %v929
  %v969 = vadd.f32 %v888, %v933
  %v970 = vadd.f32 %v666, %v913
  %v971 = vadd.f32 %v668, %v917
  %v972 = vadd.f32 %v779, %v921
  %v973 = vadd.f32 %v781, %v925
  %v974 = vadd.f32 %v892, %v929
  %v975 = vadd.f32 %v894, %v933
  %v976 = vadd.f32 %v672, %v913
  %v977 = vadd.f32 %v674, %v917
  %v978 = vadd.f32 %v785, %v921
  %v979 = vadd.f32 %v787, %v925
  %v980 = vadd.f32 %v898, %v929
  %v981 = vadd.f32 %v900, %v933
  %v982 = vadd.f32 %v678, %v913
  %v983 = vadd.f32 %v680, %v917
  %v984 = vadd.f32 %v791, %v921
  %v985 = vadd.f32 %v793, %v925
  %v986 = vadd.f32 %v904, %v929
  %v987 = vadd.f32 %v906, %v933
  %988 = vst [vmem:[%s5] sm:$0xff] %v940
  %989 = vst [vmem:[%s5 + $0x8] sm:$0xff] %v941
  %990 = vst [vmem:[%s5 + $0x10] sm:$0xff] %v942
  %991 = vst [vmem:[%s5 + $0x18] sm:$0xff] %v946
  %992 = vst [vmem:[%s5 + $0x20] sm:$0xff] %v947
  %993 = vst [vmem:[%s5 + $0x28] sm:$0xff] %v948
  %994 = vst [vmem:[%s5 + $0x30] sm:$0xff] %v952
  %995 = vst [vmem:[%s5 + $0x38] sm:$0xff] %v953
  %996 = vst [vmem:[%s5 + $0x40] sm:$0xff] %v954
  %997 = vst [vmem:[%s5 + $0x48] sm:$0xff] %v958
  %998 = vst [vmem:[%s5 + $0x50] sm:$0xff] %v959
  %999 = vst [vmem:[%s5 + $0x58] sm:$0xff] %v960
  %1000 = vst [vmem:[%s5 + $0x60] sm:$0xff] %v964
  %1001 = vst [vmem:[%s5 + $0x68] sm:$0xff] %v965
  %1002 = vst [vmem:[%s5 + $0x70] sm:$0xff] %v966
  %1003 = vst [vmem:[%s5 + $0x78] sm:$0xff] %v970
  %1004 = vst [vmem:[%s5 + $0x80] sm:$0xff] %v971
  %1005 = vst [vmem:[%s5 + $0x88] sm:$0xff] %v972
  %1006 = vst [vmem:[%s5 + $0x90] sm:$0xff] %v976
  %1007 = vst [vmem:[%s5 + $0x98] sm:$0xff] %v977
  %1008 = vst [vmem:[%s5 + $0xa0] sm:$0xff] %v978
  %1009 = vst [vmem:[%s5 + $0xa8] sm:$0xff] %v982
  %1010 = vst [vmem:[%s5 + $0xb0] sm:$0xff] %v983
  %1011 = vst [vmem:[%s5 + $0xb8] sm:$0xff] %v984
  %1012 = vst [vmem:[%s6] sm:$0xff] %v943
  %1013 = vst [vmem:[%s6 + $0x8] sm:$0xff] %v944
  %1014 = vst [vmem:[%s6 + $0x10] sm:$0xff] %v945
  %1015 = vst [vmem:[%s6 + $0x18] sm:$0xff] %v949
  %1016 = vst [vmem:[%s6 + $0x20] sm:$0xff] %v950
  %1017 = vst [vmem:[%s6 + $0x28] sm:$0xff] %v951
  %1018 = vst [vmem:[%s6 + $0x30] sm:$0xff] %v955
  %1019 = vst [vmem:[%s6 + $0x38] sm:$0xff] %v956
  %1020 = vst [vmem:[%s6 + $0x40] sm:$0xff] %v957
  %1021 = vst [vmem:[%s6 + $0x48] sm:$0xff] %v961
  %1022 = vst [vmem:[%s6 + $0x50] sm:$0xff] %v962
  %1023 = vst [vmem:[%s6 + $0x58] sm:$0xff] %v963
  %1024 = vst [vmem:[%s6 + $0x60] sm:$0xff] %v967
  %1025 = vst [vmem:[%s6 + $0x68] sm:$0xff] %v968
  %1026 = vst [vmem:[%s6 + $0x70] sm:$0xff] %v969
  %1027 = vst [vmem:[%s6 + $0x78] sm:$0xff] %v973
  %1028 = vst [vmem:[%s6 + $0x80] sm:$0xff] %v974
  %1029 = vst [vmem:[%s6 + $0x88] sm:$0xff] %v975
  %1030 = vst [vmem:[%s6 + $0x90] sm:$0xff] %v979
  %1031 = vst [vmem:[%s6 + $0x98] sm:$0xff] %v980
  %1032 = vst [vmem:[%s6 + $0xa0] sm:$0xff] %v981
  %1033 = vst [vmem:[%s6 + $0xa8] sm:$0xff] %v985
  %1034 = vst [vmem:[%s6 + $0xb0] sm:$0xff] %v986
  %1035 = vst [vmem:[%s6 + $0xb8] sm:$0xff] %v987
  // Predicated region
  $region22: #{char_classifier_forward.8} parent=0 // pred_check
    _
  $region23: #{char_classifier_forward.8} parent=0 // pred_check_branch
    %1037 = sbr.rel (0) target = $region25
  $region24: #{char_classifier_forward.8} parent=0 // pred_region
    _
  $region25: #{char_classifier_forward.8} parent=0 // pred_fallthru
    _
  // Predicated region
  $region26: #{char_classifier_forward.8} parent=0 // pred_check
    _
  $region27: #{char_classifier_forward.8} parent=0 // pred_check_branch
    %1039 = sbr.rel (0) target = $region29
  $region28: #{char_classifier_forward.8} parent=0 // pred_region
    _
  $region29: #{char_classifier_forward.8} parent=0 // pred_fallthru
    _
  // Predicated region
  $region30: #{char_classifier_forward.8} parent=0 // pred_check
    _
  $region31: #{char_classifier_forward.8} parent=0 // pred_check_branch
    %1041 = sbr.rel (0) target = $region33
  $region32: #{char_classifier_forward.8} parent=0 // pred_region
    _
  $region33: #{char_classifier_forward.8} parent=0 // pred_fallthru
    _
  // Predicated region
  $region34: #{char_classifier_forward.8} parent=0 // pred_check
    _
  $region35: #{char_classifier_forward.8} parent=0 // pred_check_branch
    %1043 = sbr.rel (0) target = $region37
  $region36: #{char_classifier_forward.8} parent=0 // pred_region
    _
  $region37: #{char_classifier_forward.8} parent=0 // pred_fallthru
    _

</llo_original>
